<compile_context>
chip_gen: v5e
topology: v5e:2x2
jax: 0.10.0
libtpu: 0.0.40
codegen_flags: <defaults>
</compile_context>

<pallas_src>
import functools

import jax
import jax.numpy as jnp
from jax import lax
from jax.experimental import pallas as pl
from jax.experimental.pallas import tpu as pltpu


# ---------------------------------------------------------------------------
# Fused Pallas kernel: conv_qkv -> MHA (+2-D relative logits) -> conv_attn
# ---------------------------------------------------------------------------

def _fused_attention_kernel(x_ref, wqkv_ref, bqkv_ref, wattn_ref, battn_ref,
                            mask_ref, krel_ref, o_ref,
                            qkv_sc, lhs_sc, rhs_sc, attn_sc, *,
                            num_heads, dk, dv, mxu_dtype):
    dkh = dk // num_heads
    dvh = dv // num_heads
    n_aug = mask_ref.shape[0]                 # H + W
    hw = mask_ref.shape[1]                    # per-image spatial size
    bt = x_ref.shape[1] // hw                 # images packed into this block

    # --- conv_qkv (1x1) over all bt images at once (wide lane axis) ----------
    # q rows of wqkv / bqkv are pre-scaled by dkh**-0.5 in the wrapper (free).
    qkv = jnp.dot(wqkv_ref[...], x_ref[...],
                  preferred_element_type=jnp.float32) + bqkv_ref[...]
    qkv_sc[...] = qkv.astype(mxu_dtype)       # [2dk+dv, bt*hw]

    # --- loop invariants hoisted out of the per-(image, head) loop -----------
    rhs_sc[dkh:, :] = krel_ref[...]           # constant augmented-key rows
    mask_v = mask_ref[...]                    # [(H+W), hw]  (0/1, mxu dtype)
    ones_row = jnp.ones((1, hw), mxu_dtype)   # deferred-softmax denominator row

    for b in range(bt):                       # static: lane offsets compile-time
        base = b * hw

        def head_body(h, carry):
            qrow = pl.multiple_of(h * dkh, 8)
            krow = pl.multiple_of(dk + h * dkh, 8)
            vrow = pl.multiple_of(2 * dk + h * dvh, 8)
            q = qkv_sc[pl.ds(qrow, dkh), pl.ds(base, hw)]      # [dkh, hw] (scaled)
            k = qkv_sc[pl.ds(krow, dkh), pl.ds(base, hw)]      # [dkh, hw]
            v = qkv_sc[pl.ds(vrow, dvh), pl.ds(base, hw)]      # [dvh, hw]

            # content + 2-D relative logits as ONE dim-0-contracting MXU matmul:
            #   LHS rows: [q ; (mask (x) q)  a-major / d-minor]
            #   RHS rows: [k ; Krel]        (Krel written once per grid step)
            lhs_sc[0:dkh, :] = q
            lhs_sc[dkh:, :] = (mask_v[:, None, :] * q[None, :, :]
                               ).reshape(n_aug * dkh, hw)
            rhs_sc[0:dkh, :] = k
            logits = lax.dot_general(
                lhs_sc[...], rhs_sc[...], (((0,), (0,)), ((), ())),
                preferred_element_type=jnp.float32)            # [hw_q, hw_k] f32

            # softmax over key positions; normalization deferred past V matmul.
            logits = logits - jnp.max(logits, axis=-1, keepdims=True)
            ex = jnp.exp(logits).astype(mxu_dtype)             # [hw_q, hw_k]

            # attn[f,q] = sum_k v[f,k] * ex[q,k]; the appended ones row yields
            # the softmax denominator for free as the last output row.
            v_aug = jnp.concatenate([v, ones_row], axis=0)     # [dvh+1, hw]
            out_aug = lax.dot_general(
                v_aug, ex, (((1,), (1,)), ((), ())),
                preferred_element_type=jnp.float32)            # [dvh+1, hw_q]
            inv = pl.reciprocal(out_aug[dvh:dvh + 1, :], approx=True)
            head = (out_aug[:dvh, :] * inv).astype(mxu_dtype)  # [dvh, hw_q]

            attn_sc[pl.ds(pl.multiple_of(h * dvh, 8), dvh),
                    pl.ds(base, hw)] = head
            return carry

        lax.fori_loop(0, num_heads, head_body, None)

    # --- conv_attn (1x1) over all bt images at once ---------------------------
    out = jnp.dot(wattn_ref[...], attn_sc[...],
                  preferred_element_type=jnp.float32) + battn_ref[...]
    o_ref[...] = out.astype(o_ref.dtype)


def fused_attention_pallas(x_packed, w_qkv, b_qkv, w_attn, b_attn, mask, krel,
                           *, num_heads, dk, dv, hw, bt, mxu_dtype):
    """x_packed: [C, B*HW] (b-major / spatial-minor lanes). Returns [dv, B*HW] f32."""
    C, bhw = x_packed.shape
    assert bhw % (bt * hw) == 0
    grid_len = bhw // (bt * hw)
    oqkv = w_qkv.shape[0]
    n_aug = mask.shape[0]                       # H + W
    dkh = dk // num_heads
    dvh = dv // num_heads
    assert krel.shape == (n_aug * dkh, hw)
    # Alignment guards (dynamic sublane slicing inside the head loop).
    assert dkh % 8 == 0 and dvh % 8 == 0, "dkh/dvh must be multiples of 8"
    # TODO(synk): relax the dkh/dvh alignment requirement for exotic head sizes.

    blk_lanes = bt * hw
    itemsize = jnp.dtype(mxu_dtype).itemsize
    # VMEM budget: double-buffered blocks + scratch + [HW,HW]-class temporaries.
    est = (2 * C * blk_lanes * itemsize
           + 2 * dv * blk_lanes * 4
           + 2 * (oqkv * (C + 1) + dv * (dv + 1)) * 4
           + 2 * (n_aug + n_aug * dkh) * hw * itemsize
           + (oqkv * blk_lanes + 2 * (1 + n_aug) * dkh * hw
              + dv * blk_lanes) * itemsize
           + 8 * hw * hw * 4)
    vmem_limit = int(min(48 * 2**20, max(32 * 2**20, 2 * est)))

    kernel = functools.partial(_fused_attention_kernel, num_heads=num_heads,
                               dk=dk, dv=dv, mxu_dtype=mxu_dtype)
    return pl.pallas_call(
        kernel,
        out_shape=jax.ShapeDtypeStruct((dv, bhw), jnp.float32),
        grid=(grid_len,),
        in_specs=[
            pl.BlockSpec((C, blk_lanes), lambda i: (0, i)),        # x (bt images)
            pl.BlockSpec((oqkv, C), lambda i: (0, 0)),             # w_qkv (resident)
            pl.BlockSpec((oqkv, 1), lambda i: (0, 0)),             # b_qkv
            pl.BlockSpec((dv, dv), lambda i: (0, 0)),              # w_attn
            pl.BlockSpec((dv, 1), lambda i: (0, 0)),               # b_attn
            pl.BlockSpec((n_aug, hw), lambda i: (0, 0)),           # rel mask (H+W rows)
            pl.BlockSpec((n_aug * dkh, hw), lambda i: (0, 0)),     # rel augmented keys
        ],
        out_specs=pl.BlockSpec((dv, blk_lanes), lambda i: (0, i)),
        scratch_shapes=[
            pltpu.VMEM((oqkv, blk_lanes), mxu_dtype),              # qkv
            pltpu.VMEM(((1 + n_aug) * dkh, hw), mxu_dtype),        # logits LHS
            pltpu.VMEM(((1 + n_aug) * dkh, hw), mxu_dtype),        # logits RHS ([k;Krel])
            pltpu.VMEM((dv, blk_lanes), mxu_dtype),                # per-head attn out
        ],
        compiler_params=pltpu.CompilerParams(
            dimension_semantics=("parallel",),
            vmem_limit_bytes=vmem_limit),
    )(x_packed, w_qkv, b_qkv, w_attn, b_attn, mask, krel)


# ---------------------------------------------------------------------------
# Wrapper-side constant construction (tiny, pure JAX)
# ---------------------------------------------------------------------------

def build_rel_aug(key_rel_h, key_rel_w, H, W):
    """Constants for the relative-logits contraction.

    krel [(H+W)*dkh, H*W]: krel[(a,d),(h2,w2)] = key_rel_h[h2-a+H-1,d]   (a < H)
                                                key_rel_w[w2-(a-H)+W-1,d] (a >= H)
    mask [(H+W), H*W]:     mask[a,(h1,w1)]     = 1[a==h1] (a<H) | 1[a-H==w1] (a>=H)
    Row ordering of krel is a-major / d-minor, matching the in-kernel broadcast
    (mask[:,None,:] * q[None,:,:]).reshape((H+W)*dkh, HW).
    """
    dkh = key_rel_h.shape[1]
    HW = H * W

    idx_h = jnp.arange(H)[None, :] - jnp.arange(H)[:, None] + (H - 1)     # [a, h2]
    kh = key_rel_h[idx_h]                                                 # [a, h2, d]
    kh = jnp.broadcast_to(kh[:, :, None, :], (H, H, W, dkh))              # [a, h2, w2, d]
    kh = jnp.transpose(kh, (0, 3, 1, 2)).reshape(H * dkh, HW)             # [(a,d), kpos]
    idx_w = jnp.arange(W)[None, :] - jnp.arange(W)[:, None] + (W - 1)     # [a', w2]
    kw = key_rel_w[idx_w]                                                 # [a', w2, d]
    kw = jnp.broadcast_to(kw[:, None, :, :], (W, H, W, dkh))              # [a', h2, w2, d]
    kw = jnp.transpose(kw, (0, 3, 1, 2)).reshape(W * dkh, HW)
    krel = jnp.concatenate([kh, kw], axis=0).astype(jnp.float32)          # [(H+W)*dkh, HW]

    qh = jnp.arange(HW) // W
    qw = jnp.arange(HW) % W
    mask_h = jnp.arange(H)[:, None] == qh[None, :]
    mask_w = jnp.arange(W)[:, None] == qw[None, :]
    mask = jnp.concatenate([mask_h, mask_w], axis=0).astype(jnp.float32)  # [(H+W), HW]
    return krel, mask


def _pick_batch_tile(B, HW, max_lanes=4096):
    """Largest bt dividing B with bt*HW <= max_lanes and >=2 grid steps (B>=2)."""
    best = 1
    for bt in range(1, B + 1):
        if B % bt:
            continue
        if bt * HW > max_lanes:
            continue
        if B // bt < min(2, B):
            continue
        best = bt
    return best


def attention2d_forward(x, params, cfg, *, mxu_dtype=jnp.bfloat16, batch_tile=None):
    B, C, H, W = x.shape
    HW = H * W
    dk, dv, nh = cfg['dk'], cfg['dv'], cfg['num_heads']
    dkh = dk // nh
    pad = cfg['padding']
    assert cfg['stride'] == 1
    # TODO(synk): stride > 1 (spatial downsampling in conv_out / conv_attn) not implemented.

    dn = ('NCHW', 'OIHW', 'NCHW')
    # conv_out (k x k) is not attention-critical: leave it to XLA's conv instead of
    # materialising a 9x im2col buffer in HBM.
    conv_out = lax.conv_general_dilated(
        x, params['w_out'], (1, 1), [(pad, pad), (pad, pad)],
        dimension_numbers=dn) + params['b_out'][None, :, None, None]

    # Fold the 1/sqrt(dkh) query scale into the q rows of conv_qkv (free).
    scale = jnp.concatenate([jnp.full((dk,), dkh ** (-0.5), jnp.float32),
                             jnp.ones((dk + dv,), jnp.float32)])
    w_qkv = params['w_qkv'] * scale[:, None]
    b_qkv = params['b_qkv'] * scale

    krel, mask = build_rel_aug(params['key_rel_h'], params['key_rel_w'], H, W)

    if batch_tile is None:
        batch_tile = _pick_batch_tile(B, HW)
    assert B % batch_tile == 0

    # Lane-dense packing: [B, C, HW] -> [C, B*HW]  (b-major, spatial-minor lanes).
    x_packed = jnp.transpose(x.reshape(B, C, HW), (1, 0, 2)).reshape(C, B * HW)

    attn = fused_attention_pallas(
        x_packed.astype(mxu_dtype),
        w_qkv.astype(mxu_dtype),
        b_qkv.reshape(-1, 1).astype(jnp.float32),
        params['w_attn'].astype(mxu_dtype),
        params['b_attn'].reshape(-1, 1).astype(jnp.float32),
        mask.astype(mxu_dtype),          # 0/1, exact in bf16
        krel.astype(mxu_dtype),
        num_heads=nh, dk=dk, dv=dv, hw=HW, bt=batch_tile,
        mxu_dtype=mxu_dtype)                                           # [dv, B*HW]

    attn = jnp.transpose(attn.reshape(dv, B, H, W), (1, 0, 2, 3))      # [B, dv, H, W]
    return jnp.concatenate([conv_out, attn], axis=1)                   # [B, output_dim, H, W]


# ---------------------------------------------------------------------------
# Pure-JAX reference (mirrors the PyTorch forward op-for-op)
# ---------------------------------------------------------------------------

def _rel_to_abs(x):
    b, nh, l, _ = x.shape
    x = jnp.pad(x, ((0, 0), (0, 0), (0, 0), (0, 1)))
    flat = x.reshape(b, nh, l * 2 * l)
    flat = jnp.pad(flat, ((0, 0), (0, 0), (0, l - 1)))
    final = flat.reshape(b, nh, l + 1, 2 * l - 1)
    return final[:, :, :l, l - 1:]


def _relative_logits_1d(q, rel_k, H, W, Nh, transpose_mask):
    rel_logits = jnp.einsum('bhdxy,md->bhxym', q, rel_k)
    rel_logits = rel_logits.reshape(-1, Nh * H, W, 2 * W - 1)
    rel_logits = _rel_to_abs(rel_logits)
    rel_logits = rel_logits.reshape(-1, Nh, H, W, W)[:, :, :, None]
    rel_logits = jnp.tile(rel_logits, (1, 1, 1, H, 1, 1))
    rel_logits = jnp.transpose(rel_logits, transpose_mask)
    return rel_logits.reshape(-1, Nh, H * W, H * W)


def reference_forward(x, params, cfg):
    B, C, H, W = x.shape
    dk, dv, nh = cfg['dk'], cfg['dv'], cfg['num_heads']
    dkh, dvh = dk // nh, dv // nh
    pad = cfg['padding']
    dn = ('NCHW', 'OIHW', 'NCHW')

    conv_out = lax.conv_general_dilated(
        x, params['w_out'], (1, 1), [(pad, pad), (pad, pad)],
        dimension_numbers=dn) + params['b_out'][None, :, None, None]
    qkv = lax.conv_general_dilated(
        x, params['w_qkv'][:, :, None, None], (1, 1), 'VALID',
        dimension_numbers=dn) + params['b_qkv'][None, :, None, None]
    q, k, v = jnp.split(qkv, [dk, 2 * dk], axis=1)
    q = q.reshape(B, nh, dkh, H * W) * dkh ** (-0.5)
    k = k.reshape(B, nh, dkh, H * W)
    v = v.reshape(B, nh, dvh, H * W)
    logits = jnp.einsum('ijkl,ijkm->ijlm', q, k)
    q5 = q.reshape(B, nh, dkh, H, W)
    w_rel = _relative_logits_1d(q5, params['key_rel_w'], H, W, nh,
                                (0, 1, 2, 4, 3, 5))
    h_rel = _relative_logits_1d(jnp.transpose(q5, (0, 1, 2, 4, 3)),
                                params['key_rel_h'], W, H, nh,
                                (0, 1, 4, 2, 5, 3))
    logits = logits + h_rel + w_rel
    weights = jax.nn.softmax(logits, axis=-1)
    attn = jnp.einsum('ijkl,ijfl->ijfk', weights, v)
    attn = attn.reshape(B, dv, H, W)
    attn = lax.conv_general_dilated(
        attn, params['w_attn'][:, :, None, None], (1, 1), 'VALID',
        dimension_numbers=dn) + params['b_attn'][None, :, None, None]
    return jnp.concatenate([conv_out, attn], axis=1)


# ---------------------------------------------------------------------------

if __name__ == "__main__":
    cfg = dict(input_dim=8, output_dim=32, dk=32, dv=16, num_heads=2,
               kernel_size=3, padding=1, stride=1, height=16, width=16)
    B, C, H, W = 2, cfg['input_dim'], cfg['height'], cfg['width']
    dk, dv, nh = cfg['dk'], cfg['dv'], cfg['num_heads']
    dkh = dk // nh
    ksz = cfg['kernel_size']

    key = jax.random.PRNGKey(0)
    kk = jax.random.split(key, 9)
    params = dict(
        w_qkv=0.2 * jax.random.normal(kk[0], (2 * dk + dv, C), jnp.float32),
        b_qkv=0.1 * jax.random.normal(kk[1], (2 * dk + dv,), jnp.float32),
        w_attn=0.2 * jax.random.normal(kk[2], (dv, dv), jnp.float32),
        b_attn=0.1 * jax.random.normal(kk[3], (dv,), jnp.float32),
        w_out=0.2 * jax.random.normal(kk[4], (cfg['output_dim'] - dv, C, ksz, ksz),
                                      jnp.float32),
        b_out=0.1 * jax.random.normal(kk[5], (cfg['output_dim'] - dv,), jnp.float32),
        key_rel_w=dkh ** (-0.5) + jax.random.uniform(kk[6], (2 * W - 1, dkh), jnp.float32),
        key_rel_h=dkh ** (-0.5) + jax.random.uniform(kk[7], (2 * H - 1, dkh), jnp.float32),
    )
    x = jax.random.normal(kk[8], (B, C, H, W), jnp.float32)

    ref = jax.block_until_ready(reference_forward(x, params, cfg))

    # f32 MXU operands: must track the f32 reference tightly.
    out_f32 = jax.block_until_ready(
        attention2d_forward(x, params, cfg, mxu_dtype=jnp.float32))
    assert out_f32.shape == (B, cfg['output_dim'], H, W), out_f32.shape
    err_f32 = float(jnp.max(jnp.abs(out_f32 - ref)))
    assert err_f32 < 5e-2, f"f32 path max abs err {err_f32}"

    # bf16 MXU operands (default fast path on v6e/v7x), f32 accumulation.
    out_bf16 = jax.block_until_ready(
        attention2d_forward(x, params, cfg, mxu_dtype=jnp.bfloat16))
    assert out_bf16.shape == (B, cfg['output_dim'], H, W), out_bf16.shape
    assert bool(jnp.all(jnp.isfinite(out_bf16)))
    err_bf16 = float(jnp.max(jnp.abs(out_bf16 - ref)))
    assert err_bf16 < 1.5e-1, f"bf16 path max abs err {err_bf16}"

    # Batch-packed path: B=4 exercises batch_tile=2 (two images per grid step).
    x4 = jax.random.normal(jax.random.PRNGKey(1), (4, C, H, W), jnp.float32)
    ref4 = jax.block_until_ready(reference_forward(x4, params, cfg))
    out4 = jax.block_until_ready(
        attention2d_forward(x4, params, cfg, mxu_dtype=jnp.float32))
    assert out4.shape == (4, cfg['output_dim'], H, W), out4.shape
    err4 = float(jnp.max(jnp.abs(out4 - ref4)))
    assert err4 < 5e-2, f"packed f32 path max abs err {err4}"

    print("KERNEL_OK")
</pallas_src>

<mosaic_0001>
module attributes {stable_mosaic.version = 11 : i64} {
  func.func @_fused_attention_kernel(%arg0: i32, %arg1: memref<8x256xf32, #tpu.memory_space<vmem>>, %arg2: memref<80x8xf32, #tpu.memory_space<vmem>>, %arg3: memref<80x1xf32, #tpu.memory_space<vmem>>, %arg4: memref<16x16xf32, #tpu.memory_space<vmem>>, %arg5: memref<16x1xf32, #tpu.memory_space<vmem>>, %arg6: memref<32x256xf32, #tpu.memory_space<vmem>>, %arg7: memref<512x256xf32, #tpu.memory_space<vmem>>, %arg8: memref<16x256xf32, #tpu.memory_space<vmem>>, %arg9: memref<80x256xf32, #tpu.memory_space<vmem>>, %arg10: memref<528x256xf32, #tpu.memory_space<vmem>>, %arg11: memref<528x256xf32, #tpu.memory_space<vmem>>, %arg12: memref<16x256xf32, #tpu.memory_space<vmem>>) attributes {dimension_semantics = [#tpu.dimension_semantics<parallel>], iteration_bounds = array<i64: 2>, scalar_prefetch = 0 : i64, scratch_operands = 4 : i64, tpu.core_type = #tpu.core_type<tc>, window_params = [{transform_indices = @transform_0, window_bounds = array<i64: 8, 256>}, {pipeline_mode = #tpu.pipeline_mode<synchronous>, transform_indices = @transform_1, window_bounds = array<i64: 80, 8>}, {pipeline_mode = #tpu.pipeline_mode<synchronous>, transform_indices = @transform_2, window_bounds = array<i64: 80, 1>}, {pipeline_mode = #tpu.pipeline_mode<synchronous>, transform_indices = @transform_3, window_bounds = array<i64: 16, 16>}, {pipeline_mode = #tpu.pipeline_mode<synchronous>, transform_indices = @transform_4, window_bounds = array<i64: 16, 1>}, {pipeline_mode = #tpu.pipeline_mode<synchronous>, transform_indices = @transform_5, window_bounds = array<i64: 32, 256>}, {pipeline_mode = #tpu.pipeline_mode<synchronous>, transform_indices = @transform_6, window_bounds = array<i64: 512, 256>}, {transform_indices = @transform_7, window_bounds = array<i64: 16, 256>}]} {
    %c0 = arith.constant 0 : index
    %c0_0 = arith.constant 0 : index
    %0 = vector.load %arg2[%c0, %c0_0] : memref<80x8xf32, #tpu.memory_space<vmem>>, vector<80x8xf32>
    %c0_1 = arith.constant 0 : index
    %c0_2 = arith.constant 0 : index
    %1 = vector.load %arg1[%c0_1, %c0_2] : memref<8x256xf32, #tpu.memory_space<vmem>>, vector<8x256xf32>
    %cst = arith.constant dense<0.000000e+00> : vector<80x256xf32>
    %2 = tpu.matmul %0, %1, %cst {dimension_numbers = #tpu.dot_dimension_numbers<[1], [0], [0], [1], [0, 0, 1, 1], [], []>} : vector<80x8xf32>, vector<8x256xf32>, vector<80x256xf32> -> vector<80x256xf32>
    %c0_3 = arith.constant 0 : index
    %c0_4 = arith.constant 0 : index
    %3 = vector.load %arg3[%c0_3, %c0_4] : memref<80x1xf32, #tpu.memory_space<vmem>>, vector<80x1xf32>
    %4 = vector.broadcast %3 : vector<80x1xf32> to vector<80x256xf32>
    %5 = arith.addf %2, %4 : vector<80x256xf32>
    %c0_5 = arith.constant 0 : index
    %c0_6 = arith.constant 0 : index
    %6 = vector.load %arg9[%c0_5, %c0_6] : memref<80x256xf32, #tpu.memory_space<vmem>>, vector<80x256xf32>
    tpu.vector_store %arg9[%c0_5, %c0_6], %5 {strides = array<i32>} : memref<80x256xf32, #tpu.memory_space<vmem>>, vector<80x256xf32>,
    %c0_7 = arith.constant 0 : index
    %c0_8 = arith.constant 0 : index
    %7 = vector.load %arg7[%c0_7, %c0_8] : memref<512x256xf32, #tpu.memory_space<vmem>>, vector<512x256xf32>
    %c16 = arith.constant 16 : index
    %c0_9 = arith.constant 0 : index
    %8 = vector.load %arg11[%c16, %c0_9] : memref<528x256xf32, #tpu.memory_space<vmem>>, vector<512x256xf32>
    tpu.vector_store %arg11[%c16, %c0_9], %7 {strides = array<i32>} : memref<528x256xf32, #tpu.memory_space<vmem>>, vector<512x256xf32>,
    %c0_10 = arith.constant 0 : index
    %c0_11 = arith.constant 0 : index
    %9 = vector.load %arg6[%c0_10, %c0_11] : memref<32x256xf32, #tpu.memory_space<vmem>>, vector<32x256xf32>
    %cst_12 = arith.constant 1.000000e+00 : f32
    %10 = vector.broadcast %cst_12 : f32 to vector<1x256xf32>
    %c0_i32 = arith.constant 0 : i32
    %c2_i32 = arith.constant 2 : i32
    %11 = arith.addi %c0_i32, %c2_i32 : i32
    %c1_i32 = arith.constant 1 : i32
    scf.for %arg13 = %c0_i32 to %11 step %c1_i32  : i32 {
      %c16_i32 = arith.constant 16 : i32
      %19 = arith.muli %arg13, %c16_i32 : i32
      %20 = tpu.assume_multiple %19, 8 : i32
      %c16_i32_23 = arith.constant 16 : i32
      %21 = arith.muli %arg13, %c16_i32_23 : i32
      %c32_i32 = arith.constant 32 : i32
      %22 = arith.addi %c32_i32, %21 : i32
      %23 = tpu.assume_multiple %22, 8 : i32
      %c8_i32 = arith.constant 8 : i32
      %24 = arith.muli %arg13, %c8_i32 : i32
      %c64_i32 = arith.constant 64 : i32
      %25 = arith.addi %c64_i32, %24 : i32
      %26 = tpu.assume_multiple %25, 8 : i32
      %27 = arith.index_cast %20 : i32 to index
      %c0_24 = arith.constant 0 : index
      %28 = vector.load %arg9[%27, %c0_24] : memref<80x256xf32, #tpu.memory_space<vmem>>, vector<16x256xf32>
      %29 = arith.index_cast %23 : i32 to index
      %c0_25 = arith.constant 0 : index
      %30 = vector.load %arg9[%29, %c0_25] : memref<80x256xf32, #tpu.memory_space<vmem>>, vector<16x256xf32>
      %31 = arith.index_cast %26 : i32 to index
      %c0_26 = arith.constant 0 : index
      %32 = vector.load %arg9[%31, %c0_26] : memref<80x256xf32, #tpu.memory_space<vmem>>, vector<8x256xf32>
      %c0_27 = arith.constant 0 : index
      %c0_28 = arith.constant 0 : index
      %33 = vector.load %arg10[%c0_27, %c0_28] : memref<528x256xf32, #tpu.memory_space<vmem>>, vector<16x256xf32>
      tpu.vector_store %arg10[%c0_27, %c0_28], %28 {strides = array<i32>} : memref<528x256xf32, #tpu.memory_space<vmem>>, vector<16x256xf32>,
      %34 = vector.shape_cast %9 : vector<32x256xf32> to vector<32x1x256xf32>
      %35 = vector.shape_cast %28 : vector<16x256xf32> to vector<1x16x256xf32>
      %36 = vector.broadcast %34 : vector<32x1x256xf32> to vector<32x16x256xf32>
      %37 = vector.broadcast %35 : vector<1x16x256xf32> to vector<32x16x256xf32>
      %38 = arith.mulf %36, %37 : vector<32x16x256xf32>
      %39 = vector.shape_cast %38 : vector<32x16x256xf32> to vector<512x256xf32>
      %c16_29 = arith.constant 16 : index
      %c0_30 = arith.constant 0 : index
      %40 = vector.load %arg10[%c16_29, %c0_30] : memref<528x256xf32, #tpu.memory_space<vmem>>, vector<512x256xf32>
      tpu.vector_store %arg10[%c16_29, %c0_30], %39 {strides = array<i32>} : memref<528x256xf32, #tpu.memory_space<vmem>>, vector<512x256xf32>,
      %c0_31 = arith.constant 0 : index
      %c0_32 = arith.constant 0 : index
      %41 = vector.load %arg11[%c0_31, %c0_32] : memref<528x256xf32, #tpu.memory_space<vmem>>, vector<16x256xf32>
      tpu.vector_store %arg11[%c0_31, %c0_32], %30 {strides = array<i32>} : memref<528x256xf32, #tpu.memory_space<vmem>>, vector<16x256xf32>,
      %c0_33 = arith.constant 0 : index
      %c0_34 = arith.constant 0 : index
      %42 = vector.load %arg10[%c0_33, %c0_34] : memref<528x256xf32, #tpu.memory_space<vmem>>, vector<528x256xf32>
      %c0_35 = arith.constant 0 : index
      %c0_36 = arith.constant 0 : index
      %43 = vector.load %arg11[%c0_35, %c0_36] : memref<528x256xf32, #tpu.memory_space<vmem>>, vector<528x256xf32>
      %cst_37 = arith.constant dense<0.000000e+00> : vector<256x256xf32>
      %44 = tpu.matmul %42, %43, %cst_37 {dimension_numbers = #tpu.dot_dimension_numbers<[0], [0], [1], [1], [0, 1, 1, 1], [], []>} : vector<528x256xf32>, vector<528x256xf32>, vector<256x256xf32> -> vector<256x256xf32>
      %cst_38 = arith.constant dense<0xFF800000> : vector<256xf32>
      %45 = vector.multi_reduction <maximumf>, %44, %cst_38 [1] : vector<256x256xf32> to vector<256xf32>
      %46 = vector.shape_cast %45 : vector<256xf32> to vector<256x1xf32>
      %47 = vector.broadcast %46 : vector<256x1xf32> to vector<256x256xf32>
      %48 = arith.subf %44, %47 : vector<256x256xf32>
      %49 = math.exp %48 : vector<256x256xf32>
      %50 = tpu.concatenate %32, %10 in 0 : vector<8x256xf32>, vector<1x256xf32> -> vector<9x256xf32>
      %cst_39 = arith.constant dense<0.000000e+00> : vector<9x256xf32>
      %51 = tpu.matmul %50, %49, %cst_39 {dimension_numbers = #tpu.dot_dimension_numbers<[1], [1], [0], [0], [0, 0, 1, 0], [], []>} : vector<9x256xf32>, vector<256x256xf32>, vector<9x256xf32> -> vector<9x256xf32>
      %52 = vector.extract_strided_slice %51 {offsets = [8, 0], sizes = [1, 256], strides = [1, 1]} : vector<9x256xf32> to vector<1x256xf32>
      %53 = tpu.reciprocal %52 {approx = true} : vector<1x256xf32> -> vector<1x256xf32>
      %54 = vector.extract_strided_slice %51 {offsets = [0, 0], sizes = [8, 256], strides = [1, 1]} : vector<9x256xf32> to vector<8x256xf32>
      %55 = vector.broadcast %53 : vector<1x256xf32> to vector<8x256xf32>
      %56 = arith.mulf %54, %55 : vector<8x256xf32>
      %c8_i32_40 = arith.constant 8 : i32
      %57 = arith.muli %arg13, %c8_i32_40 : i32
      %58 = tpu.assume_multiple %57, 8 : i32
      %59 = arith.index_cast %58 : i32 to index
      %c0_41 = arith.constant 0 : index
      %60 = vector.load %arg12[%59, %c0_41] : memref<16x256xf32, #tpu.memory_space<vmem>>, vector<8x256xf32>
      tpu.vector_store %arg12[%59, %c0_41], %56 {strides = array<i32>} : memref<16x256xf32, #tpu.memory_space<vmem>>, vector<8x256xf32>,
    }
    %c2_i32_13 = arith.constant 2 : i32
    %c0_14 = arith.constant 0 : index
    %c0_15 = arith.constant 0 : index
    %12 = vector.load %arg4[%c0_14, %c0_15] : memref<16x16xf32, #tpu.memory_space<vmem>>, vector<16x16xf32>
    %c0_16 = arith.constant 0 : index
    %c0_17 = arith.constant 0 : index
    %13 = vector.load %arg12[%c0_16, %c0_17] : memref<16x256xf32, #tpu.memory_space<vmem>>, vector<16x256xf32>
    %cst_18 = arith.constant dense<0.000000e+00> : vector<16x256xf32>
    %14 = tpu.matmul %12, %13, %cst_18 {dimension_numbers = #tpu.dot_dimension_numbers<[1], [0], [0], [1], [0, 0, 1, 1], [], []>} : vector<16x16xf32>, vector<16x256xf32>, vector<16x256xf32> -> vector<16x256xf32>
    %c0_19 = arith.constant 0 : index
    %c0_20 = arith.constant 0 : index
    %15 = vector.load %arg5[%c0_19, %c0_20] : memref<16x1xf32, #tpu.memory_space<vmem>>, vector<16x1xf32>
    %16 = vector.broadcast %15 : vector<16x1xf32> to vector<16x256xf32>
    %17 = arith.addf %14, %16 : vector<16x256xf32>
    %c0_21 = arith.constant 0 : index
    %c0_22 = arith.constant 0 : index
    %18 = vector.load %arg8[%c0_21, %c0_22] : memref<16x256xf32, #tpu.memory_space<vmem>>, vector<16x256xf32>
    tpu.vector_store %arg8[%c0_21, %c0_22], %17 {strides = array<i32>} : memref<16x256xf32, #tpu.memory_space<vmem>>, vector<16x256xf32>,
    return
  }
  func.func @transform_0(%arg0: i32) -> (i32, i32) {
    %c0_i32 = arith.constant 0 : i32
    %c0_i32_0 = arith.constant 0 : i32
    return %c0_i32, %arg0 : i32, i32
  }
  func.func @transform_1(%arg0: i32) -> (i32, i32) {
    %c0_i32 = arith.constant 0 : i32
    %c0_i32_0 = arith.constant 0 : i32
    %c0_i32_1 = arith.constant 0 : i32
    return %c0_i32, %c0_i32_0 : i32, i32
  }
  func.func @transform_2(%arg0: i32) -> (i32, i32) {
    %c0_i32 = arith.constant 0 : i32
    %c0_i32_0 = arith.constant 0 : i32
    %c0_i32_1 = arith.constant 0 : i32
    return %c0_i32, %c0_i32_0 : i32, i32
  }
  func.func @transform_3(%arg0: i32) -> (i32, i32) {
    %c0_i32 = arith.constant 0 : i32
    %c0_i32_0 = arith.constant 0 : i32
    %c0_i32_1 = arith.constant 0 : i32
    return %c0_i32, %c0_i32_0 : i32, i32
  }
  func.func @transform_4(%arg0: i32) -> (i32, i32) {
    %c0_i32 = arith.constant 0 : i32
    %c0_i32_0 = arith.constant 0 : i32
    %c0_i32_1 = arith.constant 0 : i32
    return %c0_i32, %c0_i32_0 : i32, i32
  }
  func.func @transform_5(%arg0: i32) -> (i32, i32) {
    %c0_i32 = arith.constant 0 : i32
    %c0_i32_0 = arith.constant 0 : i32
    %c0_i32_1 = arith.constant 0 : i32
    return %c0_i32, %c0_i32_0 : i32, i32
  }
  func.func @transform_6(%arg0: i32) -> (i32, i32) {
    %c0_i32 = arith.constant 0 : i32
    %c0_i32_0 = arith.constant 0 : i32
    %c0_i32_1 = arith.constant 0 : i32
    return %c0_i32, %c0_i32_0 : i32, i32
  }
  func.func @transform_7(%arg0: i32) -> (i32, i32) {
    %c0_i32 = arith.constant 0 : i32
    %c0_i32_0 = arith.constant 0 : i32
    return %c0_i32, %arg0 : i32, i32
  }
}

</mosaic_0001>

<llo_original>
// kernel: tpu_custom_call.1
$region0: #{tpu_custom_call.1}
  #allocation0 [shape = 'u32[]', space=smem, size = 0x4, offset = 0x4, fixed_abs, tag = 'smem constant byte address 0x4 - core index']
  #allocation1 [shape = 'u32[72,128]{1,0:T(1,128)}', space=vmem, size = 0x9000, scoped, tag = 'internal scratch']
  #allocation2 [shape = 'f32[80,256]{1,0:T(8,128)}', space=vmem, size = 0x14000, scoped, tag = 'scratch operand']
  #allocation3 [shape = 'f32[528,256]{1,0:T(8,128)}', space=vmem, size = 0x84000, scoped, tag = 'scratch operand']
  #allocation4 [shape = 'f32[528,256]{1,0:T(8,128)}', space=vmem, size = 0x84000, scoped, tag = 'scratch operand']
  #allocation5 [shape = 'f32[16,256]{1,0:T(8,128)}', space=vmem, size = 0x4000, scoped, tag = 'scratch operand']
  %s0 = inlined_call_operand.vmem [shape: f32[8,512], index: 0, kind: input, shape index: {}]
  %s1 = inlined_call_operand.vmem [shape: f32[80,8], index: 1, kind: input, shape index: {}]
  %s2 = inlined_call_operand.vmem [shape: f32[80,1], index: 2, kind: input, shape index: {}]
  %s3 = inlined_call_operand.vmem [shape: f32[16,16], index: 3, kind: input, shape index: {}]
  %s4 = inlined_call_operand.vmem [shape: f32[16,1], index: 4, kind: input, shape index: {}]
  %s5 = inlined_call_operand.vmem [shape: f32[32,256], index: 5, kind: input, shape index: {}]
  %s6 = inlined_call_operand.hbm [shape: f32[512,256], index: 6, kind: input, shape index: {}]
  %s7 = inlined_call_operand.hbm [shape: f32[16,512], index: 7, kind: output, shape index: {}]
  %s8 = sld [smem:[#allocation0]]
  $region72: #{tpu_custom_call.1} parent=0
    _
  %s10 = ssub.s32 1, %s8
  %s11 = scalar_select 0, %s10, %s8
  $region1: #{tpu_custom_call.1} parent=0
    #allocation6 [shape = 'u8[524288]{0}', space=vmem, size = 0x80000, scoped, tag = 'input window, operand 6, single buffered']
    #allocation7 [shape = 's32[2]{0}', space=sflag, size = 0x8, scoped, tag = 'scoped memory for tpu_custom_call.1']
    #allocation8 [shape = 's32[2]{0}', space=sflag, size = 0x8, scoped, tag = 'scoped memory for tpu_custom_call.1']
    #allocation9 [shape = 'u8[32768]{0}', space=vmem, size = 0x8000, scoped, tag = 'output window, operand 0']
    %12 = vsyncpa [#allocation7], 0
    %13 = vsyncpa [#allocation8], 0
    %s14 = scalar_lea.sflag [#allocation8], 1
    %15 = vsyncpa %s14, 0
    loop: start=0, step=1, limit=4
    $region2: #{tpu_custom_call.1} parent=1 // loop_pre_header
      _
    $region3: #{tpu_custom_call.1} parent=1 // loop_header
      %s17 = sphi 0, %s21
      %p18 = scmp.ge.s32.totalorder %s17, 4
      %s27 = sphi 0, %s29
      %s30 = sphi 0, %s27
      %s31 = sphi 0, %s30
      %s47 = sphi 0, %s31
      %s51 = sphi 0, %s51
      %s53 = sphi 0, %s51
      %s54 = sphi 0, %s53
      %s68 = sphi 0, %s54
      %s72 = sphi 0, %s72
      %s74 = sphi 0, %s72
      %s75 = sphi 0, %s74
      %s89 = sphi 0, %s75
      %s93 = sphi 0, %s93
      %s95 = sphi 0, %s93
      %s96 = sphi 0, %s95
      %s110 = sphi 0, %s96
      %s114 = sphi 0, %s114
      %s116 = sphi 0, %s114
      %s117 = sphi 0, %s116
      %s131 = sphi 0, %s117
      %s135 = sphi 0, %s135
      %s137 = sphi 0, %s135
      %s138 = sphi 0, %s137
      %s152 = sphi 0, %s138
      %s156 = sphi 0, %s156
      %s158 = sphi 0, %s156
      %s159 = sphi 0, %s158
      %s173 = sphi 0, %s159
      %s179 = sphi 0, %s181
      %s182 = sphi 0, %s179
      %s183 = sphi 0, %s182
      %s199 = sphi 0, %s183
    $region4: #{tpu_custom_call.1} parent=1 // loop_header_branch
      %20 = sbr.rel (%p18) target = $region8
    $region5: #{tpu_custom_call.1} parent=1 // loop_body
      %s22 = ssub.s32 %s17, 1
      %s23 = ssub.s32 %s17, 2
      %s24 = sadd.s32 %s17, 1
      %s25 = ssub.s32 %s17, %s24
      %p26 = scmp.eq.s32.totalorder %s25, 0
      %s28 = sadd.s32 %s27, 1
      %s29 = scalar_select %p26, %s27, %s28
      %p32 = pneg %p26
      %p33 = scmp.eq.s32.totalorder %s17, 1
      %p34 = por %p32, %p33
      %p35 = scmp.ne.s32.totalorder %s27, %s30
      %p36 = scmp.eq.s32.totalorder %s17, 0
      %p37 = por %p35, %p36
      %p38 = scmp.ne.s32.totalorder %s27, %s30
      %p39 = scmp.eq.s32.totalorder %s22, 1
      %p40 = por %p38, %p39
      %p41 = scmp.ne.s32.totalorder %s30, %s31
      %p42 = scmp.eq.s32.totalorder %s22, 0
      %p43 = por %p41, %p42
      %p44 = scmp.ne.s32.totalorder %s30, %s31
      %p45 = scmp.eq.s32.totalorder %s23, 1
      %p46 = por %p44, %p45
      %p48 = scmp.ne.s32.totalorder %s31, %s47
      %p49 = scmp.eq.s32.totalorder %s23, 0
      %p50 = por %p48, %p49
      %s52 = sadd.s32 %s51, 1
      %p55 = scmp.eq.s32.totalorder %s17, 1
      %p56 = scmp.ne.s32.totalorder %s51, %s53
      %p57 = scmp.eq.s32.totalorder %s17, 0
      %p58 = por %p56, %p57
      %p59 = scmp.ne.s32.totalorder %s51, %s53
      %p60 = scmp.eq.s32.totalorder %s22, 1
      %p61 = por %p59, %p60
      %p62 = scmp.ne.s32.totalorder %s53, %s54
      %p63 = scmp.eq.s32.totalorder %s22, 0
      %p64 = por %p62, %p63
      %p65 = scmp.ne.s32.totalorder %s53, %s54
      %p66 = scmp.eq.s32.totalorder %s23, 1
      %p67 = por %p65, %p66
      %p69 = scmp.ne.s32.totalorder %s54, %s68
      %p70 = scmp.eq.s32.totalorder %s23, 0
      %p71 = por %p69, %p70
      %s73 = sadd.s32 %s72, 1
      %p76 = scmp.eq.s32.totalorder %s17, 1
      %p77 = scmp.ne.s32.totalorder %s72, %s74
      %p78 = scmp.eq.s32.totalorder %s17, 0
      %p79 = por %p77, %p78
      %p80 = scmp.ne.s32.totalorder %s72, %s74
      %p81 = scmp.eq.s32.totalorder %s22, 1
      %p82 = por %p80, %p81
      %p83 = scmp.ne.s32.totalorder %s74, %s75
      %p84 = scmp.eq.s32.totalorder %s22, 0
      %p85 = por %p83, %p84
      %p86 = scmp.ne.s32.totalorder %s74, %s75
      %p87 = scmp.eq.s32.totalorder %s23, 1
      %p88 = por %p86, %p87
      %p90 = scmp.ne.s32.totalorder %s75, %s89
      %p91 = scmp.eq.s32.totalorder %s23, 0
      %p92 = por %p90, %p91
      %s94 = sadd.s32 %s93, 1
      %p97 = scmp.eq.s32.totalorder %s17, 1
      %p98 = scmp.ne.s32.totalorder %s93, %s95
      %p99 = scmp.eq.s32.totalorder %s17, 0
      %p100 = por %p98, %p99
      %p101 = scmp.ne.s32.totalorder %s93, %s95
      %p102 = scmp.eq.s32.totalorder %s22, 1
      %p103 = por %p101, %p102
      %p104 = scmp.ne.s32.totalorder %s95, %s96
      %p105 = scmp.eq.s32.totalorder %s22, 0
      %p106 = por %p104, %p105
      %p107 = scmp.ne.s32.totalorder %s95, %s96
      %p108 = scmp.eq.s32.totalorder %s23, 1
      %p109 = por %p107, %p108
      %p111 = scmp.ne.s32.totalorder %s96, %s110
      %p112 = scmp.eq.s32.totalorder %s23, 0
      %p113 = por %p111, %p112
      %s115 = sadd.s32 %s114, 1
      %p118 = scmp.eq.s32.totalorder %s17, 1
      %p119 = scmp.ne.s32.totalorder %s114, %s116
      %p120 = scmp.eq.s32.totalorder %s17, 0
      %p121 = por %p119, %p120
      %p122 = scmp.ne.s32.totalorder %s114, %s116
      %p123 = scmp.eq.s32.totalorder %s22, 1
      %p124 = por %p122, %p123
      %p125 = scmp.ne.s32.totalorder %s116, %s117
      %p126 = scmp.eq.s32.totalorder %s22, 0
      %p127 = por %p125, %p126
      %p128 = scmp.ne.s32.totalorder %s116, %s117
      %p129 = scmp.eq.s32.totalorder %s23, 1
      %p130 = por %p128, %p129
      %p132 = scmp.ne.s32.totalorder %s117, %s131
      %p133 = scmp.eq.s32.totalorder %s23, 0
      %p134 = por %p132, %p133
      %s136 = sadd.s32 %s135, 1
      %p139 = scmp.eq.s32.totalorder %s17, 1
      %p140 = scmp.ne.s32.totalorder %s135, %s137
      %p141 = scmp.eq.s32.totalorder %s17, 0
      %p142 = por %p140, %p141
      %p143 = scmp.ne.s32.totalorder %s135, %s137
      %p144 = scmp.eq.s32.totalorder %s22, 1
      %p145 = por %p143, %p144
      %p146 = scmp.ne.s32.totalorder %s137, %s138
      %p147 = scmp.eq.s32.totalorder %s22, 0
      %p148 = por %p146, %p147
      %p149 = scmp.ne.s32.totalorder %s137, %s138
      %p150 = scmp.eq.s32.totalorder %s23, 1
      %p151 = por %p149, %p150
      %p153 = scmp.ne.s32.totalorder %s138, %s152
      %p154 = scmp.eq.s32.totalorder %s23, 0
      %p155 = por %p153, %p154
      %s157 = sadd.s32 %s156, 1
      %p160 = scmp.eq.s32.totalorder %s17, 1
      %p161 = scmp.ne.s32.totalorder %s156, %s158
      %p162 = scmp.eq.s32.totalorder %s17, 0
      %p163 = por %p161, %p162
      %p164 = scmp.ne.s32.totalorder %s156, %s158
      %p165 = scmp.eq.s32.totalorder %s22, 1
      %p166 = por %p164, %p165
      %p167 = scmp.ne.s32.totalorder %s158, %s159
      %p168 = scmp.eq.s32.totalorder %s22, 0
      %p169 = por %p167, %p168
      %p170 = scmp.ne.s32.totalorder %s158, %s159
      %p171 = scmp.eq.s32.totalorder %s23, 1
      %p172 = por %p170, %p171
      %p174 = scmp.ne.s32.totalorder %s159, %s173
      %p175 = scmp.eq.s32.totalorder %s23, 0
      %p176 = por %p174, %p175
      %s177 = ssub.s32 %s17, %s24
      %p178 = scmp.eq.s32.totalorder %s177, 0
      %s180 = sadd.s32 %s179, 1
      %s181 = scalar_select %p178, %s179, %s180
      %p184 = pneg %p178
      %p185 = scmp.eq.s32.totalorder %s17, 1
      %p186 = por %p184, %p185
      %p187 = scmp.ne.s32.totalorder %s179, %s182
      %p188 = scmp.eq.s32.totalorder %s17, 0
      %p189 = por %p187, %p188
      %p190 = scmp.ne.s32.totalorder %s179, %s182
      %p191 = scmp.eq.s32.totalorder %s22, 1
      %p192 = por %p190, %p191
      %p193 = scmp.ne.s32.totalorder %s182, %s183
      %p194 = scmp.eq.s32.totalorder %s22, 0
      %p195 = por %p193, %p194
      %p196 = scmp.ne.s32.totalorder %s182, %s183
      %p197 = scmp.eq.s32.totalorder %s23, 1
      %p198 = por %p196, %p197
      %p200 = scmp.ne.s32.totalorder %s183, %s199
      %p201 = scmp.eq.s32.totalorder %s23, 0
      %p202 = por %p200, %p201
      %p203 = scmp.le.s32.totalorder 1, %s17
      %p204 = scmp.lt.s32.totalorder %s17, 3
      %p205 = pnand %p203, %p204
      %p206 = pneg %p205
      // Predicated region
      $region9: #{tpu_custom_call.1} parent=5 // pred_check
        _
      $region10: #{tpu_custom_call.1} parent=5 // pred_check_branch
        %208 = sbr.rel (%p205) target = $region12
      $region11: #{tpu_custom_call.1} parent=5 // pred_region
        %s209 = ssub.s32 %s17, 1
        // Predicated region
        $region13: #{tpu_custom_call.1} parent=11 // pred_check
          %p210 = pneg %p64
        $region14: #{tpu_custom_call.1} parent=11 // pred_check_branch
          %212 = sbr.rel (%p210) target = $region16
        $region15: #{tpu_custom_call.1} parent=11 // pred_region
          _
        $region16: #{tpu_custom_call.1} parent=11 // pred_fallthru
          _
        // Predicated region
        $region17: #{tpu_custom_call.1} parent=11 // pred_check
          %p213 = pneg %p85
        $region18: #{tpu_custom_call.1} parent=11 // pred_check_branch
          %215 = sbr.rel (%p213) target = $region20
        $region19: #{tpu_custom_call.1} parent=11 // pred_region
          _
        $region20: #{tpu_custom_call.1} parent=11 // pred_fallthru
          _
        // Predicated region
        $region21: #{tpu_custom_call.1} parent=11 // pred_check
          %p216 = pneg %p106
        $region22: #{tpu_custom_call.1} parent=11 // pred_check_branch
          %218 = sbr.rel (%p216) target = $region24
        $region23: #{tpu_custom_call.1} parent=11 // pred_region
          _
        $region24: #{tpu_custom_call.1} parent=11 // pred_fallthru
          _
        // Predicated region
        $region25: #{tpu_custom_call.1} parent=11 // pred_check
          %p219 = pneg %p127
        $region26: #{tpu_custom_call.1} parent=11 // pred_check_branch
          %221 = sbr.rel (%p219) target = $region28
        $region27: #{tpu_custom_call.1} parent=11 // pred_region
          _
        $region28: #{tpu_custom_call.1} parent=11 // pred_fallthru
          _
        // Predicated region
        $region29: #{tpu_custom_call.1} parent=11 // pred_check
          %p222 = pneg %p148
        $region30: #{tpu_custom_call.1} parent=11 // pred_check_branch
          %224 = sbr.rel (%p222) target = $region32
        $region31: #{tpu_custom_call.1} parent=11 // pred_region
          _
        $region32: #{tpu_custom_call.1} parent=11 // pred_fallthru
          _
        // Predicated region
        $region33: #{tpu_custom_call.1} parent=11 // pred_check
          %p225 = pneg %p169
        $region34: #{tpu_custom_call.1} parent=11 // pred_check_branch
          %227 = sbr.rel (%p225) target = $region36
        $region35: #{tpu_custom_call.1} parent=11 // pred_region
          %229 = vsyncadd [#allocation7], 0
          %s230 = sshll.u32 %s6, 4
          %s231 = int_to_ptr.hbm [resolvable:$true] %s230
          %s232 = sshll.u32 [#allocation6], 4
          %s233 = int_to_ptr.vmem [resolvable:$true] %s232
          %238 = dma.hbm_to_vmem [thread:$0]  %s231, 16384, %s233, [#allocation7], 256, 256, 16
        $region36: #{tpu_custom_call.1} parent=11 // pred_fallthru
          _
      $region12: #{tpu_custom_call.1} parent=5 // pred_fallthru
        _
      %p239 = scmp.lt.s32.totalorder %s17, 2
      // Predicated region
      $region37: #{tpu_custom_call.1} parent=5 // pred_check
        %p240 = pneg %p239
      $region38: #{tpu_custom_call.1} parent=5 // pred_check_branch
        %242 = sbr.rel (%p240) target = $region40
      $region39: #{tpu_custom_call.1} parent=5 // pred_region
        // Predicated region
        $region41: #{tpu_custom_call.1} parent=39 // pred_check
          %p243 = pneg %p37
        $region42: #{tpu_custom_call.1} parent=39 // pred_check_branch
          %245 = sbr.rel (%p243) target = $region44
        $region43: #{tpu_custom_call.1} parent=39 // pred_region
          %s246 = smul.u32 2, %s17
          %p247 = scmp.lt.s32.totalorder %s246, 3
          %s248 = scalar_select %p247, %s246, 3
          %s249 = smul.addr %s248, 8
          %s250 = scalar_lea.vmem %s0, %s249
          %s251 = smul.u32 2, %s17
        $region44: #{tpu_custom_call.1} parent=39 // pred_fallthru
          _
      $region40: #{tpu_custom_call.1} parent=5 // pred_fallthru
        _
      %p252 = scmp.le.s32.totalorder 1, %s17
      %p253 = scmp.lt.s32.totalorder %s17, 3
      %p254 = pnand %p252, %p253
      %p255 = pneg %p254
      // Predicated region
      $region45: #{tpu_custom_call.1} parent=5 // pred_check
        _
      $region46: #{tpu_custom_call.1} parent=5 // pred_check_branch
        %257 = sbr.rel (%p254) target = $region48
      $region47: #{tpu_custom_call.1} parent=5 // pred_region
        %s258 = ssub.s32 %s17, 1
        // Predicated region
        $region49: #{tpu_custom_call.1} parent=47 // pred_check
          %p259 = pneg %p169
        $region50: #{tpu_custom_call.1} parent=47 // pred_check_branch
          %261 = sbr.rel (%p259) target = $region52
        $region51: #{tpu_custom_call.1} parent=47 // pred_region
          %263 = dma.done [#allocation7], 16384
        $region52: #{tpu_custom_call.1} parent=47 // pred_fallthru
          _
        %s264 = smul.u32 2, %s22
        %p265 = scmp.lt.s32.totalorder %s264, 3
        %s266 = scalar_select %p265, %s264, 3
        %s267 = smul.addr %s266, 8
        %s268 = scalar_lea.vmem %s0, %s267
        %p269 = pneg %p43
        %p270 = pneg %p40
        %p271 = pneg %p64
        %p272 = pneg %p61
        %p273 = pneg %p85
        %p274 = pneg %p82
        %p275 = pneg %p106
        %p276 = pneg %p103
        %p277 = pneg %p127
        %p278 = pneg %p124
        %p279 = pneg %p148
        %p280 = pneg %p145
        %p281 = pneg %p169
        %p282 = pneg %p166
        %p283 = pneg %p195
        %p284 = pneg %p192
        %s285 = sand.u32 %s182, 1
        %s286 = scalar_lea.sflag [#allocation8], %s285
        %s287 = sand.u32 %s182, 1
        %s288 = smul.addr %s287, 32
        %s289 = scalar_lea.vmem [#allocation9], %s288
        %s290 = smul.u32 2, %s22
        %p291 = scmp.lt.s32.totalorder %s290, 3
        %s292 = scalar_select %p291, %s290, 3
        %s293 = smul.addr %s292, 8
        %s294 = scalar_lea.vmem %s0, %s293
        %s295 = smul.u32 2, %s22
        %s296 = smul.u32 2, %s22
        %v297 = vld [vmem:[%s1] sm:$0xff]
        %v298 = vld [vmem:[%s1 + $0x8] sm:$0xff]
        %v299 = vld [vmem:[%s1 + $0x10] sm:$0xff]
        %v300 = vld [vmem:[%s1 + $0x18] sm:$0xff]
        %v301 = vld [vmem:[%s1 + $0x20] sm:$0xff]
        %v302 = vld [vmem:[%s1 + $0x28] sm:$0xff]
        %v303 = vld [vmem:[%s1 + $0x30] sm:$0xff]
        %v304 = vld [vmem:[%s1 + $0x38] sm:$0xff]
        %v305 = vld [vmem:[%s1 + $0x40] sm:$0xff]
        %v306 = vld [vmem:[%s1 + $0x48] sm:$0xff]
        %v307 = vld [vmem:[%s294] sm:$0xff]
        %v308 = vld [vmem:[%s294 + $0x8] sm:$0xff]
        %v309 = vld [vmem:[%s2] sm:$0xff]
        %v310 = vld [vmem:[%s2 + $0x8] sm:$0xff]
        %v311 = vld [vmem:[%s2 + $0x10] sm:$0xff]
        %v312 = vld [vmem:[%s2 + $0x18] sm:$0xff]
        %v313 = vld [vmem:[%s2 + $0x20] sm:$0xff]
        %v314 = vld [vmem:[%s2 + $0x28] sm:$0xff]
        %v315 = vld [vmem:[%s2 + $0x30] sm:$0xff]
        %v316 = vld [vmem:[%s2 + $0x38] sm:$0xff]
        %v317 = vld [vmem:[%s2 + $0x40] sm:$0xff]
        %v318 = vld [vmem:[%s2 + $0x48] sm:$0xff]
        %320 = vset.pattern.permute.xlu0 0
        %321 = vperm.xlu0 %320, %v309
        %v322 = vpop.permute.xlu0 %321
        %325 = vset.pattern.permute.xlu0 0
        %326 = vperm.xlu0 %325, %v310
        %v327 = vpop.permute.xlu0 %326
        %330 = vset.pattern.permute.xlu0 0
        %331 = vperm.xlu0 %330, %v311
        %v332 = vpop.permute.xlu0 %331
        %335 = vset.pattern.permute.xlu0 0
        %336 = vperm.xlu0 %335, %v312
        %v337 = vpop.permute.xlu0 %336
        %340 = vset.pattern.permute.xlu0 0
        %341 = vperm.xlu0 %340, %v313
        %v342 = vpop.permute.xlu0 %341
        %345 = vset.pattern.permute.xlu0 0
        %346 = vperm.xlu0 %345, %v314
        %v347 = vpop.permute.xlu0 %346
        %350 = vset.pattern.permute.xlu0 0
        %351 = vperm.xlu0 %350, %v315
        %v352 = vpop.permute.xlu0 %351
        %355 = vset.pattern.permute.xlu0 0
        %356 = vperm.xlu0 %355, %v316
        %v357 = vpop.permute.xlu0 %356
        %360 = vset.pattern.permute.xlu0 0
        %361 = vperm.xlu0 %360, %v317
        %v362 = vpop.permute.xlu0 %361
        %365 = vset.pattern.permute.xlu0 0
        %366 = vperm.xlu0 %365, %v318
        %v367 = vpop.permute.xlu0 %366
        %vm369 = vcmask 64512
        %v371 = vsel %vm369, %v297, 0
        %v374 = vsel %vm369, %v298, 0
        %v377 = vsel %vm369, %v299, 0
        %v380 = vsel %vm369, %v300, 0
        %v383 = vsel %vm369, %v301, 0
        %v386 = vsel %vm369, %v302, 0
        %v389 = vsel %vm369, %v303, 0
        %v392 = vsel %vm369, %v304, 0
        %v395 = vsel %vm369, %v305, 0
        %v398 = vsel %vm369, %v306, 0
        %400 = vmatpush.msra.mxu0 0.0
        %401 = vmatpush.msra.mxu0 0.0
        %402 = vmatpush.msra.mxu0 0.0
        %403 = vmatpush.msra.mxu0 0.0
        %404 = vmatpush.msra.mxu0 0.0
        %405 = vmatpush.msra.mxu0 0.0
        %406 = vmatpush.msra.mxu0 0.0
        %407 = vmatpush.msra.mxu0 0.0
        %408 = vmatpush.msra.mxu0 0.0
        %409 = vmatpush.msra.mxu0 0.0
        %410 = vmatpush.msra.mxu0 0.0
        %411 = vmatpush.msra.mxu0 0.0
        %412 = vmatpush.msra.mxu0 0.0
        %413 = vmatpush.msra.mxu0 0.0
        %414 = vmatpush.msra.mxu0 0.0
        %415 = vmatpush.msra.mxu0 %v307
        %416 = vmatmul.f32.gmra.mxu0 %v371
        %v417 = vpop.f32.mrf.mxu0
        %v418 = vadd.f32 %v322, %v417
        %419 = vmatmul.f32.gmra.mxu0 %v374
        %v420 = vpop.f32.mrf.mxu0
        %v421 = vadd.f32 %v327, %v420
        %422 = vmatmul.f32.gmra.mxu0 %v377
        %v423 = vpop.f32.mrf.mxu0
        %v424 = vadd.f32 %v332, %v423
        %425 = vmatmul.f32.gmra.mxu0 %v380
        %v426 = vpop.f32.mrf.mxu0
        %v427 = vadd.f32 %v337, %v426
        %428 = vmatmul.f32.gmra.mxu0 %v383
        %v429 = vpop.f32.mrf.mxu0
        %v430 = vadd.f32 %v342, %v429
        %431 = vmatmul.f32.gmra.mxu0 %v386
        %v432 = vpop.f32.mrf.mxu0
        %v433 = vadd.f32 %v347, %v432
        %434 = vmatmul.f32.gmra.mxu0 %v389
        %v435 = vpop.f32.mrf.mxu0
        %v436 = vadd.f32 %v352, %v435
        %437 = vmatmul.f32.gmra.mxu0 %v392
        %v438 = vpop.f32.mrf.mxu0
        %v439 = vadd.f32 %v357, %v438
        %440 = vmatmul.f32.gmra.mxu0 %v395
        %v441 = vpop.f32.mrf.mxu0
        %v442 = vadd.f32 %v362, %v441
        %443 = vmatmul.f32.gmra.mxu0 %v398
        %v444 = vpop.f32.mrf.mxu0
        %v445 = vadd.f32 %v367, %v444
        %446 = vdwg.mxu0
        %447 = vmatpush.msra.mxu0 0.0
        %448 = vmatpush.msra.mxu0 0.0
        %449 = vmatpush.msra.mxu0 0.0
        %450 = vmatpush.msra.mxu0 0.0
        %451 = vmatpush.msra.mxu0 0.0
        %452 = vmatpush.msra.mxu0 0.0
        %453 = vmatpush.msra.mxu0 0.0
        %454 = vmatpush.msra.mxu0 0.0
        %455 = vmatpush.msra.mxu0 0.0
        %456 = vmatpush.msra.mxu0 0.0
        %457 = vmatpush.msra.mxu0 0.0
        %458 = vmatpush.msra.mxu0 0.0
        %459 = vmatpush.msra.mxu0 0.0
        %460 = vmatpush.msra.mxu0 0.0
        %461 = vmatpush.msra.mxu0 0.0
        %462 = vmatpush.msra.mxu0 %v308
        %463 = vmatmul.f32.gmra.mxu0 %v371
        %v464 = vpop.f32.mrf.mxu0
        %v465 = vadd.f32 %v322, %v464
        %466 = vmatmul.f32.gmra.mxu0 %v374
        %v467 = vpop.f32.mrf.mxu0
        %v468 = vadd.f32 %v327, %v467
        %469 = vmatmul.f32.gmra.mxu0 %v377
        %v470 = vpop.f32.mrf.mxu0
        %v471 = vadd.f32 %v332, %v470
        %472 = vmatmul.f32.gmra.mxu0 %v380
        %v473 = vpop.f32.mrf.mxu0
        %v474 = vadd.f32 %v337, %v473
        %475 = vmatmul.f32.gmra.mxu0 %v383
        %v476 = vpop.f32.mrf.mxu0
        %v477 = vadd.f32 %v342, %v476
        %478 = vmatmul.f32.gmra.mxu0 %v386
        %v479 = vpop.f32.mrf.mxu0
        %v480 = vadd.f32 %v347, %v479
        %481 = vmatmul.f32.gmra.mxu0 %v389
        %v482 = vpop.f32.mrf.mxu0
        %v483 = vadd.f32 %v352, %v482
        %484 = vmatmul.f32.gmra.mxu0 %v392
        %v485 = vpop.f32.mrf.mxu0
        %v486 = vadd.f32 %v357, %v485
        %487 = vmatmul.f32.gmra.mxu0 %v395
        %v488 = vpop.f32.mrf.mxu0
        %v489 = vadd.f32 %v362, %v488
        %490 = vmatmul.f32.gmra.mxu0 %v398
        %v491 = vpop.f32.mrf.mxu0
        %v492 = vadd.f32 %v367, %v491
        %493 = vdwg.mxu0
        %494 = vst [vmem:[#allocation2] sm:$0xff] %v418
        %495 = vst [vmem:[#allocation2 + $0x8] sm:$0xff] %v465
        %496 = vst [vmem:[#allocation2 + $0x10] sm:$0xff] %v421
        %497 = vst [vmem:[#allocation2 + $0x18] sm:$0xff] %v468
        %498 = vst [vmem:[#allocation2 + $0x20] sm:$0xff] %v424
        %499 = vst [vmem:[#allocation2 + $0x28] sm:$0xff] %v471
        %500 = vst [vmem:[#allocation2 + $0x30] sm:$0xff] %v427
        %501 = vst [vmem:[#allocation2 + $0x38] sm:$0xff] %v474
        %502 = vst [vmem:[#allocation2 + $0x40] sm:$0xff] %v430
        %503 = vst [vmem:[#allocation2 + $0x48] sm:$0xff] %v477
        %504 = vst [vmem:[#allocation2 + $0x50] sm:$0xff] %v433
        %505 = vst [vmem:[#allocation2 + $0x58] sm:$0xff] %v480
        %506 = vst [vmem:[#allocation2 + $0x60] sm:$0xff] %v436
        %507 = vst [vmem:[#allocation2 + $0x68] sm:$0xff] %v483
        %508 = vst [vmem:[#allocation2 + $0x70] sm:$0xff] %v439
        %509 = vst [vmem:[#allocation2 + $0x78] sm:$0xff] %v486
        %510 = vst [vmem:[#allocation2 + $0x80] sm:$0xff] %v442
        %511 = vst [vmem:[#allocation2 + $0x88] sm:$0xff] %v489
        %512 = vst [vmem:[#allocation2 + $0x90] sm:$0xff] %v445
        %513 = vst [vmem:[#allocation2 + $0x98] sm:$0xff] %v492
        %v514 = vld [vmem:[#allocation6] sm:$0xff]
        %v515 = vld [vmem:[#allocation6 + $0x8] sm:$0xff]
        %v516 = vld [vmem:[#allocation6 + $0x10] sm:$0xff]
        %v517 = vld [vmem:[#allocation6 + $0x18] sm:$0xff]
        %v518 = vld [vmem:[#allocation6 + $0x20] sm:$0xff]
        %v519 = vld [vmem:[#allocation6 + $0x28] sm:$0xff]
        %v520 = vld [vmem:[#allocation6 + $0x30] sm:$0xff]
        %v521 = vld [vmem:[#allocation6 + $0x38] sm:$0xff]
        %v522 = vld [vmem:[#allocation6 + $0x40] sm:$0xff]
        %v523 = vld [vmem:[#allocation6 + $0x48] sm:$0xff]
        %v524 = vld [vmem:[#allocation6 + $0x50] sm:$0xff]
        %v525 = vld [vmem:[#allocation6 + $0x58] sm:$0xff]
        %v526 = vld [vmem:[#allocation6 + $0x60] sm:$0xff]
        %v527 = vld [vmem:[#allocation6 + $0x68] sm:$0xff]
        %v528 = vld [vmem:[#allocation6 + $0x70] sm:$0xff]
        %v529 = vld [vmem:[#allocation6 + $0x78] sm:$0xff]
        %v530 = vld [vmem:[#allocation6 + $0x80] sm:$0xff]
        %v531 = vld [vmem:[#allocation6 + $0x88] sm:$0xff]
        %v532 = vld [vmem:[#allocation6 + $0x90] sm:$0xff]
        %v533 = vld [vmem:[#allocation6 + $0x98] sm:$0xff]
        %v534 = vld [vmem:[#allocation6 + $0xa0] sm:$0xff]
        %v535 = vld [vmem:[#allocation6 + $0xa8] sm:$0xff]
        %v536 = vld [vmem:[#allocation6 + $0xb0] sm:$0xff]
        %v537 = vld [vmem:[#allocation6 + $0xb8] sm:$0xff]
        %v538 = vld [vmem:[#allocation6 + $0xc0] sm:$0xff]
        %v539 = vld [vmem:[#allocation6 + $0xc8] sm:$0xff]
        %v540 = vld [vmem:[#allocation6 + $0xd0] sm:$0xff]
        %v541 = vld [vmem:[#allocation6 + $0xd8] sm:$0xff]
        %v542 = vld [vmem:[#allocation6 + $0xe0] sm:$0xff]
        %v543 = vld [vmem:[#allocation6 + $0xe8] sm:$0xff]
        %v544 = vld [vmem:[#allocation6 + $0xf0] sm:$0xff]
        %v545 = vld [vmem:[#allocation6 + $0xf8] sm:$0xff]
        %v546 = vld [vmem:[#allocation6 + $0x100] sm:$0xff]
        %v547 = vld [vmem:[#allocation6 + $0x108] sm:$0xff]
        %v548 = vld [vmem:[#allocation6 + $0x110] sm:$0xff]
        %v549 = vld [vmem:[#allocation6 + $0x118] sm:$0xff]
        %v550 = vld [vmem:[#allocation6 + $0x120] sm:$0xff]
        %v551 = vld [vmem:[#allocation6 + $0x128] sm:$0xff]
        %v552 = vld [vmem:[#allocation6 + $0x130] sm:$0xff]
        %v553 = vld [vmem:[#allocation6 + $0x138] sm:$0xff]
        %v554 = vld [vmem:[#allocation6 + $0x140] sm:$0xff]
        %v555 = vld [vmem:[#allocation6 + $0x148] sm:$0xff]
        %v556 = vld [vmem:[#allocation6 + $0x150] sm:$0xff]
        %v557 = vld [vmem:[#allocation6 + $0x158] sm:$0xff]
        %v558 = vld [vmem:[#allocation6 + $0x160] sm:$0xff]
        %v559 = vld [vmem:[#allocation6 + $0x168] sm:$0xff]
        %v560 = vld [vmem:[#allocation6 + $0x170] sm:$0xff]
        %v561 = vld [vmem:[#allocation6 + $0x178] sm:$0xff]
        %v562 = vld [vmem:[#allocation6 + $0x180] sm:$0xff]
        %v563 = vld [vmem:[#allocation6 + $0x188] sm:$0xff]
        %v564 = vld [vmem:[#allocation6 + $0x190] sm:$0xff]
        %v565 = vld [vmem:[#allocation6 + $0x198] sm:$0xff]
        %v566 = vld [vmem:[#allocation6 + $0x1a0] sm:$0xff]
        %v567 = vld [vmem:[#allocation6 + $0x1a8] sm:$0xff]
        %v568 = vld [vmem:[#allocation6 + $0x1b0] sm:$0xff]
        %v569 = vld [vmem:[#allocation6 + $0x1b8] sm:$0xff]
        %v570 = vld [vmem:[#allocation6 + $0x1c0] sm:$0xff]
        %v571 = vld [vmem:[#allocation6 + $0x1c8] sm:$0xff]
        %v572 = vld [vmem:[#allocation6 + $0x1d0] sm:$0xff]
        %v573 = vld [vmem:[#allocation6 + $0x1d8] sm:$0xff]
        %v574 = vld [vmem:[#allocation6 + $0x1e0] sm:$0xff]
        %v575 = vld [vmem:[#allocation6 + $0x1e8] sm:$0xff]
        %v576 = vld [vmem:[#allocation6 + $0x1f0] sm:$0xff]
        %v577 = vld [vmem:[#allocation6 + $0x1f8] sm:$0xff]
        %v578 = vld [vmem:[#allocation6 + $0x200] sm:$0xff]
        %v579 = vld [vmem:[#allocation6 + $0x208] sm:$0xff]
        %v580 = vld [vmem:[#allocation6 + $0x210] sm:$0xff]
        %v581 = vld [vmem:[#allocation6 + $0x218] sm:$0xff]
        %v582 = vld [vmem:[#allocation6 + $0x220] sm:$0xff]
        %v583 = vld [vmem:[#allocation6 + $0x228] sm:$0xff]
        %v584 = vld [vmem:[#allocation6 + $0x230] sm:$0xff]
        %v585 = vld [vmem:[#allocation6 + $0x238] sm:$0xff]
        %v586 = vld [vmem:[#allocation6 + $0x240] sm:$0xff]
        %v587 = vld [vmem:[#allocation6 + $0x248] sm:$0xff]
        %v588 = vld [vmem:[#allocation6 + $0x250] sm:$0xff]
        %v589 = vld [vmem:[#allocation6 + $0x258] sm:$0xff]
        %v590 = vld [vmem:[#allocation6 + $0x260] sm:$0xff]
        %v591 = vld [vmem:[#allocation6 + $0x268] sm:$0xff]
        %v592 = vld [vmem:[#allocation6 + $0x270] sm:$0xff]
        %v593 = vld [vmem:[#allocation6 + $0x278] sm:$0xff]
        %v594 = vld [vmem:[#allocation6 + $0x280] sm:$0xff]
        %v595 = vld [vmem:[#allocation6 + $0x288] sm:$0xff]
        %v596 = vld [vmem:[#allocation6 + $0x290] sm:$0xff]
        %v597 = vld [vmem:[#allocation6 + $0x298] sm:$0xff]
        %v598 = vld [vmem:[#allocation6 + $0x2a0] sm:$0xff]
        %v599 = vld [vmem:[#allocation6 + $0x2a8] sm:$0xff]
        %v600 = vld [vmem:[#allocation6 + $0x2b0] sm:$0xff]
        %v601 = vld [vmem:[#allocation6 + $0x2b8] sm:$0xff]
        %v602 = vld [vmem:[#allocation6 + $0x2c0] sm:$0xff]
        %v603 = vld [vmem:[#allocation6 + $0x2c8] sm:$0xff]
        %v604 = vld [vmem:[#allocation6 + $0x2d0] sm:$0xff]
        %v605 = vld [vmem:[#allocation6 + $0x2d8] sm:$0xff]
        %v606 = vld [vmem:[#allocation6 + $0x2e0] sm:$0xff]
        %v607 = vld [vmem:[#allocation6 + $0x2e8] sm:$0xff]
        %v608 = vld [vmem:[#allocation6 + $0x2f0] sm:$0xff]
        %v609 = vld [vmem:[#allocation6 + $0x2f8] sm:$0xff]
        %v610 = vld [vmem:[#allocation6 + $0x300] sm:$0xff]
        %v611 = vld [vmem:[#allocation6 + $0x308] sm:$0xff]
        %v612 = vld [vmem:[#allocation6 + $0x310] sm:$0xff]
        %v613 = vld [vmem:[#allocation6 + $0x318] sm:$0xff]
        %v614 = vld [vmem:[#allocation6 + $0x320] sm:$0xff]
        %v615 = vld [vmem:[#allocation6 + $0x328] sm:$0xff]
        %v616 = vld [vmem:[#allocation6 + $0x330] sm:$0xff]
        %v617 = vld [vmem:[#allocation6 + $0x338] sm:$0xff]
        %v618 = vld [vmem:[#allocation6 + $0x340] sm:$0xff]
        %v619 = vld [vmem:[#allocation6 + $0x348] sm:$0xff]
        %v620 = vld [vmem:[#allocation6 + $0x350] sm:$0xff]
        %v621 = vld [vmem:[#allocation6 + $0x358] sm:$0xff]
        %v622 = vld [vmem:[#allocation6 + $0x360] sm:$0xff]
        %v623 = vld [vmem:[#allocation6 + $0x368] sm:$0xff]
        %v624 = vld [vmem:[#allocation6 + $0x370] sm:$0xff]
        %v625 = vld [vmem:[#allocation6 + $0x378] sm:$0xff]
        %v626 = vld [vmem:[#allocation6 + $0x380] sm:$0xff]
        %v627 = vld [vmem:[#allocation6 + $0x388] sm:$0xff]
        %v628 = vld [vmem:[#allocation6 + $0x390] sm:$0xff]
        %v629 = vld [vmem:[#allocation6 + $0x398] sm:$0xff]
        %v630 = vld [vmem:[#allocation6 + $0x3a0] sm:$0xff]
        %v631 = vld [vmem:[#allocation6 + $0x3a8] sm:$0xff]
        %v632 = vld [vmem:[#allocation6 + $0x3b0] sm:$0xff]
        %v633 = vld [vmem:[#allocation6 + $0x3b8] sm:$0xff]
        %v634 = vld [vmem:[#allocation6 + $0x3c0] sm:$0xff]
        %v635 = vld [vmem:[#allocation6 + $0x3c8] sm:$0xff]
        %v636 = vld [vmem:[#allocation6 + $0x3d0] sm:$0xff]
        %v637 = vld [vmem:[#allocation6 + $0x3d8] sm:$0xff]
        %v638 = vld [vmem:[#allocation6 + $0x3e0] sm:$0xff]
        %v639 = vld [vmem:[#allocation6 + $0x3e8] sm:$0xff]
        %v640 = vld [vmem:[#allocation6 + $0x3f0] sm:$0xff]
        %v641 = vld [vmem:[#allocation6 + $0x3f8] sm:$0xff]
        %642 = vst [vmem:[#allocation4 + $0x20] sm:$0xff] %v514
        %643 = vst [vmem:[#allocation4 + $0x28] sm:$0xff] %v515
        %644 = vst [vmem:[#allocation4 + $0x30] sm:$0xff] %v516
        %645 = vst [vmem:[#allocation4 + $0x38] sm:$0xff] %v517
        %646 = vst [vmem:[#allocation4 + $0x40] sm:$0xff] %v518
        %647 = vst [vmem:[#allocation4 + $0x48] sm:$0xff] %v519
        %648 = vst [vmem:[#allocation4 + $0x50] sm:$0xff] %v520
        %649 = vst [vmem:[#allocation4 + $0x58] sm:$0xff] %v521
        %650 = vst [vmem:[#allocation4 + $0x60] sm:$0xff] %v522
        %651 = vst [vmem:[#allocation4 + $0x68] sm:$0xff] %v523
        %652 = vst [vmem:[#allocation4 + $0x70] sm:$0xff] %v524
        %653 = vst [vmem:[#allocation4 + $0x78] sm:$0xff] %v525
        %654 = vst [vmem:[#allocation4 + $0x80] sm:$0xff] %v526
        %655 = vst [vmem:[#allocation4 + $0x88] sm:$0xff] %v527
        %656 = vst [vmem:[#allocation4 + $0x90] sm:$0xff] %v528
        %657 = vst [vmem:[#allocation4 + $0x98] sm:$0xff] %v529
        %658 = vst [vmem:[#allocation4 + $0xa0] sm:$0xff] %v530
        %659 = vst [vmem:[#allocation4 + $0xa8] sm:$0xff] %v531
        %660 = vst [vmem:[#allocation4 + $0xb0] sm:$0xff] %v532
        %661 = vst [vmem:[#allocation4 + $0xb8] sm:$0xff] %v533
        %662 = vst [vmem:[#allocation4 + $0xc0] sm:$0xff] %v534
        %663 = vst [vmem:[#allocation4 + $0xc8] sm:$0xff] %v535
        %664 = vst [vmem:[#allocation4 + $0xd0] sm:$0xff] %v536
        %665 = vst [vmem:[#allocation4 + $0xd8] sm:$0xff] %v537
        %666 = vst [vmem:[#allocation4 + $0xe0] sm:$0xff] %v538
        %667 = vst [vmem:[#allocation4 + $0xe8] sm:$0xff] %v539
        %668 = vst [vmem:[#allocation4 + $0xf0] sm:$0xff] %v540
        %669 = vst [vmem:[#allocation4 + $0xf8] sm:$0xff] %v541
        %670 = vst [vmem:[#allocation4 + $0x100] sm:$0xff] %v542
        %671 = vst [vmem:[#allocation4 + $0x108] sm:$0xff] %v543
        %672 = vst [vmem:[#allocation4 + $0x110] sm:$0xff] %v544
        %673 = vst [vmem:[#allocation4 + $0x118] sm:$0xff] %v545
        %674 = vst [vmem:[#allocation4 + $0x120] sm:$0xff] %v546
        %675 = vst [vmem:[#allocation4 + $0x128] sm:$0xff] %v547
        %676 = vst [vmem:[#allocation4 + $0x130] sm:$0xff] %v548
        %677 = vst [vmem:[#allocation4 + $0x138] sm:$0xff] %v549
        %678 = vst [vmem:[#allocation4 + $0x140] sm:$0xff] %v550
        %679 = vst [vmem:[#allocation4 + $0x148] sm:$0xff] %v551
        %680 = vst [vmem:[#allocation4 + $0x150] sm:$0xff] %v552
        %681 = vst [vmem:[#allocation4 + $0x158] sm:$0xff] %v553
        %682 = vst [vmem:[#allocation4 + $0x160] sm:$0xff] %v554
        %683 = vst [vmem:[#allocation4 + $0x168] sm:$0xff] %v555
        %684 = vst [vmem:[#allocation4 + $0x170] sm:$0xff] %v556
        %685 = vst [vmem:[#allocation4 + $0x178] sm:$0xff] %v557
        %686 = vst [vmem:[#allocation4 + $0x180] sm:$0xff] %v558
        %687 = vst [vmem:[#allocation4 + $0x188] sm:$0xff] %v559
        %688 = vst [vmem:[#allocation4 + $0x190] sm:$0xff] %v560
        %689 = vst [vmem:[#allocation4 + $0x198] sm:$0xff] %v561
        %690 = vst [vmem:[#allocation4 + $0x1a0] sm:$0xff] %v562
        %691 = vst [vmem:[#allocation4 + $0x1a8] sm:$0xff] %v563
        %692 = vst [vmem:[#allocation4 + $0x1b0] sm:$0xff] %v564
        %693 = vst [vmem:[#allocation4 + $0x1b8] sm:$0xff] %v565
        %694 = vst [vmem:[#allocation4 + $0x1c0] sm:$0xff] %v566
        %695 = vst [vmem:[#allocation4 + $0x1c8] sm:$0xff] %v567
        %696 = vst [vmem:[#allocation4 + $0x1d0] sm:$0xff] %v568
        %697 = vst [vmem:[#allocation4 + $0x1d8] sm:$0xff] %v569
        %698 = vst [vmem:[#allocation4 + $0x1e0] sm:$0xff] %v570
        %699 = vst [vmem:[#allocation4 + $0x1e8] sm:$0xff] %v571
        %700 = vst [vmem:[#allocation4 + $0x1f0] sm:$0xff] %v572
        %701 = vst [vmem:[#allocation4 + $0x1f8] sm:$0xff] %v573
        %702 = vst [vmem:[#allocation4 + $0x200] sm:$0xff] %v574
        %703 = vst [vmem:[#allocation4 + $0x208] sm:$0xff] %v575
        %704 = vst [vmem:[#allocation4 + $0x210] sm:$0xff] %v576
        %705 = vst [vmem:[#allocation4 + $0x218] sm:$0xff] %v577
        %706 = vst [vmem:[#allocation4 + $0x220] sm:$0xff] %v578
        %707 = vst [vmem:[#allocation4 + $0x228] sm:$0xff] %v579
        %708 = vst [vmem:[#allocation4 + $0x230] sm:$0xff] %v580
        %709 = vst [vmem:[#allocation4 + $0x238] sm:$0xff] %v581
        %710 = vst [vmem:[#allocation4 + $0x240] sm:$0xff] %v582
        %711 = vst [vmem:[#allocation4 + $0x248] sm:$0xff] %v583
        %712 = vst [vmem:[#allocation4 + $0x250] sm:$0xff] %v584
        %713 = vst [vmem:[#allocation4 + $0x258] sm:$0xff] %v585
        %714 = vst [vmem:[#allocation4 + $0x260] sm:$0xff] %v586
        %715 = vst [vmem:[#allocation4 + $0x268] sm:$0xff] %v587
        %716 = vst [vmem:[#allocation4 + $0x270] sm:$0xff] %v588
        %717 = vst [vmem:[#allocation4 + $0x278] sm:$0xff] %v589
        %718 = vst [vmem:[#allocation4 + $0x280] sm:$0xff] %v590
        %719 = vst [vmem:[#allocation4 + $0x288] sm:$0xff] %v591
        %720 = vst [vmem:[#allocation4 + $0x290] sm:$0xff] %v592
        %721 = vst [vmem:[#allocation4 + $0x298] sm:$0xff] %v593
        %722 = vst [vmem:[#allocation4 + $0x2a0] sm:$0xff] %v594
        %723 = vst [vmem:[#allocation4 + $0x2a8] sm:$0xff] %v595
        %724 = vst [vmem:[#allocation4 + $0x2b0] sm:$0xff] %v596
        %725 = vst [vmem:[#allocation4 + $0x2b8] sm:$0xff] %v597
        %726 = vst [vmem:[#allocation4 + $0x2c0] sm:$0xff] %v598
        %727 = vst [vmem:[#allocation4 + $0x2c8] sm:$0xff] %v599
        %728 = vst [vmem:[#allocation4 + $0x2d0] sm:$0xff] %v600
        %729 = vst [vmem:[#allocation4 + $0x2d8] sm:$0xff] %v601
        %730 = vst [vmem:[#allocation4 + $0x2e0] sm:$0xff] %v602
        %731 = vst [vmem:[#allocation4 + $0x2e8] sm:$0xff] %v603
        %732 = vst [vmem:[#allocation4 + $0x2f0] sm:$0xff] %v604
        %733 = vst [vmem:[#allocation4 + $0x2f8] sm:$0xff] %v605
        %734 = vst [vmem:[#allocation4 + $0x300] sm:$0xff] %v606
        %735 = vst [vmem:[#allocation4 + $0x308] sm:$0xff] %v607
        %736 = vst [vmem:[#allocation4 + $0x310] sm:$0xff] %v608
        %737 = vst [vmem:[#allocation4 + $0x318] sm:$0xff] %v609
        %738 = vst [vmem:[#allocation4 + $0x320] sm:$0xff] %v610
        %739 = vst [vmem:[#allocation4 + $0x328] sm:$0xff] %v611
        %740 = vst [vmem:[#allocation4 + $0x330] sm:$0xff] %v612
        %741 = vst [vmem:[#allocation4 + $0x338] sm:$0xff] %v613
        %742 = vst [vmem:[#allocation4 + $0x340] sm:$0xff] %v614
        %743 = vst [vmem:[#allocation4 + $0x348] sm:$0xff] %v615
        %744 = vst [vmem:[#allocation4 + $0x350] sm:$0xff] %v616
        %745 = vst [vmem:[#allocation4 + $0x358] sm:$0xff] %v617
        %746 = vst [vmem:[#allocation4 + $0x360] sm:$0xff] %v618
        %747 = vst [vmem:[#allocation4 + $0x368] sm:$0xff] %v619
        %748 = vst [vmem:[#allocation4 + $0x370] sm:$0xff] %v620
        %749 = vst [vmem:[#allocation4 + $0x378] sm:$0xff] %v621
        %750 = vst [vmem:[#allocation4 + $0x380] sm:$0xff] %v622
        %751 = vst [vmem:[#allocation4 + $0x388] sm:$0xff] %v623
        %752 = vst [vmem:[#allocation4 + $0x390] sm:$0xff] %v624
        %753 = vst [vmem:[#allocation4 + $0x398] sm:$0xff] %v625
        %754 = vst [vmem:[#allocation4 + $0x3a0] sm:$0xff] %v626
        %755 = vst [vmem:[#allocation4 + $0x3a8] sm:$0xff] %v627
        %756 = vst [vmem:[#allocation4 + $0x3b0] sm:$0xff] %v628
        %757 = vst [vmem:[#allocation4 + $0x3b8] sm:$0xff] %v629
        %758 = vst [vmem:[#allocation4 + $0x3c0] sm:$0xff] %v630
        %759 = vst [vmem:[#allocation4 + $0x3c8] sm:$0xff] %v631
        %760 = vst [vmem:[#allocation4 + $0x3d0] sm:$0xff] %v632
        %761 = vst [vmem:[#allocation4 + $0x3d8] sm:$0xff] %v633
        %762 = vst [vmem:[#allocation4 + $0x3e0] sm:$0xff] %v634
        %763 = vst [vmem:[#allocation4 + $0x3e8] sm:$0xff] %v635
        %764 = vst [vmem:[#allocation4 + $0x3f0] sm:$0xff] %v636
        %765 = vst [vmem:[#allocation4 + $0x3f8] sm:$0xff] %v637
        %766 = vst [vmem:[#allocation4 + $0x400] sm:$0xff] %v638
        %767 = vst [vmem:[#allocation4 + $0x408] sm:$0xff] %v639
        %768 = vst [vmem:[#allocation4 + $0x410] sm:$0xff] %v640
        %769 = vst [vmem:[#allocation4 + $0x418] sm:$0xff] %v641
        %v770 = vld [vmem:[%s5] sm:$0xff]
        %v771 = vld [vmem:[%s5 + $0x8] sm:$0xff]
        %v772 = vld [vmem:[%s5 + $0x10] sm:$0xff]
        %v773 = vld [vmem:[%s5 + $0x18] sm:$0xff]
        %v774 = vld [vmem:[%s5 + $0x20] sm:$0xff]
        %v775 = vld [vmem:[%s5 + $0x28] sm:$0xff]
        %v776 = vld [vmem:[%s5 + $0x30] sm:$0xff]
        %v777 = vld [vmem:[%s5 + $0x38] sm:$0xff]
        loop: start=0, step=1, limit=2
        $region53: #{tpu_custom_call.1} parent=47 // loop_pre_header
          _
        $region54: #{tpu_custom_call.1} parent=47 // loop_header
          %s779 = sphi 0, %s783
          %p780 = scmp.ge.s32.totalorder %s779, 2
        $region55: #{tpu_custom_call.1} parent=47 // loop_header_branch
          %782 = sbr.rel (%p780) target = $region59
        $region56: #{tpu_custom_call.1} parent=47 // loop_body
          %s784 = smul.u32 %s779, 16
          %s785 = sadd.s32 %s784, 32
          %s786 = smul.u32 %s779, 8
          %s787 = sadd.s32 %s786, 64
          %s788 = sshra.s32 %s784, 3
          %s789 = sand.u32 %s784, 7
          %s790 = smul.u32 %s788, 2
          %s791 = smul.addr %s790, 8
          %s792 = scalar_lea.vmem [#allocation2], %s791
          %v793 = vld [vmem:[%s792] sm:$0xff]
          %v794 = vld [vmem:[%s792 + $0x8] sm:$0xff]
          %v795 = vld [vmem:[%s792 + $0x10] sm:$0xff]
          %v796 = vld [vmem:[%s792 + $0x18] sm:$0xff]
          %s797 = sshra.s32 %s785, 3
          %s798 = sand.u32 %s785, 7
          %s799 = smul.u32 %s797, 2
          %s800 = smul.addr %s799, 8
          %s801 = scalar_lea.vmem [#allocation2], %s800
          %v802 = vld [vmem:[%s801] sm:$0xff]
          %v803 = vld [vmem:[%s801 + $0x8] sm:$0xff]
          %v804 = vld [vmem:[%s801 + $0x10] sm:$0xff]
          %v805 = vld [vmem:[%s801 + $0x18] sm:$0xff]
          %s806 = sshra.s32 %s787, 3
          %s807 = sand.u32 %s787, 7
          %s808 = smul.u32 %s806, 2
          %s809 = smul.addr %s808, 8
          %s810 = scalar_lea.vmem [#allocation2], %s809
          %v811 = vld [vmem:[%s810] sm:$0xff]
          %v812 = vld [vmem:[%s810 + $0x8] sm:$0xff]
          %813 = vst [vmem:[#allocation3] sm:$0xff] %v793
          %814 = vst [vmem:[#allocation3 + $0x8] sm:$0xff] %v794
          %815 = vst [vmem:[#allocation3 + $0x10] sm:$0xff] %v795
          %816 = vst [vmem:[#allocation3 + $0x18] sm:$0xff] %v796
          %v825 = vrot.slane %v771, 7
          %v826 = vrot.slane %v773, 7
          %v827 = vrot.slane %v775, 7
          %v828 = vrot.slane %v777, 7
          %vm829 = vcmask 1040384
          %v830 = vsel %vm829, %v770, %v825
          %vm831 = vcmask 1041409
          %v832 = vsel %vm831, %v770, %v825
          %v833 = vrot.slane %v832, 1
          %vm834 = vcmask 1042434
          %v835 = vsel %vm834, %v770, %v825
          %v836 = vrot.slane %v835, 2
          %vm837 = vcmask 1043459
          %v838 = vsel %vm837, %v770, %v825
          %v839 = vrot.slane %v838, 3
          %vm840 = vcmask 1044484
          %v841 = vsel %vm840, %v770, %v825
          %v842 = vrot.slane %v841, 4
          %vm843 = vcmask 1045509
          %v844 = vsel %vm843, %v770, %v825
          %v845 = vrot.slane %v844, 5
          %vm846 = vcmask 1046534
          %v847 = vsel %vm846, %v770, %v825
          %v848 = vrot.slane %v847, 6
          %vm849 = vcmask 1046528
          %v850 = vsel %vm849, %v825, %v770
          %v851 = vrot.slane %v850, 7
          %v852 = vsel %vm829, %v772, %v826
          %v853 = vsel %vm831, %v772, %v826
          %v854 = vrot.slane %v853, 1
          %v855 = vsel %vm834, %v772, %v826
          %v856 = vrot.slane %v855, 2
          %v857 = vsel %vm837, %v772, %v826
          %v858 = vrot.slane %v857, 3
          %v859 = vsel %vm840, %v772, %v826
          %v860 = vrot.slane %v859, 4
          %v861 = vsel %vm843, %v772, %v826
          %v862 = vrot.slane %v861, 5
          %v863 = vsel %vm846, %v772, %v826
          %v864 = vrot.slane %v863, 6
          %v865 = vsel %vm849, %v826, %v772
          %v866 = vrot.slane %v865, 7
          %v867 = vsel %vm829, %v774, %v827
          %v868 = vsel %vm831, %v774, %v827
          %v869 = vrot.slane %v868, 1
          %v870 = vsel %vm834, %v774, %v827
          %v871 = vrot.slane %v870, 2
          %v872 = vsel %vm837, %v774, %v827
          %v873 = vrot.slane %v872, 3
          %v874 = vsel %vm840, %v774, %v827
          %v875 = vrot.slane %v874, 4
          %v876 = vsel %vm843, %v774, %v827
          %v877 = vrot.slane %v876, 5
          %v878 = vsel %vm846, %v774, %v827
          %v879 = vrot.slane %v878, 6
          %v880 = vsel %vm849, %v827, %v774
          %v881 = vrot.slane %v880, 7
          %v882 = vsel %vm829, %v776, %v828
          %v883 = vsel %vm831, %v776, %v828
          %v884 = vrot.slane %v883, 1
          %v885 = vsel %vm834, %v776, %v828
          %v886 = vrot.slane %v885, 2
          %v887 = vsel %vm837, %v776, %v828
          %v888 = vrot.slane %v887, 3
          %v889 = vsel %vm840, %v776, %v828
          %v890 = vrot.slane %v889, 4
          %v891 = vsel %vm843, %v776, %v828
          %v892 = vrot.slane %v891, 5
          %v893 = vsel %vm846, %v776, %v828
          %v894 = vrot.slane %v893, 6
          %v895 = vsel %vm849, %v828, %v776
          %v896 = vrot.slane %v895, 7
          %v897 = vperm.slane %v830, 0
          %v898 = vperm.slane %v830, 1
          %v899 = vperm.slane %v833, 0
          %v900 = vperm.slane %v833, 1
          %v901 = vperm.slane %v836, 0
          %v902 = vperm.slane %v836, 1
          %v903 = vperm.slane %v839, 0
          %v904 = vperm.slane %v839, 1
          %v905 = vperm.slane %v842, 0
          %v906 = vperm.slane %v842, 1
          %v907 = vperm.slane %v845, 0
          %v908 = vperm.slane %v845, 1
          %v909 = vperm.slane %v848, 0
          %v910 = vperm.slane %v848, 1
          %v911 = vperm.slane %v851, 0
          %v912 = vperm.slane %v851, 1
          %v913 = vperm.slane %v852, 0
          %v914 = vperm.slane %v852, 1
          %v915 = vperm.slane %v854, 0
          %v916 = vperm.slane %v854, 1
          %v917 = vperm.slane %v856, 0
          %v918 = vperm.slane %v856, 1
          %v919 = vperm.slane %v858, 0
          %v920 = vperm.slane %v858, 1
          %v921 = vperm.slane %v860, 0
          %v922 = vperm.slane %v860, 1
          %v923 = vperm.slane %v862, 0
          %v924 = vperm.slane %v862, 1
          %v925 = vperm.slane %v864, 0
          %v926 = vperm.slane %v864, 1
          %v927 = vperm.slane %v866, 0
          %v928 = vperm.slane %v866, 1
          %v929 = vperm.slane %v867, 0
          %v930 = vperm.slane %v867, 1
          %v931 = vperm.slane %v869, 0
          %v932 = vperm.slane %v869, 1
          %v933 = vperm.slane %v871, 0
          %v934 = vperm.slane %v871, 1
          %v935 = vperm.slane %v873, 0
          %v936 = vperm.slane %v873, 1
          %v937 = vperm.slane %v875, 0
          %v938 = vperm.slane %v875, 1
          %v939 = vperm.slane %v877, 0
          %v940 = vperm.slane %v877, 1
          %v941 = vperm.slane %v879, 0
          %v942 = vperm.slane %v879, 1
          %v943 = vperm.slane %v881, 0
          %v944 = vperm.slane %v881, 1
          %v945 = vperm.slane %v882, 0
          %v946 = vperm.slane %v882, 1
          %v947 = vperm.slane %v884, 0
          %v948 = vperm.slane %v884, 1
          %v949 = vperm.slane %v886, 0
          %v950 = vperm.slane %v886, 1
          %v951 = vperm.slane %v888, 0
          %v952 = vperm.slane %v888, 1
          %v953 = vperm.slane %v890, 0
          %v954 = vperm.slane %v890, 1
          %v955 = vperm.slane %v892, 0
          %v956 = vperm.slane %v892, 1
          %v957 = vperm.slane %v894, 0
          %v958 = vperm.slane %v894, 1
          %v959 = vperm.slane %v896, 0
          %v960 = vperm.slane %v896, 1
          %v1025 = vmul.f32 %v897, %v793
          %v1026 = vmul.f32 %v898, %v794
          %v1027 = vmul.f32 %v897, %v795
          %v1028 = vmul.f32 %v898, %v796
          %v1029 = vmul.f32 %v899, %v793
          %v1030 = vmul.f32 %v900, %v794
          %v1031 = vmul.f32 %v899, %v795
          %v1032 = vmul.f32 %v900, %v796
          %v1033 = vmul.f32 %v901, %v793
          %v1034 = vmul.f32 %v902, %v794
          %v1035 = vmul.f32 %v901, %v795
          %v1036 = vmul.f32 %v902, %v796
          %v1037 = vmul.f32 %v903, %v793
          %v1038 = vmul.f32 %v904, %v794
          %v1039 = vmul.f32 %v903, %v795
          %v1040 = vmul.f32 %v904, %v796
          %v1041 = vmul.f32 %v905, %v793
          %v1042 = vmul.f32 %v906, %v794
          %v1043 = vmul.f32 %v905, %v795
          %v1044 = vmul.f32 %v906, %v796
          %v1045 = vmul.f32 %v907, %v793
          %v1046 = vmul.f32 %v908, %v794
          %v1047 = vmul.f32 %v907, %v795
          %v1048 = vmul.f32 %v908, %v796
          %v1049 = vmul.f32 %v909, %v793
          %v1050 = vmul.f32 %v910, %v794
          %v1051 = vmul.f32 %v909, %v795
          %v1052 = vmul.f32 %v910, %v796
          %v1053 = vmul.f32 %v911, %v793
          %v1054 = vmul.f32 %v912, %v794
          %v1055 = vmul.f32 %v911, %v795
          %v1056 = vmul.f32 %v912, %v796
          %v1057 = vmul.f32 %v913, %v793
          %v1058 = vmul.f32 %v914, %v794
          %v1059 = vmul.f32 %v913, %v795
          %v1060 = vmul.f32 %v914, %v796
          %v1061 = vmul.f32 %v915, %v793
          %v1062 = vmul.f32 %v916, %v794
          %v1063 = vmul.f32 %v915, %v795
          %v1064 = vmul.f32 %v916, %v796
          %v1065 = vmul.f32 %v917, %v793
          %v1066 = vmul.f32 %v918, %v794
          %v1067 = vmul.f32 %v917, %v795
          %v1068 = vmul.f32 %v918, %v796
          %v1069 = vmul.f32 %v919, %v793
          %v1070 = vmul.f32 %v920, %v794
          %v1071 = vmul.f32 %v919, %v795
          %v1072 = vmul.f32 %v920, %v796
          %v1073 = vmul.f32 %v921, %v793
          %v1074 = vmul.f32 %v922, %v794
          %v1075 = vmul.f32 %v921, %v795
          %v1076 = vmul.f32 %v922, %v796
          %v1077 = vmul.f32 %v923, %v793
          %v1078 = vmul.f32 %v924, %v794
          %v1079 = vmul.f32 %v923, %v795
          %v1080 = vmul.f32 %v924, %v796
          %v1081 = vmul.f32 %v925, %v793
          %v1082 = vmul.f32 %v926, %v794
          %v1083 = vmul.f32 %v925, %v795
          %v1084 = vmul.f32 %v926, %v796
          %v1085 = vmul.f32 %v927, %v793
          %v1086 = vmul.f32 %v928, %v794
          %v1087 = vmul.f32 %v927, %v795
          %v1088 = vmul.f32 %v928, %v796
          %v1089 = vmul.f32 %v929, %v793
          %v1090 = vmul.f32 %v930, %v794
          %v1091 = vmul.f32 %v929, %v795
          %v1092 = vmul.f32 %v930, %v796
          %v1093 = vmul.f32 %v931, %v793
          %v1094 = vmul.f32 %v932, %v794
          %v1095 = vmul.f32 %v931, %v795
          %v1096 = vmul.f32 %v932, %v796
          %v1097 = vmul.f32 %v933, %v793
          %v1098 = vmul.f32 %v934, %v794
          %v1099 = vmul.f32 %v933, %v795
          %v1100 = vmul.f32 %v934, %v796
          %v1101 = vmul.f32 %v935, %v793
          %v1102 = vmul.f32 %v936, %v794
          %v1103 = vmul.f32 %v935, %v795
          %v1104 = vmul.f32 %v936, %v796
          %v1105 = vmul.f32 %v937, %v793
          %v1106 = vmul.f32 %v938, %v794
          %v1107 = vmul.f32 %v937, %v795
          %v1108 = vmul.f32 %v938, %v796
          %v1109 = vmul.f32 %v939, %v793
          %v1110 = vmul.f32 %v940, %v794
          %v1111 = vmul.f32 %v939, %v795
          %v1112 = vmul.f32 %v940, %v796
          %v1113 = vmul.f32 %v941, %v793
          %v1114 = vmul.f32 %v942, %v794
          %v1115 = vmul.f32 %v941, %v795
          %v1116 = vmul.f32 %v942, %v796
          %v1117 = vmul.f32 %v943, %v793
          %v1118 = vmul.f32 %v944, %v794
          %v1119 = vmul.f32 %v943, %v795
          %v1120 = vmul.f32 %v944, %v796
          %v1121 = vmul.f32 %v945, %v793
          %v1122 = vmul.f32 %v946, %v794
          %v1123 = vmul.f32 %v945, %v795
          %v1124 = vmul.f32 %v946, %v796
          %v1125 = vmul.f32 %v947, %v793
          %v1126 = vmul.f32 %v948, %v794
          %v1127 = vmul.f32 %v947, %v795
          %v1128 = vmul.f32 %v948, %v796
          %v1129 = vmul.f32 %v949, %v793
          %v1130 = vmul.f32 %v950, %v794
          %v1131 = vmul.f32 %v949, %v795
          %v1132 = vmul.f32 %v950, %v796
          %v1133 = vmul.f32 %v951, %v793
          %v1134 = vmul.f32 %v952, %v794
          %v1135 = vmul.f32 %v951, %v795
          %v1136 = vmul.f32 %v952, %v796
          %v1137 = vmul.f32 %v953, %v793
          %v1138 = vmul.f32 %v954, %v794
          %v1139 = vmul.f32 %v953, %v795
          %v1140 = vmul.f32 %v954, %v796
          %v1141 = vmul.f32 %v955, %v793
          %v1142 = vmul.f32 %v956, %v794
          %v1143 = vmul.f32 %v955, %v795
          %v1144 = vmul.f32 %v956, %v796
          %v1145 = vmul.f32 %v957, %v793
          %v1146 = vmul.f32 %v958, %v794
          %v1147 = vmul.f32 %v957, %v795
          %v1148 = vmul.f32 %v958, %v796
          %v1149 = vmul.f32 %v959, %v793
          %v1150 = vmul.f32 %v960, %v794
          %v1151 = vmul.f32 %v959, %v795
          %v1152 = vmul.f32 %v960, %v796
          %1153 = vst [vmem:[#allocation3 + $0x20] sm:$0xff] %v1025
          %1154 = vst [vmem:[#allocation3 + $0x28] sm:$0xff] %v1026
          %1155 = vst [vmem:[#allocation3 + $0x30] sm:$0xff] %v1027
          %1156 = vst [vmem:[#allocation3 + $0x38] sm:$0xff] %v1028
          %1157 = vst [vmem:[#allocation3 + $0x40] sm:$0xff] %v1029
          %1158 = vst [vmem:[#allocation3 + $0x48] sm:$0xff] %v1030
          %1159 = vst [vmem:[#allocation3 + $0x50] sm:$0xff] %v1031
          %1160 = vst [vmem:[#allocation3 + $0x58] sm:$0xff] %v1032
          %1161 = vst [vmem:[#allocation3 + $0x60] sm:$0xff] %v1033
          %1162 = vst [vmem:[#allocation3 + $0x68] sm:$0xff] %v1034
          %1163 = vst [vmem:[#allocation3 + $0x70] sm:$0xff] %v1035
          %1164 = vst [vmem:[#allocation3 + $0x78] sm:$0xff] %v1036
          %1165 = vst [vmem:[#allocation3 + $0x80] sm:$0xff] %v1037
          %1166 = vst [vmem:[#allocation3 + $0x88] sm:$0xff] %v1038
          %1167 = vst [vmem:[#allocation3 + $0x90] sm:$0xff] %v1039
          %1168 = vst [vmem:[#allocation3 + $0x98] sm:$0xff] %v1040
          %1169 = vst [vmem:[#allocation3 + $0xa0] sm:$0xff] %v1041
          %1170 = vst [vmem:[#allocation3 + $0xa8] sm:$0xff] %v1042
          %1171 = vst [vmem:[#allocation3 + $0xb0] sm:$0xff] %v1043
          %1172 = vst [vmem:[#allocation3 + $0xb8] sm:$0xff] %v1044
          %1173 = vst [vmem:[#allocation3 + $0xc0] sm:$0xff] %v1045
          %1174 = vst [vmem:[#allocation3 + $0xc8] sm:$0xff] %v1046
          %1175 = vst [vmem:[#allocation3 + $0xd0] sm:$0xff] %v1047
          %1176 = vst [vmem:[#allocation3 + $0xd8] sm:$0xff] %v1048
          %1177 = vst [vmem:[#allocation3 + $0xe0] sm:$0xff] %v1049
          %1178 = vst [vmem:[#allocation3 + $0xe8] sm:$0xff] %v1050
          %1179 = vst [vmem:[#allocation3 + $0xf0] sm:$0xff] %v1051
          %1180 = vst [vmem:[#allocation3 + $0xf8] sm:$0xff] %v1052
          %1181 = vst [vmem:[#allocation3 + $0x100] sm:$0xff] %v1053
          %1182 = vst [vmem:[#allocation3 + $0x108] sm:$0xff] %v1054
          %1183 = vst [vmem:[#allocation3 + $0x110] sm:$0xff] %v1055
          %1184 = vst [vmem:[#allocation3 + $0x118] sm:$0xff] %v1056
          %1185 = vst [vmem:[#allocation3 + $0x120] sm:$0xff] %v1057
          %1186 = vst [vmem:[#allocation3 + $0x128] sm:$0xff] %v1058
          %1187 = vst [vmem:[#allocation3 + $0x130] sm:$0xff] %v1059
          %1188 = vst [vmem:[#allocation3 + $0x138] sm:$0xff] %v1060
          %1189 = vst [vmem:[#allocation3 + $0x140] sm:$0xff] %v1061
          %1190 = vst [vmem:[#allocation3 + $0x148] sm:$0xff] %v1062
          %1191 = vst [vmem:[#allocation3 + $0x150] sm:$0xff] %v1063
          %1192 = vst [vmem:[#allocation3 + $0x158] sm:$0xff] %v1064
          %1193 = vst [vmem:[#allocation3 + $0x160] sm:$0xff] %v1065
          %1194 = vst [vmem:[#allocation3 + $0x168] sm:$0xff] %v1066
          %1195 = vst [vmem:[#allocation3 + $0x170] sm:$0xff] %v1067
          %1196 = vst [vmem:[#allocation3 + $0x178] sm:$0xff] %v1068
          %1197 = vst [vmem:[#allocation3 + $0x180] sm:$0xff] %v1069
          %1198 = vst [vmem:[#allocation3 + $0x188] sm:$0xff] %v1070
          %1199 = vst [vmem:[#allocation3 + $0x190] sm:$0xff] %v1071
          %1200 = vst [vmem:[#allocation3 + $0x198] sm:$0xff] %v1072
          %1201 = vst [vmem:[#allocation3 + $0x1a0] sm:$0xff] %v1073
          %1202 = vst [vmem:[#allocation3 + $0x1a8] sm:$0xff] %v1074
          %1203 = vst [vmem:[#allocation3 + $0x1b0] sm:$0xff] %v1075
          %1204 = vst [vmem:[#allocation3 + $0x1b8] sm:$0xff] %v1076
          %1205 = vst [vmem:[#allocation3 + $0x1c0] sm:$0xff] %v1077
          %1206 = vst [vmem:[#allocation3 + $0x1c8] sm:$0xff] %v1078
          %1207 = vst [vmem:[#allocation3 + $0x1d0] sm:$0xff] %v1079
          %1208 = vst [vmem:[#allocation3 + $0x1d8] sm:$0xff] %v1080
          %1209 = vst [vmem:[#allocation3 + $0x1e0] sm:$0xff] %v1081
          %1210 = vst [vmem:[#allocation3 + $0x1e8] sm:$0xff] %v1082
          %1211 = vst [vmem:[#allocation3 + $0x1f0] sm:$0xff] %v1083
          %1212 = vst [vmem:[#allocation3 + $0x1f8] sm:$0xff] %v1084
          %1213 = vst [vmem:[#allocation3 + $0x200] sm:$0xff] %v1085
          %1214 = vst [vmem:[#allocation3 + $0x208] sm:$0xff] %v1086
          %1215 = vst [vmem:[#allocation3 + $0x210] sm:$0xff] %v1087
          %1216 = vst [vmem:[#allocation3 + $0x218] sm:$0xff] %v1088
          %1217 = vst [vmem:[#allocation3 + $0x220] sm:$0xff] %v1089
          %1218 = vst [vmem:[#allocation3 + $0x228] sm:$0xff] %v1090
          %1219 = vst [vmem:[#allocation3 + $0x230] sm:$0xff] %v1091
          %1220 = vst [vmem:[#allocation3 + $0x238] sm:$0xff] %v1092
          %1221 = vst [vmem:[#allocation3 + $0x240] sm:$0xff] %v1093
          %1222 = vst [vmem:[#allocation3 + $0x248] sm:$0xff] %v1094
          %1223 = vst [vmem:[#allocation3 + $0x250] sm:$0xff] %v1095
          %1224 = vst [vmem:[#allocation3 + $0x258] sm:$0xff] %v1096
          %1225 = vst [vmem:[#allocation3 + $0x260] sm:$0xff] %v1097
          %1226 = vst [vmem:[#allocation3 + $0x268] sm:$0xff] %v1098
          %1227 = vst [vmem:[#allocation3 + $0x270] sm:$0xff] %v1099
          %1228 = vst [vmem:[#allocation3 + $0x278] sm:$0xff] %v1100
          %1229 = vst [vmem:[#allocation3 + $0x280] sm:$0xff] %v1101
          %1230 = vst [vmem:[#allocation3 + $0x288] sm:$0xff] %v1102
          %1231 = vst [vmem:[#allocation3 + $0x290] sm:$0xff] %v1103
          %1232 = vst [vmem:[#allocation3 + $0x298] sm:$0xff] %v1104
          %1233 = vst [vmem:[#allocation3 + $0x2a0] sm:$0xff] %v1105
          %1234 = vst [vmem:[#allocation3 + $0x2a8] sm:$0xff] %v1106
          %1235 = vst [vmem:[#allocation3 + $0x2b0] sm:$0xff] %v1107
          %1236 = vst [vmem:[#allocation3 + $0x2b8] sm:$0xff] %v1108
          %1237 = vst [vmem:[#allocation3 + $0x2c0] sm:$0xff] %v1109
          %1238 = vst [vmem:[#allocation3 + $0x2c8] sm:$0xff] %v1110
          %1239 = vst [vmem:[#allocation3 + $0x2d0] sm:$0xff] %v1111
          %1240 = vst [vmem:[#allocation3 + $0x2d8] sm:$0xff] %v1112
          %1241 = vst [vmem:[#allocation3 + $0x2e0] sm:$0xff] %v1113
          %1242 = vst [vmem:[#allocation3 + $0x2e8] sm:$0xff] %v1114
          %1243 = vst [vmem:[#allocation3 + $0x2f0] sm:$0xff] %v1115
          %1244 = vst [vmem:[#allocation3 + $0x2f8] sm:$0xff] %v1116
          %1245 = vst [vmem:[#allocation3 + $0x300] sm:$0xff] %v1117
          %1246 = vst [vmem:[#allocation3 + $0x308] sm:$0xff] %v1118
          %1247 = vst [vmem:[#allocation3 + $0x310] sm:$0xff] %v1119
          %1248 = vst [vmem:[#allocation3 + $0x318] sm:$0xff] %v1120
          %1249 = vst [vmem:[#allocation3 + $0x320] sm:$0xff] %v1121
          %1250 = vst [vmem:[#allocation3 + $0x328] sm:$0xff] %v1122
          %1251 = vst [vmem:[#allocation3 + $0x330] sm:$0xff] %v1123
          %1252 = vst [vmem:[#allocation3 + $0x338] sm:$0xff] %v1124
          %1253 = vst [vmem:[#allocation3 + $0x340] sm:$0xff] %v1125
          %1254 = vst [vmem:[#allocation3 + $0x348] sm:$0xff] %v1126
          %1255 = vst [vmem:[#allocation3 + $0x350] sm:$0xff] %v1127
          %1256 = vst [vmem:[#allocation3 + $0x358] sm:$0xff] %v1128
          %1257 = vst [vmem:[#allocation3 + $0x360] sm:$0xff] %v1129
          %1258 = vst [vmem:[#allocation3 + $0x368] sm:$0xff] %v1130
          %1259 = vst [vmem:[#allocation3 + $0x370] sm:$0xff] %v1131
          %1260 = vst [vmem:[#allocation3 + $0x378] sm:$0xff] %v1132
          %1261 = vst [vmem:[#allocation3 + $0x380] sm:$0xff] %v1133
          %1262 = vst [vmem:[#allocation3 + $0x388] sm:$0xff] %v1134
          %1263 = vst [vmem:[#allocation3 + $0x390] sm:$0xff] %v1135
          %1264 = vst [vmem:[#allocation3 + $0x398] sm:$0xff] %v1136
          %1265 = vst [vmem:[#allocation3 + $0x3a0] sm:$0xff] %v1137
          %1266 = vst [vmem:[#allocation3 + $0x3a8] sm:$0xff] %v1138
          %1267 = vst [vmem:[#allocation3 + $0x3b0] sm:$0xff] %v1139
          %1268 = vst [vmem:[#allocation3 + $0x3b8] sm:$0xff] %v1140
          %1269 = vst [vmem:[#allocation3 + $0x3c0] sm:$0xff] %v1141
          %1270 = vst [vmem:[#allocation3 + $0x3c8] sm:$0xff] %v1142
          %1271 = vst [vmem:[#allocation3 + $0x3d0] sm:$0xff] %v1143
          %1272 = vst [vmem:[#allocation3 + $0x3d8] sm:$0xff] %v1144
          %1273 = vst [vmem:[#allocation3 + $0x3e0] sm:$0xff] %v1145
          %1274 = vst [vmem:[#allocation3 + $0x3e8] sm:$0xff] %v1146
          %1275 = vst [vmem:[#allocation3 + $0x3f0] sm:$0xff] %v1147
          %1276 = vst [vmem:[#allocation3 + $0x3f8] sm:$0xff] %v1148
          %1277 = vst [vmem:[#allocation3 + $0x400] sm:$0xff] %v1149
          %1278 = vst [vmem:[#allocation3 + $0x408] sm:$0xff] %v1150
          %1279 = vst [vmem:[#allocation3 + $0x410] sm:$0xff] %v1151
          %1280 = vst [vmem:[#allocation3 + $0x418] sm:$0xff] %v1152
          %1281 = vst [vmem:[#allocation4] sm:$0xff] %v802
          %1282 = vst [vmem:[#allocation4 + $0x8] sm:$0xff] %v803
          %1283 = vst [vmem:[#allocation4 + $0x10] sm:$0xff] %v804
          %1284 = vst [vmem:[#allocation4 + $0x18] sm:$0xff] %v805
          %v1285 = vld [vmem:[#allocation3] sm:$0xff]
          %v1286 = vld [vmem:[#allocation3 + $0x8] sm:$0xff]
          %v1287 = vld [vmem:[#allocation3 + $0x10] sm:$0xff]
          %v1288 = vld [vmem:[#allocation3 + $0x18] sm:$0xff]
          %v1289 = vld [vmem:[#allocation3 + $0x20] sm:$0xff]
          %v1290 = vld [vmem:[#allocation3 + $0x28] sm:$0xff]
          %v1291 = vld [vmem:[#allocation3 + $0x30] sm:$0xff]
          %v1292 = vld [vmem:[#allocation3 + $0x38] sm:$0xff]
          %v1293 = vld [vmem:[#allocation3 + $0x40] sm:$0xff]
          %v1294 = vld [vmem:[#allocation3 + $0x48] sm:$0xff]
          %v1295 = vld [vmem:[#allocation3 + $0x50] sm:$0xff]
          %v1296 = vld [vmem:[#allocation3 + $0x58] sm:$0xff]
          %v1297 = vld [vmem:[#allocation3 + $0x60] sm:$0xff]
          %v1298 = vld [vmem:[#allocation3 + $0x68] sm:$0xff]
          %v1299 = vld [vmem:[#allocation3 + $0x70] sm:$0xff]
          %v1300 = vld [vmem:[#allocation3 + $0x78] sm:$0xff]
          %v1301 = vld [vmem:[#allocation3 + $0x80] sm:$0xff]
          %v1302 = vld [vmem:[#allocation3 + $0x88] sm:$0xff]
          %v1303 = vld [vmem:[#allocation3 + $0x90] sm:$0xff]
          %v1304 = vld [vmem:[#allocation3 + $0x98] sm:$0xff]
          %v1305 = vld [vmem:[#allocation3 + $0xa0] sm:$0xff]
          %v1306 = vld [vmem:[#allocation3 + $0xa8] sm:$0xff]
          %v1307 = vld [vmem:[#allocation3 + $0xb0] sm:$0xff]
          %v1308 = vld [vmem:[#allocation3 + $0xb8] sm:$0xff]
          %v1309 = vld [vmem:[#allocation3 + $0xc0] sm:$0xff]
          %v1310 = vld [vmem:[#allocation3 + $0xc8] sm:$0xff]
          %v1311 = vld [vmem:[#allocation3 + $0xd0] sm:$0xff]
          %v1312 = vld [vmem:[#allocation3 + $0xd8] sm:$0xff]
          %v1313 = vld [vmem:[#allocation3 + $0xe0] sm:$0xff]
          %v1314 = vld [vmem:[#allocation3 + $0xe8] sm:$0xff]
          %v1315 = vld [vmem:[#allocation3 + $0xf0] sm:$0xff]
          %v1316 = vld [vmem:[#allocation3 + $0xf8] sm:$0xff]
          %v1317 = vld [vmem:[#allocation3 + $0x100] sm:$0xff]
          %v1318 = vld [vmem:[#allocation3 + $0x108] sm:$0xff]
          %v1319 = vld [vmem:[#allocation3 + $0x110] sm:$0xff]
          %v1320 = vld [vmem:[#allocation3 + $0x118] sm:$0xff]
          %v1321 = vld [vmem:[#allocation3 + $0x120] sm:$0xff]
          %v1322 = vld [vmem:[#allocation3 + $0x128] sm:$0xff]
          %v1323 = vld [vmem:[#allocation3 + $0x130] sm:$0xff]
          %v1324 = vld [vmem:[#allocation3 + $0x138] sm:$0xff]
          %v1325 = vld [vmem:[#allocation3 + $0x140] sm:$0xff]
          %v1326 = vld [vmem:[#allocation3 + $0x148] sm:$0xff]
          %v1327 = vld [vmem:[#allocation3 + $0x150] sm:$0xff]
          %v1328 = vld [vmem:[#allocation3 + $0x158] sm:$0xff]
          %v1329 = vld [vmem:[#allocation3 + $0x160] sm:$0xff]
          %v1330 = vld [vmem:[#allocation3 + $0x168] sm:$0xff]
          %v1331 = vld [vmem:[#allocation3 + $0x170] sm:$0xff]
          %v1332 = vld [vmem:[#allocation3 + $0x178] sm:$0xff]
          %v1333 = vld [vmem:[#allocation3 + $0x180] sm:$0xff]
          %v1334 = vld [vmem:[#allocation3 + $0x188] sm:$0xff]
          %v1335 = vld [vmem:[#allocation3 + $0x190] sm:$0xff]
          %v1336 = vld [vmem:[#allocation3 + $0x198] sm:$0xff]
          %v1337 = vld [vmem:[#allocation3 + $0x1a0] sm:$0xff]
          %v1338 = vld [vmem:[#allocation3 + $0x1a8] sm:$0xff]
          %v1339 = vld [vmem:[#allocation3 + $0x1b0] sm:$0xff]
          %v1340 = vld [vmem:[#allocation3 + $0x1b8] sm:$0xff]
          %v1341 = vld [vmem:[#allocation3 + $0x1c0] sm:$0xff]
          %v1342 = vld [vmem:[#allocation3 + $0x1c8] sm:$0xff]
          %v1343 = vld [vmem:[#allocation3 + $0x1d0] sm:$0xff]
          %v1344 = vld [vmem:[#allocation3 + $0x1d8] sm:$0xff]
          %v1345 = vld [vmem:[#allocation3 + $0x1e0] sm:$0xff]
          %v1346 = vld [vmem:[#allocation3 + $0x1e8] sm:$0xff]
          %v1347 = vld [vmem:[#allocation3 + $0x1f0] sm:$0xff]
          %v1348 = vld [vmem:[#allocation3 + $0x1f8] sm:$0xff]
          %v1349 = vld [vmem:[#allocation3 + $0x200] sm:$0xff]
          %v1350 = vld [vmem:[#allocation3 + $0x208] sm:$0xff]
          %v1351 = vld [vmem:[#allocation3 + $0x210] sm:$0xff]
          %v1352 = vld [vmem:[#allocation3 + $0x218] sm:$0xff]
          %v1353 = vld [vmem:[#allocation3 + $0x220] sm:$0xff]
          %v1354 = vld [vmem:[#allocation3 + $0x228] sm:$0xff]
          %v1355 = vld [vmem:[#allocation3 + $0x230] sm:$0xff]
          %v1356 = vld [vmem:[#allocation3 + $0x238] sm:$0xff]
          %v1357 = vld [vmem:[#allocation3 + $0x240] sm:$0xff]
          %v1358 = vld [vmem:[#allocation3 + $0x248] sm:$0xff]
          %v1359 = vld [vmem:[#allocation3 + $0x250] sm:$0xff]
          %v1360 = vld [vmem:[#allocation3 + $0x258] sm:$0xff]
          %v1361 = vld [vmem:[#allocation3 + $0x260] sm:$0xff]
          %v1362 = vld [vmem:[#allocation3 + $0x268] sm:$0xff]
          %v1363 = vld [vmem:[#allocation3 + $0x270] sm:$0xff]
          %v1364 = vld [vmem:[#allocation3 + $0x278] sm:$0xff]
          %v1365 = vld [vmem:[#allocation3 + $0x280] sm:$0xff]
          %v1366 = vld [vmem:[#allocation3 + $0x288] sm:$0xff]
          %v1367 = vld [vmem:[#allocation3 + $0x290] sm:$0xff]
          %v1368 = vld [vmem:[#allocation3 + $0x298] sm:$0xff]
          %v1369 = vld [vmem:[#allocation3 + $0x2a0] sm:$0xff]
          %v1370 = vld [vmem:[#allocation3 + $0x2a8] sm:$0xff]
          %v1371 = vld [vmem:[#allocation3 + $0x2b0] sm:$0xff]
          %v1372 = vld [vmem:[#allocation3 + $0x2b8] sm:$0xff]
          %v1373 = vld [vmem:[#allocation3 + $0x2c0] sm:$0xff]
          %v1374 = vld [vmem:[#allocation3 + $0x2c8] sm:$0xff]
          %v1375 = vld [vmem:[#allocation3 + $0x2d0] sm:$0xff]
          %v1376 = vld [vmem:[#allocation3 + $0x2d8] sm:$0xff]
          %v1377 = vld [vmem:[#allocation3 + $0x2e0] sm:$0xff]
          %v1378 = vld [vmem:[#allocation3 + $0x2e8] sm:$0xff]
          %v1379 = vld [vmem:[#allocation3 + $0x2f0] sm:$0xff]
          %v1380 = vld [vmem:[#allocation3 + $0x2f8] sm:$0xff]
          %v1381 = vld [vmem:[#allocation3 + $0x300] sm:$0xff]
          %v1382 = vld [vmem:[#allocation3 + $0x308] sm:$0xff]
          %v1383 = vld [vmem:[#allocation3 + $0x310] sm:$0xff]
          %v1384 = vld [vmem:[#allocation3 + $0x318] sm:$0xff]
          %v1385 = vld [vmem:[#allocation3 + $0x320] sm:$0xff]
          %v1386 = vld [vmem:[#allocation3 + $0x328] sm:$0xff]
          %v1387 = vld [vmem:[#allocation3 + $0x330] sm:$0xff]
          %v1388 = vld [vmem:[#allocation3 + $0x338] sm:$0xff]
          %v1389 = vld [vmem:[#allocation3 + $0x340] sm:$0xff]
          %v1390 = vld [vmem:[#allocation3 + $0x348] sm:$0xff]
          %v1391 = vld [vmem:[#allocation3 + $0x350] sm:$0xff]
          %v1392 = vld [vmem:[#allocation3 + $0x358] sm:$0xff]
          %v1393 = vld [vmem:[#allocation3 + $0x360] sm:$0xff]
          %v1394 = vld [vmem:[#allocation3 + $0x368] sm:$0xff]
          %v1395 = vld [vmem:[#allocation3 + $0x370] sm:$0xff]
          %v1396 = vld [vmem:[#allocation3 + $0x378] sm:$0xff]
          %v1397 = vld [vmem:[#allocation3 + $0x380] sm:$0xff]
          %v1398 = vld [vmem:[#allocation3 + $0x388] sm:$0xff]
          %v1399 = vld [vmem:[#allocation3 + $0x390] sm:$0xff]
          %v1400 = vld [vmem:[#allocation3 + $0x398] sm:$0xff]
          %v1401 = vld [vmem:[#allocation3 + $0x3a0] sm:$0xff]
          %v1402 = vld [vmem:[#allocation3 + $0x3a8] sm:$0xff]
          %v1403 = vld [vmem:[#allocation3 + $0x3b0] sm:$0xff]
          %v1404 = vld [vmem:[#allocation3 + $0x3b8] sm:$0xff]
          %v1405 = vld [vmem:[#allocation3 + $0x3c0] sm:$0xff]
          %v1406 = vld [vmem:[#allocation3 + $0x3c8] sm:$0xff]
          %v1407 = vld [vmem:[#allocation3 + $0x3d0] sm:$0xff]
          %v1408 = vld [vmem:[#allocation3 + $0x3d8] sm:$0xff]
          %v1409 = vld [vmem:[#allocation3 + $0x3e0] sm:$0xff]
          %v1410 = vld [vmem:[#allocation3 + $0x3e8] sm:$0xff]
          %v1411 = vld [vmem:[#allocation3 + $0x3f0] sm:$0xff]
          %v1412 = vld [vmem:[#allocation3 + $0x3f8] sm:$0xff]
          %v1413 = vld [vmem:[#allocation3 + $0x400] sm:$0xff]
          %v1414 = vld [vmem:[#allocation3 + $0x408] sm:$0xff]
          %v1415 = vld [vmem:[#allocation3 + $0x410] sm:$0xff]
          %v1416 = vld [vmem:[#allocation3 + $0x418] sm:$0xff]
          %v1417 = vld [vmem:[#allocation4] sm:$0xff]
          %v1418 = vld [vmem:[#allocation4 + $0x8] sm:$0xff]
          %v1419 = vld [vmem:[#allocation4 + $0x10] sm:$0xff]
          %v1420 = vld [vmem:[#allocation4 + $0x18] sm:$0xff]
          %v1421 = vld [vmem:[#allocation4 + $0x20] sm:$0xff]
          %v1422 = vld [vmem:[#allocation4 + $0x28] sm:$0xff]
          %v1423 = vld [vmem:[#allocation4 + $0x30] sm:$0xff]
          %v1424 = vld [vmem:[#allocation4 + $0x38] sm:$0xff]
          %v1425 = vld [vmem:[#allocation4 + $0x40] sm:$0xff]
          %v1426 = vld [vmem:[#allocation4 + $0x48] sm:$0xff]
          %v1427 = vld [vmem:[#allocation4 + $0x50] sm:$0xff]
          %v1428 = vld [vmem:[#allocation4 + $0x58] sm:$0xff]
          %v1429 = vld [vmem:[#allocation4 + $0x60] sm:$0xff]
          %v1430 = vld [vmem:[#allocation4 + $0x68] sm:$0xff]
          %v1431 = vld [vmem:[#allocation4 + $0x70] sm:$0xff]
          %v1432 = vld [vmem:[#allocation4 + $0x78] sm:$0xff]
          %v1433 = vld [vmem:[#allocation4 + $0x80] sm:$0xff]
          %v1434 = vld [vmem:[#allocation4 + $0x88] sm:$0xff]
          %v1435 = vld [vmem:[#allocation4 + $0x90] sm:$0xff]
          %v1436 = vld [vmem:[#allocation4 + $0x98] sm:$0xff]
          %v1437 = vld [vmem:[#allocation4 + $0xa0] sm:$0xff]
          %v1438 = vld [vmem:[#allocation4 + $0xa8] sm:$0xff]
          %v1439 = vld [vmem:[#allocation4 + $0xb0] sm:$0xff]
          %v1440 = vld [vmem:[#allocation4 + $0xb8] sm:$0xff]
          %v1441 = vld [vmem:[#allocation4 + $0xc0] sm:$0xff]
          %v1442 = vld [vmem:[#allocation4 + $0xc8] sm:$0xff]
          %v1443 = vld [vmem:[#allocation4 + $0xd0] sm:$0xff]
          %v1444 = vld [vmem:[#allocation4 + $0xd8] sm:$0xff]
          %v1445 = vld [vmem:[#allocation4 + $0xe0] sm:$0xff]
          %v1446 = vld [vmem:[#allocation4 + $0xe8] sm:$0xff]
          %v1447 = vld [vmem:[#allocation4 + $0xf0] sm:$0xff]
          %v1448 = vld [vmem:[#allocation4 + $0xf8] sm:$0xff]
          %v1449 = vld [vmem:[#allocation4 + $0x100] sm:$0xff]
          %v1450 = vld [vmem:[#allocation4 + $0x108] sm:$0xff]
          %v1451 = vld [vmem:[#allocation4 + $0x110] sm:$0xff]
          %v1452 = vld [vmem:[#allocation4 + $0x118] sm:$0xff]
          %v1453 = vld [vmem:[#allocation4 + $0x120] sm:$0xff]
          %v1454 = vld [vmem:[#allocation4 + $0x128] sm:$0xff]
          %v1455 = vld [vmem:[#allocation4 + $0x130] sm:$0xff]
          %v1456 = vld [vmem:[#allocation4 + $0x138] sm:$0xff]
          %v1457 = vld [vmem:[#allocation4 + $0x140] sm:$0xff]
          %v1458 = vld [vmem:[#allocation4 + $0x148] sm:$0xff]
          %v1459 = vld [vmem:[#allocation4 + $0x150] sm:$0xff]
          %v1460 = vld [vmem:[#allocation4 + $0x158] sm:$0xff]
          %v1461 = vld [vmem:[#allocation4 + $0x160] sm:$0xff]
          %v1462 = vld [vmem:[#allocation4 + $0x168] sm:$0xff]
          %v1463 = vld [vmem:[#allocation4 + $0x170] sm:$0xff]
          %v1464 = vld [vmem:[#allocation4 + $0x178] sm:$0xff]
          %v1465 = vld [vmem:[#allocation4 + $0x180] sm:$0xff]
          %v1466 = vld [vmem:[#allocation4 + $0x188] sm:$0xff]
          %v1467 = vld [vmem:[#allocation4 + $0x190] sm:$0xff]
          %v1468 = vld [vmem:[#allocation4 + $0x198] sm:$0xff]
          %v1469 = vld [vmem:[#allocation4 + $0x1a0] sm:$0xff]
          %v1470 = vld [vmem:[#allocation4 + $0x1a8] sm:$0xff]
          %v1471 = vld [vmem:[#allocation4 + $0x1b0] sm:$0xff]
          %v1472 = vld [vmem:[#allocation4 + $0x1b8] sm:$0xff]
          %v1473 = vld [vmem:[#allocation4 + $0x1c0] sm:$0xff]
          %v1474 = vld [vmem:[#allocation4 + $0x1c8] sm:$0xff]
          %v1475 = vld [vmem:[#allocation4 + $0x1d0] sm:$0xff]
          %v1476 = vld [vmem:[#allocation4 + $0x1d8] sm:$0xff]
          %v1477 = vld [vmem:[#allocation4 + $0x1e0] sm:$0xff]
          %v1478 = vld [vmem:[#allocation4 + $0x1e8] sm:$0xff]
          %v1479 = vld [vmem:[#allocation4 + $0x1f0] sm:$0xff]
          %v1480 = vld [vmem:[#allocation4 + $0x1f8] sm:$0xff]
          %v1481 = vld [vmem:[#allocation4 + $0x200] sm:$0xff]
          %v1482 = vld [vmem:[#allocation4 + $0x208] sm:$0xff]
          %v1483 = vld [vmem:[#allocation4 + $0x210] sm:$0xff]
          %v1484 = vld [vmem:[#allocation4 + $0x218] sm:$0xff]
          %v1485 = vld [vmem:[#allocation4 + $0x220] sm:$0xff]
          %v1486 = vld [vmem:[#allocation4 + $0x228] sm:$0xff]
          %v1487 = vld [vmem:[#allocation4 + $0x230] sm:$0xff]
          %v1488 = vld [vmem:[#allocation4 + $0x238] sm:$0xff]
          %v1489 = vld [vmem:[#allocation4 + $0x240] sm:$0xff]
          %v1490 = vld [vmem:[#allocation4 + $0x248] sm:$0xff]
          %v1491 = vld [vmem:[#allocation4 + $0x250] sm:$0xff]
          %v1492 = vld [vmem:[#allocation4 + $0x258] sm:$0xff]
          %v1493 = vld [vmem:[#allocation4 + $0x260] sm:$0xff]
          %v1494 = vld [vmem:[#allocation4 + $0x268] sm:$0xff]
          %v1495 = vld [vmem:[#allocation4 + $0x270] sm:$0xff]
          %v1496 = vld [vmem:[#allocation4 + $0x278] sm:$0xff]
          %v1497 = vld [vmem:[#allocation4 + $0x280] sm:$0xff]
          %v1498 = vld [vmem:[#allocation4 + $0x288] sm:$0xff]
          %v1499 = vld [vmem:[#allocation4 + $0x290] sm:$0xff]
          %v1500 = vld [vmem:[#allocation4 + $0x298] sm:$0xff]
          %v1501 = vld [vmem:[#allocation4 + $0x2a0] sm:$0xff]
          %v1502 = vld [vmem:[#allocation4 + $0x2a8] sm:$0xff]
          %v1503 = vld [vmem:[#allocation4 + $0x2b0] sm:$0xff]
          %v1504 = vld [vmem:[#allocation4 + $0x2b8] sm:$0xff]
          %v1505 = vld [vmem:[#allocation4 + $0x2c0] sm:$0xff]
          %v1506 = vld [vmem:[#allocation4 + $0x2c8] sm:$0xff]
          %v1507 = vld [vmem:[#allocation4 + $0x2d0] sm:$0xff]
          %v1508 = vld [vmem:[#allocation4 + $0x2d8] sm:$0xff]
          %v1509 = vld [vmem:[#allocation4 + $0x2e0] sm:$0xff]
          %v1510 = vld [vmem:[#allocation4 + $0x2e8] sm:$0xff]
          %v1511 = vld [vmem:[#allocation4 + $0x2f0] sm:$0xff]
          %v1512 = vld [vmem:[#allocation4 + $0x2f8] sm:$0xff]
          %v1513 = vld [vmem:[#allocation4 + $0x300] sm:$0xff]
          %v1514 = vld [vmem:[#allocation4 + $0x308] sm:$0xff]
          %v1515 = vld [vmem:[#allocation4 + $0x310] sm:$0xff]
          %v1516 = vld [vmem:[#allocation4 + $0x318] sm:$0xff]
          %v1517 = vld [vmem:[#allocation4 + $0x320] sm:$0xff]
          %v1518 = vld [vmem:[#allocation4 + $0x328] sm:$0xff]
          %v1519 = vld [vmem:[#allocation4 + $0x330] sm:$0xff]
          %v1520 = vld [vmem:[#allocation4 + $0x338] sm:$0xff]
          %v1521 = vld [vmem:[#allocation4 + $0x340] sm:$0xff]
          %v1522 = vld [vmem:[#allocation4 + $0x348] sm:$0xff]
          %v1523 = vld [vmem:[#allocation4 + $0x350] sm:$0xff]
          %v1524 = vld [vmem:[#allocation4 + $0x358] sm:$0xff]
          %v1525 = vld [vmem:[#allocation4 + $0x360] sm:$0xff]
          %v1526 = vld [vmem:[#allocation4 + $0x368] sm:$0xff]
          %v1527 = vld [vmem:[#allocation4 + $0x370] sm:$0xff]
          %v1528 = vld [vmem:[#allocation4 + $0x378] sm:$0xff]
          %v1529 = vld [vmem:[#allocation4 + $0x380] sm:$0xff]
          %v1530 = vld [vmem:[#allocation4 + $0x388] sm:$0xff]
          %v1531 = vld [vmem:[#allocation4 + $0x390] sm:$0xff]
          %v1532 = vld [vmem:[#allocation4 + $0x398] sm:$0xff]
          %v1533 = vld [vmem:[#allocation4 + $0x3a0] sm:$0xff]
          %v1534 = vld [vmem:[#allocation4 + $0x3a8] sm:$0xff]
          %v1535 = vld [vmem:[#allocation4 + $0x3b0] sm:$0xff]
          %v1536 = vld [vmem:[#allocation4 + $0x3b8] sm:$0xff]
          %v1537 = vld [vmem:[#allocation4 + $0x3c0] sm:$0xff]
          %v1538 = vld [vmem:[#allocation4 + $0x3c8] sm:$0xff]
          %v1539 = vld [vmem:[#allocation4 + $0x3d0] sm:$0xff]
          %v1540 = vld [vmem:[#allocation4 + $0x3d8] sm:$0xff]
          %v1541 = vld [vmem:[#allocation4 + $0x3e0] sm:$0xff]
          %v1542 = vld [vmem:[#allocation4 + $0x3e8] sm:$0xff]
          %v1543 = vld [vmem:[#allocation4 + $0x3f0] sm:$0xff]
          %v1544 = vld [vmem:[#allocation4 + $0x3f8] sm:$0xff]
          %v1545 = vld [vmem:[#allocation4 + $0x400] sm:$0xff]
          %v1546 = vld [vmem:[#allocation4 + $0x408] sm:$0xff]
          %v1547 = vld [vmem:[#allocation4 + $0x410] sm:$0xff]
          %v1548 = vld [vmem:[#allocation4 + $0x418] sm:$0xff]
          %1549 = vxpose.xlu0.b32.start [1/16] %v1285, 128
          %1550 = vxpose.xlu0.b32.cont [2/16] %v1287, 128
          %1551 = vxpose.xlu0.b32.cont [3/16] %v1289, 128
          %1552 = vxpose.xlu0.b32.cont [4/16] %v1291, 128
          %1553 = vxpose.xlu0.b32.cont [5/16] %v1293, 128
          %1554 = vxpose.xlu0.b32.cont [6/16] %v1295, 128
          %1555 = vxpose.xlu0.b32.cont [7/16] %v1297, 128
          %1556 = vxpose.xlu0.b32.cont [8/16] %v1299, 128
          %1557 = vxpose.xlu0.b32.cont [9/16] %v1301, 128
          %1558 = vxpose.xlu0.b32.cont [10/16] %v1303, 128
          %1559 = vxpose.xlu0.b32.cont [11/16] %v1305, 128
          %1560 = vxpose.xlu0.b32.cont [12/16] %v1307, 128
          %1561 = vxpose.xlu0.b32.cont [13/16] %v1309, 128
          %1562 = vxpose.xlu0.b32.cont [14/16] %v1311, 128
          %1563 = vxpose.xlu0.b32.cont [15/16] %v1313, 128
          %1564 = vxpose.xlu0.b32.end [16/16] %v1315, 128
          %v1565 = vpop.trf.xlu0
          %v1566 = vpop.trf.xlu0
          %v1567 = vpop.trf.xlu0
          %v1568 = vpop.trf.xlu0
          %v1569 = vpop.trf.xlu0
          %v1570 = vpop.trf.xlu0
          %v1571 = vpop.trf.xlu0
          %v1572 = vpop.trf.xlu0
          %v1573 = vpop.trf.xlu0
          %v1574 = vpop.trf.xlu0
          %v1575 = vpop.trf.xlu0
          %v1576 = vpop.trf.xlu0
          %v1577 = vpop.trf.xlu0
          %v1578 = vpop.trf.xlu0
          %v1579 = vpop.trf.xlu0
          %v1580 = vpop.trf.xlu0
          %1581 = vxpose.xlu0.b32.start [1/16] %v1286, 128
          %1582 = vxpose.xlu0.b32.cont [2/16] %v1288, 128
          %1583 = vxpose.xlu0.b32.cont [3/16] %v1290, 128
          %1584 = vxpose.xlu0.b32.cont [4/16] %v1292, 128
          %1585 = vxpose.xlu0.b32.cont [5/16] %v1294, 128
          %1586 = vxpose.xlu0.b32.cont [6/16] %v1296, 128
          %1587 = vxpose.xlu0.b32.cont [7/16] %v1298, 128
          %1588 = vxpose.xlu0.b32.cont [8/16] %v1300, 128
          %1589 = vxpose.xlu0.b32.cont [9/16] %v1302, 128
          %1590 = vxpose.xlu0.b32.cont [10/16] %v1304, 128
          %1591 = vxpose.xlu0.b32.cont [11/16] %v1306, 128
          %1592 = vxpose.xlu0.b32.cont [12/16] %v1308, 128
          %1593 = vxpose.xlu0.b32.cont [13/16] %v1310, 128
          %1594 = vxpose.xlu0.b32.cont [14/16] %v1312, 128
          %1595 = vxpose.xlu0.b32.cont [15/16] %v1314, 128
          %1596 = vxpose.xlu0.b32.end [16/16] %v1316, 128
          %v1597 = vpop.trf.xlu0
          %v1598 = vpop.trf.xlu0
          %v1599 = vpop.trf.xlu0
          %v1600 = vpop.trf.xlu0
          %v1601 = vpop.trf.xlu0
          %v1602 = vpop.trf.xlu0
          %v1603 = vpop.trf.xlu0
          %v1604 = vpop.trf.xlu0
          %v1605 = vpop.trf.xlu0
          %v1606 = vpop.trf.xlu0
          %v1607 = vpop.trf.xlu0
          %v1608 = vpop.trf.xlu0
          %v1609 = vpop.trf.xlu0
          %v1610 = vpop.trf.xlu0
          %v1611 = vpop.trf.xlu0
          %v1612 = vpop.trf.xlu0
          %1613 = vxpose.xlu0.b32.start [1/16] %v1317, 128
          %1614 = vxpose.xlu0.b32.cont [2/16] %v1319, 128
          %1615 = vxpose.xlu0.b32.cont [3/16] %v1321, 128
          %1616 = vxpose.xlu0.b32.cont [4/16] %v1323, 128
          %1617 = vxpose.xlu0.b32.cont [5/16] %v1325, 128
          %1618 = vxpose.xlu0.b32.cont [6/16] %v1327, 128
          %1619 = vxpose.xlu0.b32.cont [7/16] %v1329, 128
          %1620 = vxpose.xlu0.b32.cont [8/16] %v1331, 128
          %1621 = vxpose.xlu0.b32.cont [9/16] %v1333, 128
          %1622 = vxpose.xlu0.b32.cont [10/16] %v1335, 128
          %1623 = vxpose.xlu0.b32.cont [11/16] %v1337, 128
          %1624 = vxpose.xlu0.b32.cont [12/16] %v1339, 128
          %1625 = vxpose.xlu0.b32.cont [13/16] %v1341, 128
          %1626 = vxpose.xlu0.b32.cont [14/16] %v1343, 128
          %1627 = vxpose.xlu0.b32.cont [15/16] %v1345, 128
          %1628 = vxpose.xlu0.b32.end [16/16] %v1347, 128
          %v1629 = vpop.trf.xlu0
          %v1630 = vpop.trf.xlu0
          %v1631 = vpop.trf.xlu0
          %v1632 = vpop.trf.xlu0
          %v1633 = vpop.trf.xlu0
          %v1634 = vpop.trf.xlu0
          %v1635 = vpop.trf.xlu0
          %v1636 = vpop.trf.xlu0
          %v1637 = vpop.trf.xlu0
          %v1638 = vpop.trf.xlu0
          %v1639 = vpop.trf.xlu0
          %v1640 = vpop.trf.xlu0
          %v1641 = vpop.trf.xlu0
          %v1642 = vpop.trf.xlu0
          %v1643 = vpop.trf.xlu0
          %v1644 = vpop.trf.xlu0
          %1645 = vxpose.xlu0.b32.start [1/16] %v1318, 128
          %1646 = vxpose.xlu0.b32.cont [2/16] %v1320, 128
          %1647 = vxpose.xlu0.b32.cont [3/16] %v1322, 128
          %1648 = vxpose.xlu0.b32.cont [4/16] %v1324, 128
          %1649 = vxpose.xlu0.b32.cont [5/16] %v1326, 128
          %1650 = vxpose.xlu0.b32.cont [6/16] %v1328, 128
          %1651 = vxpose.xlu0.b32.cont [7/16] %v1330, 128
          %1652 = vxpose.xlu0.b32.cont [8/16] %v1332, 128
          %1653 = vxpose.xlu0.b32.cont [9/16] %v1334, 128
          %1654 = vxpose.xlu0.b32.cont [10/16] %v1336, 128
          %1655 = vxpose.xlu0.b32.cont [11/16] %v1338, 128
          %1656 = vxpose.xlu0.b32.cont [12/16] %v1340, 128
          %1657 = vxpose.xlu0.b32.cont [13/16] %v1342, 128
          %1658 = vxpose.xlu0.b32.cont [14/16] %v1344, 128
          %1659 = vxpose.xlu0.b32.cont [15/16] %v1346, 128
          %1660 = vxpose.xlu0.b32.end [16/16] %v1348, 128
          %v1661 = vpop.trf.xlu0
          %v1662 = vpop.trf.xlu0
          %v1663 = vpop.trf.xlu0
          %v1664 = vpop.trf.xlu0
          %v1665 = vpop.trf.xlu0
          %v1666 = vpop.trf.xlu0
          %v1667 = vpop.trf.xlu0
          %v1668 = vpop.trf.xlu0
          %v1669 = vpop.trf.xlu0
          %v1670 = vpop.trf.xlu0
          %v1671 = vpop.trf.xlu0
          %v1672 = vpop.trf.xlu0
          %v1673 = vpop.trf.xlu0
          %v1674 = vpop.trf.xlu0
          %v1675 = vpop.trf.xlu0
          %v1676 = vpop.trf.xlu0
          %1677 = vxpose.xlu0.b32.start [1/16] %v1349, 128
          %1678 = vxpose.xlu0.b32.cont [2/16] %v1351, 128
          %1679 = vxpose.xlu0.b32.cont [3/16] %v1353, 128
          %1680 = vxpose.xlu0.b32.cont [4/16] %v1355, 128
          %1681 = vxpose.xlu0.b32.cont [5/16] %v1357, 128
          %1682 = vxpose.xlu0.b32.cont [6/16] %v1359, 128
          %1683 = vxpose.xlu0.b32.cont [7/16] %v1361, 128
          %1684 = vxpose.xlu0.b32.cont [8/16] %v1363, 128
          %1685 = vxpose.xlu0.b32.cont [9/16] %v1365, 128
          %1686 = vxpose.xlu0.b32.cont [10/16] %v1367, 128
          %1687 = vxpose.xlu0.b32.cont [11/16] %v1369, 128
          %1688 = vxpose.xlu0.b32.cont [12/16] %v1371, 128
          %1689 = vxpose.xlu0.b32.cont [13/16] %v1373, 128
          %1690 = vxpose.xlu0.b32.cont [14/16] %v1375, 128
          %1691 = vxpose.xlu0.b32.cont [15/16] %v1377, 128
          %1692 = vxpose.xlu0.b32.end [16/16] %v1379, 128
          %v1693 = vpop.trf.xlu0
          %v1694 = vpop.trf.xlu0
          %v1695 = vpop.trf.xlu0
          %v1696 = vpop.trf.xlu0
          %v1697 = vpop.trf.xlu0
          %v1698 = vpop.trf.xlu0
          %v1699 = vpop.trf.xlu0
          %v1700 = vpop.trf.xlu0
          %v1701 = vpop.trf.xlu0
          %v1702 = vpop.trf.xlu0
          %v1703 = vpop.trf.xlu0
          %v1704 = vpop.trf.xlu0
          %v1705 = vpop.trf.xlu0
          %v1706 = vpop.trf.xlu0
          %v1707 = vpop.trf.xlu0
          %v1708 = vpop.trf.xlu0
          %1709 = vxpose.xlu0.b32.start [1/16] %v1350, 128
          %1710 = vxpose.xlu0.b32.cont [2/16] %v1352, 128
          %1711 = vxpose.xlu0.b32.cont [3/16] %v1354, 128
          %1712 = vxpose.xlu0.b32.cont [4/16] %v1356, 128
          %1713 = vxpose.xlu0.b32.cont [5/16] %v1358, 128
          %1714 = vxpose.xlu0.b32.cont [6/16] %v1360, 128
          %1715 = vxpose.xlu0.b32.cont [7/16] %v1362, 128
          %1716 = vxpose.xlu0.b32.cont [8/16] %v1364, 128
          %1717 = vxpose.xlu0.b32.cont [9/16] %v1366, 128
          %1718 = vxpose.xlu0.b32.cont [10/16] %v1368, 128
          %1719 = vxpose.xlu0.b32.cont [11/16] %v1370, 128
          %1720 = vxpose.xlu0.b32.cont [12/16] %v1372, 128
          %1721 = vxpose.xlu0.b32.cont [13/16] %v1374, 128
          %1722 = vxpose.xlu0.b32.cont [14/16] %v1376, 128
          %1723 = vxpose.xlu0.b32.cont [15/16] %v1378, 128
          %1724 = vxpose.xlu0.b32.end [16/16] %v1380, 128
          %v1725 = vpop.trf.xlu0
          %v1726 = vpop.trf.xlu0
          %v1727 = vpop.trf.xlu0
          %v1728 = vpop.trf.xlu0
          %v1729 = vpop.trf.xlu0
          %v1730 = vpop.trf.xlu0
          %v1731 = vpop.trf.xlu0
          %v1732 = vpop.trf.xlu0
          %v1733 = vpop.trf.xlu0
          %v1734 = vpop.trf.xlu0
          %v1735 = vpop.trf.xlu0
          %v1736 = vpop.trf.xlu0
          %v1737 = vpop.trf.xlu0
          %v1738 = vpop.trf.xlu0
          %v1739 = vpop.trf.xlu0
          %v1740 = vpop.trf.xlu0
          %1741 = vxpose.xlu0.b32.start [1/16] %v1381, 128
          %1742 = vxpose.xlu0.b32.cont [2/16] %v1383, 128
          %1743 = vxpose.xlu0.b32.cont [3/16] %v1385, 128
          %1744 = vxpose.xlu0.b32.cont [4/16] %v1387, 128
          %1745 = vxpose.xlu0.b32.cont [5/16] %v1389, 128
          %1746 = vxpose.xlu0.b32.cont [6/16] %v1391, 128
          %1747 = vxpose.xlu0.b32.cont [7/16] %v1393, 128
          %1748 = vxpose.xlu0.b32.cont [8/16] %v1395, 128
          %1749 = vxpose.xlu0.b32.cont [9/16] %v1397, 128
          %1750 = vxpose.xlu0.b32.cont [10/16] %v1399, 128
          %1751 = vxpose.xlu0.b32.cont [11/16] %v1401, 128
          %1752 = vxpose.xlu0.b32.cont [12/16] %v1403, 128
          %1753 = vxpose.xlu0.b32.cont [13/16] %v1405, 128
          %1754 = vxpose.xlu0.b32.cont [14/16] %v1407, 128
          %1755 = vxpose.xlu0.b32.cont [15/16] %v1409, 128
          %1756 = vxpose.xlu0.b32.end [16/16] %v1411, 128
          %v1757 = vpop.trf.xlu0
          %v1758 = vpop.trf.xlu0
          %v1759 = vpop.trf.xlu0
          %v1760 = vpop.trf.xlu0
          %v1761 = vpop.trf.xlu0
          %v1762 = vpop.trf.xlu0
          %v1763 = vpop.trf.xlu0
          %v1764 = vpop.trf.xlu0
          %v1765 = vpop.trf.xlu0
          %v1766 = vpop.trf.xlu0
          %v1767 = vpop.trf.xlu0
          %v1768 = vpop.trf.xlu0
          %v1769 = vpop.trf.xlu0
          %v1770 = vpop.trf.xlu0
          %v1771 = vpop.trf.xlu0
          %v1772 = vpop.trf.xlu0
          %1773 = vxpose.xlu0.b32.start [1/16] %v1382, 128
          %1774 = vxpose.xlu0.b32.cont [2/16] %v1384, 128
          %1775 = vxpose.xlu0.b32.cont [3/16] %v1386, 128
          %1776 = vxpose.xlu0.b32.cont [4/16] %v1388, 128
          %1777 = vxpose.xlu0.b32.cont [5/16] %v1390, 128
          %1778 = vxpose.xlu0.b32.cont [6/16] %v1392, 128
          %1779 = vxpose.xlu0.b32.cont [7/16] %v1394, 128
          %1780 = vxpose.xlu0.b32.cont [8/16] %v1396, 128
          %1781 = vxpose.xlu0.b32.cont [9/16] %v1398, 128
          %1782 = vxpose.xlu0.b32.cont [10/16] %v1400, 128
          %1783 = vxpose.xlu0.b32.cont [11/16] %v1402, 128
          %1784 = vxpose.xlu0.b32.cont [12/16] %v1404, 128
          %1785 = vxpose.xlu0.b32.cont [13/16] %v1406, 128
          %1786 = vxpose.xlu0.b32.cont [14/16] %v1408, 128
          %1787 = vxpose.xlu0.b32.cont [15/16] %v1410, 128
          %1788 = vxpose.xlu0.b32.end [16/16] %v1412, 128
          %v1789 = vpop.trf.xlu0
          %v1790 = vpop.trf.xlu0
          %v1791 = vpop.trf.xlu0
          %v1792 = vpop.trf.xlu0
          %v1793 = vpop.trf.xlu0
          %v1794 = vpop.trf.xlu0
          %v1795 = vpop.trf.xlu0
          %v1796 = vpop.trf.xlu0
          %v1797 = vpop.trf.xlu0
          %v1798 = vpop.trf.xlu0
          %v1799 = vpop.trf.xlu0
          %v1800 = vpop.trf.xlu0
          %v1801 = vpop.trf.xlu0
          %v1802 = vpop.trf.xlu0
          %v1803 = vpop.trf.xlu0
          %v1804 = vpop.trf.xlu0
          %1805 = vxpose.xlu0.b32.start [1/16] %v1413, 128
          %1806 = vxpose.xlu0.b32.cont [2/16] %v1415, 128
          %1807 = vxpose.xlu0.b32.cont [3/16] 0.0, 128
          %1808 = vxpose.xlu0.b32.cont [4/16] 0.0, 128
          %1809 = vxpose.xlu0.b32.cont [5/16] 0.0, 128
          %1810 = vxpose.xlu0.b32.cont [6/16] 0.0, 128
          %1811 = vxpose.xlu0.b32.cont [7/16] 0.0, 128
          %1812 = vxpose.xlu0.b32.cont [8/16] 0.0, 128
          %1813 = vxpose.xlu0.b32.cont [9/16] 0.0, 128
          %1814 = vxpose.xlu0.b32.cont [10/16] 0.0, 128
          %1815 = vxpose.xlu0.b32.cont [11/16] 0.0, 128
          %1816 = vxpose.xlu0.b32.cont [12/16] 0.0, 128
          %1817 = vxpose.xlu0.b32.cont [13/16] 0.0, 128
          %1818 = vxpose.xlu0.b32.cont [14/16] 0.0, 128
          %1819 = vxpose.xlu0.b32.cont [15/16] 0.0, 128
          %1820 = vxpose.xlu0.b32.end [16/16] 0.0, 128
          %v1821 = vpop.trf.xlu0
          %v1822 = vpop.trf.xlu0
          %v1823 = vpop.trf.xlu0
          %v1824 = vpop.trf.xlu0
          %v1825 = vpop.trf.xlu0
          %v1826 = vpop.trf.xlu0
          %v1827 = vpop.trf.xlu0
          %v1828 = vpop.trf.xlu0
          %v1829 = vpop.trf.xlu0
          %v1830 = vpop.trf.xlu0
          %v1831 = vpop.trf.xlu0
          %v1832 = vpop.trf.xlu0
          %v1833 = vpop.trf.xlu0
          %v1834 = vpop.trf.xlu0
          %v1835 = vpop.trf.xlu0
          %v1836 = vpop.trf.xlu0
          %1837 = vxpose.xlu0.b32.start [1/16] %v1414, 128
          %1838 = vxpose.xlu0.b32.cont [2/16] %v1416, 128
          %1839 = vxpose.xlu0.b32.cont [3/16] 0.0, 128
          %1840 = vxpose.xlu0.b32.cont [4/16] 0.0, 128
          %1841 = vxpose.xlu0.b32.cont [5/16] 0.0, 128
          %1842 = vxpose.xlu0.b32.cont [6/16] 0.0, 128
          %1843 = vxpose.xlu0.b32.cont [7/16] 0.0, 128
          %1844 = vxpose.xlu0.b32.cont [8/16] 0.0, 128
          %1845 = vxpose.xlu0.b32.cont [9/16] 0.0, 128
          %1846 = vxpose.xlu0.b32.cont [10/16] 0.0, 128
          %1847 = vxpose.xlu0.b32.cont [11/16] 0.0, 128
          %1848 = vxpose.xlu0.b32.cont [12/16] 0.0, 128
          %1849 = vxpose.xlu0.b32.cont [13/16] 0.0, 128
          %1850 = vxpose.xlu0.b32.cont [14/16] 0.0, 128
          %1851 = vxpose.xlu0.b32.cont [15/16] 0.0, 128
          %1852 = vxpose.xlu0.b32.end [16/16] 0.0, 128
          %v1853 = vpop.trf.xlu0
          %v1854 = vpop.trf.xlu0
          %v1855 = vpop.trf.xlu0
          %v1856 = vpop.trf.xlu0
          %v1857 = vpop.trf.xlu0
          %v1858 = vpop.trf.xlu0
          %v1859 = vpop.trf.xlu0
          %v1860 = vpop.trf.xlu0
          %v1861 = vpop.trf.xlu0
          %v1862 = vpop.trf.xlu0
          %v1863 = vpop.trf.xlu0
          %v1864 = vpop.trf.xlu0
          %v1865 = vpop.trf.xlu0
          %v1866 = vpop.trf.xlu0
          %v1867 = vpop.trf.xlu0
          %v1868 = vpop.trf.xlu0
          %vm1869 = vcmask 130048
          %v1871 = vsel %vm1869, %v1821, 0
          %v1874 = vsel %vm1869, %v1822, 0
          %v1877 = vsel %vm1869, %v1823, 0
          %v1880 = vsel %vm1869, %v1824, 0
          %v1883 = vsel %vm1869, %v1825, 0
          %v1886 = vsel %vm1869, %v1826, 0
          %v1889 = vsel %vm1869, %v1827, 0
          %v1892 = vsel %vm1869, %v1828, 0
          %v1895 = vsel %vm1869, %v1829, 0
          %v1898 = vsel %vm1869, %v1830, 0
          %v1901 = vsel %vm1869, %v1831, 0
          %v1904 = vsel %vm1869, %v1832, 0
          %v1907 = vsel %vm1869, %v1833, 0
          %v1910 = vsel %vm1869, %v1834, 0
          %v1913 = vsel %vm1869, %v1835, 0
          %v1916 = vsel %vm1869, %v1836, 0
          %v1919 = vsel %vm1869, %v1853, 0
          %v1922 = vsel %vm1869, %v1854, 0
          %v1925 = vsel %vm1869, %v1855, 0
          %v1928 = vsel %vm1869, %v1856, 0
          %v1931 = vsel %vm1869, %v1857, 0
          %v1934 = vsel %vm1869, %v1858, 0
          %v1937 = vsel %vm1869, %v1859, 0
          %v1940 = vsel %vm1869, %v1860, 0
          %v1943 = vsel %vm1869, %v1861, 0
          %v1946 = vsel %vm1869, %v1862, 0
          %v1949 = vsel %vm1869, %v1863, 0
          %v1952 = vsel %vm1869, %v1864, 0
          %v1955 = vsel %vm1869, %v1865, 0
          %v1958 = vsel %vm1869, %v1866, 0
          %v1961 = vsel %vm1869, %v1867, 0
          %v1964 = vsel %vm1869, %v1868, 0
          %1966 = vmatpush.msra.mxu0 %v1447
          %1967 = vmatpush.msra.mxu0 %v1445
          %1968 = vmatpush.msra.mxu0 %v1443
          %1969 = vmatpush.msra.mxu0 %v1441
          %1970 = vmatpush.msra.mxu0 %v1439
          %1971 = vmatpush.msra.mxu0 %v1437
          %1972 = vmatpush.msra.mxu0 %v1435
          %1973 = vmatpush.msra.mxu0 %v1433
          %1974 = vmatpush.msra.mxu0 %v1431
          %1975 = vmatpush.msra.mxu0 %v1429
          %1976 = vmatpush.msra.mxu0 %v1427
          %1977 = vmatpush.msra.mxu0 %v1425
          %1978 = vmatpush.msra.mxu0 %v1423
          %1979 = vmatpush.msra.mxu0 %v1421
          %1980 = vmatpush.msra.mxu0 %v1419
          %1981 = vmatpush.msra.mxu0 %v1417
          %1982 = vmatmul.f32.gmra.mxu0 %v1565
          %v1983 = vpop.f32.mrf.mxu0
          %v1984 = vadd.f32 0.0, %v1983
          %1985 = vmatmul.f32.gmra.mxu0 %v1566
          %v1986 = vpop.f32.mrf.mxu0
          %v1987 = vadd.f32 0.0, %v1986
          %1988 = vmatmul.f32.gmra.mxu0 %v1567
          %v1989 = vpop.f32.mrf.mxu0
          %v1990 = vadd.f32 0.0, %v1989
          %1991 = vmatmul.f32.gmra.mxu0 %v1568
          %v1992 = vpop.f32.mrf.mxu0
          %v1993 = vadd.f32 0.0, %v1992
          %1994 = vmatmul.f32.gmra.mxu0 %v1569
          %v1995 = vpop.f32.mrf.mxu0
          %v1996 = vadd.f32 0.0, %v1995
          %1997 = vmatmul.f32.gmra.mxu0 %v1570
          %v1998 = vpop.f32.mrf.mxu0
          %v1999 = vadd.f32 0.0, %v1998
          %2000 = vmatmul.f32.gmra.mxu0 %v1571
          %v2001 = vpop.f32.mrf.mxu0
          %v2002 = vadd.f32 0.0, %v2001
          %2003 = vmatmul.f32.gmra.mxu0 %v1572
          %v2004 = vpop.f32.mrf.mxu0
          %v2005 = vadd.f32 0.0, %v2004
          %2006 = vmatmul.f32.gmra.mxu0 %v1573
          %v2007 = vpop.f32.mrf.mxu0
          %v2008 = vadd.f32 0.0, %v2007
          %2009 = vmatmul.f32.gmra.mxu0 %v1574
          %v2010 = vpop.f32.mrf.mxu0
          %v2011 = vadd.f32 0.0, %v2010
          %2012 = vmatmul.f32.gmra.mxu0 %v1575
          %v2013 = vpop.f32.mrf.mxu0
          %v2014 = vadd.f32 0.0, %v2013
          %2015 = vmatmul.f32.gmra.mxu0 %v1576
          %v2016 = vpop.f32.mrf.mxu0
          %v2017 = vadd.f32 0.0, %v2016
          %2018 = vmatmul.f32.gmra.mxu0 %v1577
          %v2019 = vpop.f32.mrf.mxu0
          %v2020 = vadd.f32 0.0, %v2019
          %2021 = vmatmul.f32.gmra.mxu0 %v1578
          %v2022 = vpop.f32.mrf.mxu0
          %v2023 = vadd.f32 0.0, %v2022
          %2024 = vmatmul.f32.gmra.mxu0 %v1579
          %v2025 = vpop.f32.mrf.mxu0
          %v2026 = vadd.f32 0.0, %v2025
          %2027 = vmatmul.f32.gmra.mxu0 %v1580
          %v2028 = vpop.f32.mrf.mxu0
          %v2029 = vadd.f32 0.0, %v2028
          %2030 = vmatmul.f32.gmra.mxu0 %v1597
          %v2031 = vpop.f32.mrf.mxu0
          %v2032 = vadd.f32 0.0, %v2031
          %2033 = vmatmul.f32.gmra.mxu0 %v1598
          %v2034 = vpop.f32.mrf.mxu0
          %v2035 = vadd.f32 0.0, %v2034
          %2036 = vmatmul.f32.gmra.mxu0 %v1599
          %v2037 = vpop.f32.mrf.mxu0
          %v2038 = vadd.f32 0.0, %v2037
          %2039 = vmatmul.f32.gmra.mxu0 %v1600
          %v2040 = vpop.f32.mrf.mxu0
          %v2041 = vadd.f32 0.0, %v2040
          %2042 = vmatmul.f32.gmra.mxu0 %v1601
          %v2043 = vpop.f32.mrf.mxu0
          %v2044 = vadd.f32 0.0, %v2043
          %2045 = vmatmul.f32.gmra.mxu0 %v1602
          %v2046 = vpop.f32.mrf.mxu0
          %v2047 = vadd.f32 0.0, %v2046
          %2048 = vmatmul.f32.gmra.mxu0 %v1603
          %v2049 = vpop.f32.mrf.mxu0
          %v2050 = vadd.f32 0.0, %v2049
          %2051 = vmatmul.f32.gmra.mxu0 %v1604
          %v2052 = vpop.f32.mrf.mxu0
          %v2053 = vadd.f32 0.0, %v2052
          %2054 = vmatmul.f32.gmra.mxu0 %v1605
          %v2055 = vpop.f32.mrf.mxu0
          %v2056 = vadd.f32 0.0, %v2055
          %2057 = vmatmul.f32.gmra.mxu0 %v1606
          %v2058 = vpop.f32.mrf.mxu0
          %v2059 = vadd.f32 0.0, %v2058
          %2060 = vmatmul.f32.gmra.mxu0 %v1607
          %v2061 = vpop.f32.mrf.mxu0
          %v2062 = vadd.f32 0.0, %v2061
          %2063 = vmatmul.f32.gmra.mxu0 %v1608
          %v2064 = vpop.f32.mrf.mxu0
          %v2065 = vadd.f32 0.0, %v2064
          %2066 = vmatmul.f32.gmra.mxu0 %v1609
          %v2067 = vpop.f32.mrf.mxu0
          %v2068 = vadd.f32 0.0, %v2067
          %2069 = vmatmul.f32.gmra.mxu0 %v1610
          %v2070 = vpop.f32.mrf.mxu0
          %v2071 = vadd.f32 0.0, %v2070
          %2072 = vmatmul.f32.gmra.mxu0 %v1611
          %v2073 = vpop.f32.mrf.mxu0
          %v2074 = vadd.f32 0.0, %v2073
          %2075 = vmatmul.f32.gmra.mxu0 %v1612
          %v2076 = vpop.f32.mrf.mxu0
          %v2077 = vadd.f32 0.0, %v2076
          %2078 = vdwg.mxu0
          %2079 = vmatpush.msra.mxu0 %v1479
          %2080 = vmatpush.msra.mxu0 %v1477
          %2081 = vmatpush.msra.mxu0 %v1475
          %2082 = vmatpush.msra.mxu0 %v1473
          %2083 = vmatpush.msra.mxu0 %v1471
          %2084 = vmatpush.msra.mxu0 %v1469
          %2085 = vmatpush.msra.mxu0 %v1467
          %2086 = vmatpush.msra.mxu0 %v1465
          %2087 = vmatpush.msra.mxu0 %v1463
          %2088 = vmatpush.msra.mxu0 %v1461
          %2089 = vmatpush.msra.mxu0 %v1459
          %2090 = vmatpush.msra.mxu0 %v1457
          %2091 = vmatpush.msra.mxu0 %v1455
          %2092 = vmatpush.msra.mxu0 %v1453
          %2093 = vmatpush.msra.mxu0 %v1451
          %2094 = vmatpush.msra.mxu0 %v1449
          %2095 = vmatmul.f32.gmra.mxu0 %v1629
          %v2096 = vpop.f32.mrf.mxu0
          %v2097 = vadd.f32 %v1984, %v2096
          %2098 = vmatmul.f32.gmra.mxu0 %v1630
          %v2099 = vpop.f32.mrf.mxu0
          %v2100 = vadd.f32 %v1987, %v2099
          %2101 = vmatmul.f32.gmra.mxu0 %v1631
          %v2102 = vpop.f32.mrf.mxu0
          %v2103 = vadd.f32 %v1990, %v2102
          %2104 = vmatmul.f32.gmra.mxu0 %v1632
          %v2105 = vpop.f32.mrf.mxu0
          %v2106 = vadd.f32 %v1993, %v2105
          %2107 = vmatmul.f32.gmra.mxu0 %v1633
          %v2108 = vpop.f32.mrf.mxu0
          %v2109 = vadd.f32 %v1996, %v2108
          %2110 = vmatmul.f32.gmra.mxu0 %v1634
          %v2111 = vpop.f32.mrf.mxu0
          %v2112 = vadd.f32 %v1999, %v2111
          %2113 = vmatmul.f32.gmra.mxu0 %v1635
          %v2114 = vpop.f32.mrf.mxu0
          %v2115 = vadd.f32 %v2002, %v2114
          %2116 = vmatmul.f32.gmra.mxu0 %v1636
          %v2117 = vpop.f32.mrf.mxu0
          %v2118 = vadd.f32 %v2005, %v2117
          %2119 = vmatmul.f32.gmra.mxu0 %v1637
          %v2120 = vpop.f32.mrf.mxu0
          %v2121 = vadd.f32 %v2008, %v2120
          %2122 = vmatmul.f32.gmra.mxu0 %v1638
          %v2123 = vpop.f32.mrf.mxu0
          %v2124 = vadd.f32 %v2011, %v2123
          %2125 = vmatmul.f32.gmra.mxu0 %v1639
          %v2126 = vpop.f32.mrf.mxu0
          %v2127 = vadd.f32 %v2014, %v2126
          %2128 = vmatmul.f32.gmra.mxu0 %v1640
          %v2129 = vpop.f32.mrf.mxu0
          %v2130 = vadd.f32 %v2017, %v2129
          %2131 = vmatmul.f32.gmra.mxu0 %v1641
          %v2132 = vpop.f32.mrf.mxu0
          %v2133 = vadd.f32 %v2020, %v2132
          %2134 = vmatmul.f32.gmra.mxu0 %v1642
          %v2135 = vpop.f32.mrf.mxu0
          %v2136 = vadd.f32 %v2023, %v2135
          %2137 = vmatmul.f32.gmra.mxu0 %v1643
          %v2138 = vpop.f32.mrf.mxu0
          %v2139 = vadd.f32 %v2026, %v2138
          %2140 = vmatmul.f32.gmra.mxu0 %v1644
          %v2141 = vpop.f32.mrf.mxu0
          %v2142 = vadd.f32 %v2029, %v2141
          %2143 = vmatmul.f32.gmra.mxu0 %v1661
          %v2144 = vpop.f32.mrf.mxu0
          %v2145 = vadd.f32 %v2032, %v2144
          %2146 = vmatmul.f32.gmra.mxu0 %v1662
          %v2147 = vpop.f32.mrf.mxu0
          %v2148 = vadd.f32 %v2035, %v2147
          %2149 = vmatmul.f32.gmra.mxu0 %v1663
          %v2150 = vpop.f32.mrf.mxu0
          %v2151 = vadd.f32 %v2038, %v2150
          %2152 = vmatmul.f32.gmra.mxu0 %v1664
          %v2153 = vpop.f32.mrf.mxu0
          %v2154 = vadd.f32 %v2041, %v2153
          %2155 = vmatmul.f32.gmra.mxu0 %v1665
          %v2156 = vpop.f32.mrf.mxu0
          %v2157 = vadd.f32 %v2044, %v2156
          %2158 = vmatmul.f32.gmra.mxu0 %v1666
          %v2159 = vpop.f32.mrf.mxu0
          %v2160 = vadd.f32 %v2047, %v2159
          %2161 = vmatmul.f32.gmra.mxu0 %v1667
          %v2162 = vpop.f32.mrf.mxu0
          %v2163 = vadd.f32 %v2050, %v2162
          %2164 = vmatmul.f32.gmra.mxu0 %v1668
          %v2165 = vpop.f32.mrf.mxu0
          %v2166 = vadd.f32 %v2053, %v2165
          %2167 = vmatmul.f32.gmra.mxu0 %v1669
          %v2168 = vpop.f32.mrf.mxu0
          %v2169 = vadd.f32 %v2056, %v2168
          %2170 = vmatmul.f32.gmra.mxu0 %v1670
          %v2171 = vpop.f32.mrf.mxu0
          %v2172 = vadd.f32 %v2059, %v2171
          %2173 = vmatmul.f32.gmra.mxu0 %v1671
          %v2174 = vpop.f32.mrf.mxu0
          %v2175 = vadd.f32 %v2062, %v2174
          %2176 = vmatmul.f32.gmra.mxu0 %v1672
          %v2177 = vpop.f32.mrf.mxu0
          %v2178 = vadd.f32 %v2065, %v2177
          %2179 = vmatmul.f32.gmra.mxu0 %v1673
          %v2180 = vpop.f32.mrf.mxu0
          %v2181 = vadd.f32 %v2068, %v2180
          %2182 = vmatmul.f32.gmra.mxu0 %v1674
          %v2183 = vpop.f32.mrf.mxu0
          %v2184 = vadd.f32 %v2071, %v2183
          %2185 = vmatmul.f32.gmra.mxu0 %v1675
          %v2186 = vpop.f32.mrf.mxu0
          %v2187 = vadd.f32 %v2074, %v2186
          %2188 = vmatmul.f32.gmra.mxu0 %v1676
          %v2189 = vpop.f32.mrf.mxu0
          %v2190 = vadd.f32 %v2077, %v2189
          %2191 = vdwg.mxu0
          %2192 = vmatpush.msra.mxu0 %v1511
          %2193 = vmatpush.msra.mxu0 %v1509
          %2194 = vmatpush.msra.mxu0 %v1507
          %2195 = vmatpush.msra.mxu0 %v1505
          %2196 = vmatpush.msra.mxu0 %v1503
          %2197 = vmatpush.msra.mxu0 %v1501
          %2198 = vmatpush.msra.mxu0 %v1499
          %2199 = vmatpush.msra.mxu0 %v1497
          %2200 = vmatpush.msra.mxu0 %v1495
          %2201 = vmatpush.msra.mxu0 %v1493
          %2202 = vmatpush.msra.mxu0 %v1491
          %2203 = vmatpush.msra.mxu0 %v1489
          %2204 = vmatpush.msra.mxu0 %v1487
          %2205 = vmatpush.msra.mxu0 %v1485
          %2206 = vmatpush.msra.mxu0 %v1483
          %2207 = vmatpush.msra.mxu0 %v1481
          %2208 = vmatmul.f32.gmra.mxu0 %v1693
          %v2209 = vpop.f32.mrf.mxu0
          %v2210 = vadd.f32 %v2097, %v2209
          %2211 = vmatmul.f32.gmra.mxu0 %v1694
          %v2212 = vpop.f32.mrf.mxu0
          %v2213 = vadd.f32 %v2100, %v2212
          %2214 = vmatmul.f32.gmra.mxu0 %v1695
          %v2215 = vpop.f32.mrf.mxu0
          %v2216 = vadd.f32 %v2103, %v2215
          %2217 = vmatmul.f32.gmra.mxu0 %v1696
          %v2218 = vpop.f32.mrf.mxu0
          %v2219 = vadd.f32 %v2106, %v2218
          %2220 = vmatmul.f32.gmra.mxu0 %v1697
          %v2221 = vpop.f32.mrf.mxu0
          %v2222 = vadd.f32 %v2109, %v2221
          %2223 = vmatmul.f32.gmra.mxu0 %v1698
          %v2224 = vpop.f32.mrf.mxu0
          %v2225 = vadd.f32 %v2112, %v2224
          %2226 = vmatmul.f32.gmra.mxu0 %v1699
          %v2227 = vpop.f32.mrf.mxu0
          %v2228 = vadd.f32 %v2115, %v2227
          %2229 = vmatmul.f32.gmra.mxu0 %v1700
          %v2230 = vpop.f32.mrf.mxu0
          %v2231 = vadd.f32 %v2118, %v2230
          %2232 = vmatmul.f32.gmra.mxu0 %v1701
          %v2233 = vpop.f32.mrf.mxu0
          %v2234 = vadd.f32 %v2121, %v2233
          %2235 = vmatmul.f32.gmra.mxu0 %v1702
          %v2236 = vpop.f32.mrf.mxu0
          %v2237 = vadd.f32 %v2124, %v2236
          %2238 = vmatmul.f32.gmra.mxu0 %v1703
          %v2239 = vpop.f32.mrf.mxu0
          %v2240 = vadd.f32 %v2127, %v2239
          %2241 = vmatmul.f32.gmra.mxu0 %v1704
          %v2242 = vpop.f32.mrf.mxu0
          %v2243 = vadd.f32 %v2130, %v2242
          %2244 = vmatmul.f32.gmra.mxu0 %v1705
          %v2245 = vpop.f32.mrf.mxu0
          %v2246 = vadd.f32 %v2133, %v2245
          %2247 = vmatmul.f32.gmra.mxu0 %v1706
          %v2248 = vpop.f32.mrf.mxu0
          %v2249 = vadd.f32 %v2136, %v2248
          %2250 = vmatmul.f32.gmra.mxu0 %v1707
          %v2251 = vpop.f32.mrf.mxu0
          %v2252 = vadd.f32 %v2139, %v2251
          %2253 = vmatmul.f32.gmra.mxu0 %v1708
          %v2254 = vpop.f32.mrf.mxu0
          %v2255 = vadd.f32 %v2142, %v2254
          %2256 = vmatmul.f32.gmra.mxu0 %v1725
          %v2257 = vpop.f32.mrf.mxu0
          %v2258 = vadd.f32 %v2145, %v2257
          %2259 = vmatmul.f32.gmra.mxu0 %v1726
          %v2260 = vpop.f32.mrf.mxu0
          %v2261 = vadd.f32 %v2148, %v2260
          %2262 = vmatmul.f32.gmra.mxu0 %v1727
          %v2263 = vpop.f32.mrf.mxu0
          %v2264 = vadd.f32 %v2151, %v2263
          %2265 = vmatmul.f32.gmra.mxu0 %v1728
          %v2266 = vpop.f32.mrf.mxu0
          %v2267 = vadd.f32 %v2154, %v2266
          %2268 = vmatmul.f32.gmra.mxu0 %v1729
          %v2269 = vpop.f32.mrf.mxu0
          %v2270 = vadd.f32 %v2157, %v2269
          %2271 = vmatmul.f32.gmra.mxu0 %v1730
          %v2272 = vpop.f32.mrf.mxu0
          %v2273 = vadd.f32 %v2160, %v2272
          %2274 = vmatmul.f32.gmra.mxu0 %v1731
          %v2275 = vpop.f32.mrf.mxu0
          %v2276 = vadd.f32 %v2163, %v2275
          %2277 = vmatmul.f32.gmra.mxu0 %v1732
          %v2278 = vpop.f32.mrf.mxu0
          %v2279 = vadd.f32 %v2166, %v2278
          %2280 = vmatmul.f32.gmra.mxu0 %v1733
          %v2281 = vpop.f32.mrf.mxu0
          %v2282 = vadd.f32 %v2169, %v2281
          %2283 = vmatmul.f32.gmra.mxu0 %v1734
          %v2284 = vpop.f32.mrf.mxu0
          %v2285 = vadd.f32 %v2172, %v2284
          %2286 = vmatmul.f32.gmra.mxu0 %v1735
          %v2287 = vpop.f32.mrf.mxu0
          %v2288 = vadd.f32 %v2175, %v2287
          %2289 = vmatmul.f32.gmra.mxu0 %v1736
          %v2290 = vpop.f32.mrf.mxu0
          %v2291 = vadd.f32 %v2178, %v2290
          %2292 = vmatmul.f32.gmra.mxu0 %v1737
          %v2293 = vpop.f32.mrf.mxu0
          %v2294 = vadd.f32 %v2181, %v2293
          %2295 = vmatmul.f32.gmra.mxu0 %v1738
          %v2296 = vpop.f32.mrf.mxu0
          %v2297 = vadd.f32 %v2184, %v2296
          %2298 = vmatmul.f32.gmra.mxu0 %v1739
          %v2299 = vpop.f32.mrf.mxu0
          %v2300 = vadd.f32 %v2187, %v2299
          %2301 = vmatmul.f32.gmra.mxu0 %v1740
          %v2302 = vpop.f32.mrf.mxu0
          %v2303 = vadd.f32 %v2190, %v2302
          %2304 = vdwg.mxu0
          %2305 = vmatpush.msra.mxu0 %v1543
          %2306 = vmatpush.msra.mxu0 %v1541
          %2307 = vmatpush.msra.mxu0 %v1539
          %2308 = vmatpush.msra.mxu0 %v1537
          %2309 = vmatpush.msra.mxu0 %v1535
          %2310 = vmatpush.msra.mxu0 %v1533
          %2311 = vmatpush.msra.mxu0 %v1531
          %2312 = vmatpush.msra.mxu0 %v1529
          %2313 = vmatpush.msra.mxu0 %v1527
          %2314 = vmatpush.msra.mxu0 %v1525
          %2315 = vmatpush.msra.mxu0 %v1523
          %2316 = vmatpush.msra.mxu0 %v1521
          %2317 = vmatpush.msra.mxu0 %v1519
          %2318 = vmatpush.msra.mxu0 %v1517
          %2319 = vmatpush.msra.mxu0 %v1515
          %2320 = vmatpush.msra.mxu0 %v1513
          %2321 = vmatmul.f32.gmra.mxu0 %v1757
          %v2322 = vpop.f32.mrf.mxu0
          %v2323 = vadd.f32 %v2210, %v2322
          %2324 = vmatmul.f32.gmra.mxu0 %v1758
          %v2325 = vpop.f32.mrf.mxu0
          %v2326 = vadd.f32 %v2213, %v2325
          %2327 = vmatmul.f32.gmra.mxu0 %v1759
          %v2328 = vpop.f32.mrf.mxu0
          %v2329 = vadd.f32 %v2216, %v2328
          %2330 = vmatmul.f32.gmra.mxu0 %v1760
          %v2331 = vpop.f32.mrf.mxu0
          %v2332 = vadd.f32 %v2219, %v2331
          %2333 = vmatmul.f32.gmra.mxu0 %v1761
          %v2334 = vpop.f32.mrf.mxu0
          %v2335 = vadd.f32 %v2222, %v2334
          %2336 = vmatmul.f32.gmra.mxu0 %v1762
          %v2337 = vpop.f32.mrf.mxu0
          %v2338 = vadd.f32 %v2225, %v2337
          %2339 = vmatmul.f32.gmra.mxu0 %v1763
          %v2340 = vpop.f32.mrf.mxu0
          %v2341 = vadd.f32 %v2228, %v2340
          %2342 = vmatmul.f32.gmra.mxu0 %v1764
          %v2343 = vpop.f32.mrf.mxu0
          %v2344 = vadd.f32 %v2231, %v2343
          %2345 = vmatmul.f32.gmra.mxu0 %v1765
          %v2346 = vpop.f32.mrf.mxu0
          %v2347 = vadd.f32 %v2234, %v2346
          %2348 = vmatmul.f32.gmra.mxu0 %v1766
          %v2349 = vpop.f32.mrf.mxu0
          %v2350 = vadd.f32 %v2237, %v2349
          %2351 = vmatmul.f32.gmra.mxu0 %v1767
          %v2352 = vpop.f32.mrf.mxu0
          %v2353 = vadd.f32 %v2240, %v2352
          %2354 = vmatmul.f32.gmra.mxu0 %v1768
          %v2355 = vpop.f32.mrf.mxu0
          %v2356 = vadd.f32 %v2243, %v2355
          %2357 = vmatmul.f32.gmra.mxu0 %v1769
          %v2358 = vpop.f32.mrf.mxu0
          %v2359 = vadd.f32 %v2246, %v2358
          %2360 = vmatmul.f32.gmra.mxu0 %v1770
          %v2361 = vpop.f32.mrf.mxu0
          %v2362 = vadd.f32 %v2249, %v2361
          %2363 = vmatmul.f32.gmra.mxu0 %v1771
          %v2364 = vpop.f32.mrf.mxu0
          %v2365 = vadd.f32 %v2252, %v2364
          %2366 = vmatmul.f32.gmra.mxu0 %v1772
          %v2367 = vpop.f32.mrf.mxu0
          %v2368 = vadd.f32 %v2255, %v2367
          %2369 = vmatmul.f32.gmra.mxu0 %v1789
          %v2370 = vpop.f32.mrf.mxu0
          %v2371 = vadd.f32 %v2258, %v2370
          %2372 = vmatmul.f32.gmra.mxu0 %v1790
          %v2373 = vpop.f32.mrf.mxu0
          %v2374 = vadd.f32 %v2261, %v2373
          %2375 = vmatmul.f32.gmra.mxu0 %v1791
          %v2376 = vpop.f32.mrf.mxu0
          %v2377 = vadd.f32 %v2264, %v2376
          %2378 = vmatmul.f32.gmra.mxu0 %v1792
          %v2379 = vpop.f32.mrf.mxu0
          %v2380 = vadd.f32 %v2267, %v2379
          %2381 = vmatmul.f32.gmra.mxu0 %v1793
          %v2382 = vpop.f32.mrf.mxu0
          %v2383 = vadd.f32 %v2270, %v2382
          %2384 = vmatmul.f32.gmra.mxu0 %v1794
          %v2385 = vpop.f32.mrf.mxu0
          %v2386 = vadd.f32 %v2273, %v2385
          %2387 = vmatmul.f32.gmra.mxu0 %v1795
          %v2388 = vpop.f32.mrf.mxu0
          %v2389 = vadd.f32 %v2276, %v2388
          %2390 = vmatmul.f32.gmra.mxu0 %v1796
          %v2391 = vpop.f32.mrf.mxu0
          %v2392 = vadd.f32 %v2279, %v2391
          %2393 = vmatmul.f32.gmra.mxu0 %v1797
          %v2394 = vpop.f32.mrf.mxu0
          %v2395 = vadd.f32 %v2282, %v2394
          %2396 = vmatmul.f32.gmra.mxu0 %v1798
          %v2397 = vpop.f32.mrf.mxu0
          %v2398 = vadd.f32 %v2285, %v2397
          %2399 = vmatmul.f32.gmra.mxu0 %v1799
          %v2400 = vpop.f32.mrf.mxu0
          %v2401 = vadd.f32 %v2288, %v2400
          %2402 = vmatmul.f32.gmra.mxu0 %v1800
          %v2403 = vpop.f32.mrf.mxu0
          %v2404 = vadd.f32 %v2291, %v2403
          %2405 = vmatmul.f32.gmra.mxu0 %v1801
          %v2406 = vpop.f32.mrf.mxu0
          %v2407 = vadd.f32 %v2294, %v2406
          %2408 = vmatmul.f32.gmra.mxu0 %v1802
          %v2409 = vpop.f32.mrf.mxu0
          %v2410 = vadd.f32 %v2297, %v2409
          %2411 = vmatmul.f32.gmra.mxu0 %v1803
          %v2412 = vpop.f32.mrf.mxu0
          %v2413 = vadd.f32 %v2300, %v2412
          %2414 = vmatmul.f32.gmra.mxu0 %v1804
          %v2415 = vpop.f32.mrf.mxu0
          %v2416 = vadd.f32 %v2303, %v2415
          %2417 = vdwg.mxu0
          %2418 = vmatpush.msra.mxu0 0.0
          %2419 = vmatpush.msra.mxu0 0.0
          %2420 = vmatpush.msra.mxu0 0.0
          %2421 = vmatpush.msra.mxu0 0.0
          %2422 = vmatpush.msra.mxu0 0.0
          %2423 = vmatpush.msra.mxu0 0.0
          %2424 = vmatpush.msra.mxu0 0.0
          %2425 = vmatpush.msra.mxu0 0.0
          %2426 = vmatpush.msra.mxu0 0.0
          %2427 = vmatpush.msra.mxu0 0.0
          %2428 = vmatpush.msra.mxu0 0.0
          %2429 = vmatpush.msra.mxu0 0.0
          %2430 = vmatpush.msra.mxu0 0.0
          %2431 = vmatpush.msra.mxu0 0.0
          %2432 = vmatpush.msra.mxu0 %v1547
          %2433 = vmatpush.msra.mxu0 %v1545
          %2434 = vmatmul.f32.gmra.mxu0 %v1871
          %v2435 = vpop.f32.mrf.mxu0
          %v2436 = vadd.f32 %v2323, %v2435
          %2437 = vmatmul.f32.gmra.mxu0 %v1874
          %v2438 = vpop.f32.mrf.mxu0
          %v2439 = vadd.f32 %v2326, %v2438
          %2440 = vmatmul.f32.gmra.mxu0 %v1877
          %v2441 = vpop.f32.mrf.mxu0
          %v2442 = vadd.f32 %v2329, %v2441
          %2443 = vmatmul.f32.gmra.mxu0 %v1880
          %v2444 = vpop.f32.mrf.mxu0
          %v2445 = vadd.f32 %v2332, %v2444
          %2446 = vmatmul.f32.gmra.mxu0 %v1883
          %v2447 = vpop.f32.mrf.mxu0
          %v2448 = vadd.f32 %v2335, %v2447
          %2449 = vmatmul.f32.gmra.mxu0 %v1886
          %v2450 = vpop.f32.mrf.mxu0
          %v2451 = vadd.f32 %v2338, %v2450
          %2452 = vmatmul.f32.gmra.mxu0 %v1889
          %v2453 = vpop.f32.mrf.mxu0
          %v2454 = vadd.f32 %v2341, %v2453
          %2455 = vmatmul.f32.gmra.mxu0 %v1892
          %v2456 = vpop.f32.mrf.mxu0
          %v2457 = vadd.f32 %v2344, %v2456
          %2458 = vmatmul.f32.gmra.mxu0 %v1895
          %v2459 = vpop.f32.mrf.mxu0
          %v2460 = vadd.f32 %v2347, %v2459
          %2461 = vmatmul.f32.gmra.mxu0 %v1898
          %v2462 = vpop.f32.mrf.mxu0
          %v2463 = vadd.f32 %v2350, %v2462
          %2464 = vmatmul.f32.gmra.mxu0 %v1901
          %v2465 = vpop.f32.mrf.mxu0
          %v2466 = vadd.f32 %v2353, %v2465
          %2467 = vmatmul.f32.gmra.mxu0 %v1904
          %v2468 = vpop.f32.mrf.mxu0
          %v2469 = vadd.f32 %v2356, %v2468
          %2470 = vmatmul.f32.gmra.mxu0 %v1907
          %v2471 = vpop.f32.mrf.mxu0
          %v2472 = vadd.f32 %v2359, %v2471
          %2473 = vmatmul.f32.gmra.mxu0 %v1910
          %v2474 = vpop.f32.mrf.mxu0
          %v2475 = vadd.f32 %v2362, %v2474
          %2476 = vmatmul.f32.gmra.mxu0 %v1913
          %v2477 = vpop.f32.mrf.mxu0
          %v2478 = vadd.f32 %v2365, %v2477
          %2479 = vmatmul.f32.gmra.mxu0 %v1916
          %v2480 = vpop.f32.mrf.mxu0
          %v2481 = vadd.f32 %v2368, %v2480
          %2482 = vmatmul.f32.gmra.mxu0 %v1919
          %v2483 = vpop.f32.mrf.mxu0
          %v2484 = vadd.f32 %v2371, %v2483
          %2485 = vmatmul.f32.gmra.mxu0 %v1922
          %v2486 = vpop.f32.mrf.mxu0
          %v2487 = vadd.f32 %v2374, %v2486
          %2488 = vmatmul.f32.gmra.mxu0 %v1925
          %v2489 = vpop.f32.mrf.mxu0
          %v2490 = vadd.f32 %v2377, %v2489
          %2491 = vmatmul.f32.gmra.mxu0 %v1928
          %v2492 = vpop.f32.mrf.mxu0
          %v2493 = vadd.f32 %v2380, %v2492
          %2494 = vmatmul.f32.gmra.mxu0 %v1931
          %v2495 = vpop.f32.mrf.mxu0
          %v2496 = vadd.f32 %v2383, %v2495
          %2497 = vmatmul.f32.gmra.mxu0 %v1934
          %v2498 = vpop.f32.mrf.mxu0
          %v2499 = vadd.f32 %v2386, %v2498
          %2500 = vmatmul.f32.gmra.mxu0 %v1937
          %v2501 = vpop.f32.mrf.mxu0
          %v2502 = vadd.f32 %v2389, %v2501
          %2503 = vmatmul.f32.gmra.mxu0 %v1940
          %v2504 = vpop.f32.mrf.mxu0
          %v2505 = vadd.f32 %v2392, %v2504
          %2506 = vmatmul.f32.gmra.mxu0 %v1943
          %v2507 = vpop.f32.mrf.mxu0
          %v2508 = vadd.f32 %v2395, %v2507
          %2509 = vmatmul.f32.gmra.mxu0 %v1946
          %v2510 = vpop.f32.mrf.mxu0
          %v2511 = vadd.f32 %v2398, %v2510
          %2512 = vmatmul.f32.gmra.mxu0 %v1949
          %v2513 = vpop.f32.mrf.mxu0
          %v2514 = vadd.f32 %v2401, %v2513
          %2515 = vmatmul.f32.gmra.mxu0 %v1952
          %v2516 = vpop.f32.mrf.mxu0
          %v2517 = vadd.f32 %v2404, %v2516
          %2518 = vmatmul.f32.gmra.mxu0 %v1955
          %v2519 = vpop.f32.mrf.mxu0
          %v2520 = vadd.f32 %v2407, %v2519
          %2521 = vmatmul.f32.gmra.mxu0 %v1958
          %v2522 = vpop.f32.mrf.mxu0
          %v2523 = vadd.f32 %v2410, %v2522
          %2524 = vmatmul.f32.gmra.mxu0 %v1961
          %v2525 = vpop.f32.mrf.mxu0
          %v2526 = vadd.f32 %v2413, %v2525
          %2527 = vmatmul.f32.gmra.mxu0 %v1964
          %v2528 = vpop.f32.mrf.mxu0
          %v2529 = vadd.f32 %v2416, %v2528
          %2530 = vdwg.mxu0
          %2531 = vmatpush.msra.mxu0 %v1448
          %2532 = vmatpush.msra.mxu0 %v1446
          %2533 = vmatpush.msra.mxu0 %v1444
          %2534 = vmatpush.msra.mxu0 %v1442
          %2535 = vmatpush.msra.mxu0 %v1440
          %2536 = vmatpush.msra.mxu0 %v1438
          %2537 = vmatpush.msra.mxu0 %v1436
          %2538 = vmatpush.msra.mxu0 %v1434
          %2539 = vmatpush.msra.mxu0 %v1432
          %2540 = vmatpush.msra.mxu0 %v1430
          %2541 = vmatpush.msra.mxu0 %v1428
          %2542 = vmatpush.msra.mxu0 %v1426
          %2543 = vmatpush.msra.mxu0 %v1424
          %2544 = vmatpush.msra.mxu0 %v1422
          %2545 = vmatpush.msra.mxu0 %v1420
          %2546 = vmatpush.msra.mxu0 %v1418
          %2547 = vmatmul.f32.gmra.mxu0 %v1565
          %v2548 = vpop.f32.mrf.mxu0
          %v2549 = vadd.f32 0.0, %v2548
          %2550 = vmatmul.f32.gmra.mxu0 %v1566
          %v2551 = vpop.f32.mrf.mxu0
          %v2552 = vadd.f32 0.0, %v2551
          %2553 = vmatmul.f32.gmra.mxu0 %v1567
          %v2554 = vpop.f32.mrf.mxu0
          %v2555 = vadd.f32 0.0, %v2554
          %2556 = vmatmul.f32.gmra.mxu0 %v1568
          %v2557 = vpop.f32.mrf.mxu0
          %v2558 = vadd.f32 0.0, %v2557
          %2559 = vmatmul.f32.gmra.mxu0 %v1569
          %v2560 = vpop.f32.mrf.mxu0
          %v2561 = vadd.f32 0.0, %v2560
          %2562 = vmatmul.f32.gmra.mxu0 %v1570
          %v2563 = vpop.f32.mrf.mxu0
          %v2564 = vadd.f32 0.0, %v2563
          %2565 = vmatmul.f32.gmra.mxu0 %v1571
          %v2566 = vpop.f32.mrf.mxu0
          %v2567 = vadd.f32 0.0, %v2566
          %2568 = vmatmul.f32.gmra.mxu0 %v1572
          %v2569 = vpop.f32.mrf.mxu0
          %v2570 = vadd.f32 0.0, %v2569
          %2571 = vmatmul.f32.gmra.mxu0 %v1573
          %v2572 = vpop.f32.mrf.mxu0
          %v2573 = vadd.f32 0.0, %v2572
          %2574 = vmatmul.f32.gmra.mxu0 %v1574
          %v2575 = vpop.f32.mrf.mxu0
          %v2576 = vadd.f32 0.0, %v2575
          %2577 = vmatmul.f32.gmra.mxu0 %v1575
          %v2578 = vpop.f32.mrf.mxu0
          %v2579 = vadd.f32 0.0, %v2578
          %2580 = vmatmul.f32.gmra.mxu0 %v1576
          %v2581 = vpop.f32.mrf.mxu0
          %v2582 = vadd.f32 0.0, %v2581
          %2583 = vmatmul.f32.gmra.mxu0 %v1577
          %v2584 = vpop.f32.mrf.mxu0
          %v2585 = vadd.f32 0.0, %v2584
          %2586 = vmatmul.f32.gmra.mxu0 %v1578
          %v2587 = vpop.f32.mrf.mxu0
          %v2588 = vadd.f32 0.0, %v2587
          %2589 = vmatmul.f32.gmra.mxu0 %v1579
          %v2590 = vpop.f32.mrf.mxu0
          %v2591 = vadd.f32 0.0, %v2590
          %2592 = vmatmul.f32.gmra.mxu0 %v1580
          %v2593 = vpop.f32.mrf.mxu0
          %v2594 = vadd.f32 0.0, %v2593
          %2595 = vmatmul.f32.gmra.mxu0 %v1597
          %v2596 = vpop.f32.mrf.mxu0
          %v2597 = vadd.f32 0.0, %v2596
          %2598 = vmatmul.f32.gmra.mxu0 %v1598
          %v2599 = vpop.f32.mrf.mxu0
          %v2600 = vadd.f32 0.0, %v2599
          %2601 = vmatmul.f32.gmra.mxu0 %v1599
          %v2602 = vpop.f32.mrf.mxu0
          %v2603 = vadd.f32 0.0, %v2602
          %2604 = vmatmul.f32.gmra.mxu0 %v1600
          %v2605 = vpop.f32.mrf.mxu0
          %v2606 = vadd.f32 0.0, %v2605
          %2607 = vmatmul.f32.gmra.mxu0 %v1601
          %v2608 = vpop.f32.mrf.mxu0
          %v2609 = vadd.f32 0.0, %v2608
          %2610 = vmatmul.f32.gmra.mxu0 %v1602
          %v2611 = vpop.f32.mrf.mxu0
          %v2612 = vadd.f32 0.0, %v2611
          %2613 = vmatmul.f32.gmra.mxu0 %v1603
          %v2614 = vpop.f32.mrf.mxu0
          %v2615 = vadd.f32 0.0, %v2614
          %2616 = vmatmul.f32.gmra.mxu0 %v1604
          %v2617 = vpop.f32.mrf.mxu0
          %v2618 = vadd.f32 0.0, %v2617
          %2619 = vmatmul.f32.gmra.mxu0 %v1605
          %v2620 = vpop.f32.mrf.mxu0
          %v2621 = vadd.f32 0.0, %v2620
          %2622 = vmatmul.f32.gmra.mxu0 %v1606
          %v2623 = vpop.f32.mrf.mxu0
          %v2624 = vadd.f32 0.0, %v2623
          %2625 = vmatmul.f32.gmra.mxu0 %v1607
          %v2626 = vpop.f32.mrf.mxu0
          %v2627 = vadd.f32 0.0, %v2626
          %2628 = vmatmul.f32.gmra.mxu0 %v1608
          %v2629 = vpop.f32.mrf.mxu0
          %v2630 = vadd.f32 0.0, %v2629
          %2631 = vmatmul.f32.gmra.mxu0 %v1609
          %v2632 = vpop.f32.mrf.mxu0
          %v2633 = vadd.f32 0.0, %v2632
          %2634 = vmatmul.f32.gmra.mxu0 %v1610
          %v2635 = vpop.f32.mrf.mxu0
          %v2636 = vadd.f32 0.0, %v2635
          %2637 = vmatmul.f32.gmra.mxu0 %v1611
          %v2638 = vpop.f32.mrf.mxu0
          %v2639 = vadd.f32 0.0, %v2638
          %2640 = vmatmul.f32.gmra.mxu0 %v1612
          %v2641 = vpop.f32.mrf.mxu0
          %v2642 = vadd.f32 0.0, %v2641
          %2643 = vdwg.mxu0
          %2644 = vmatpush.msra.mxu0 %v1480
          %2645 = vmatpush.msra.mxu0 %v1478
          %2646 = vmatpush.msra.mxu0 %v1476
          %2647 = vmatpush.msra.mxu0 %v1474
          %2648 = vmatpush.msra.mxu0 %v1472
          %2649 = vmatpush.msra.mxu0 %v1470
          %2650 = vmatpush.msra.mxu0 %v1468
          %2651 = vmatpush.msra.mxu0 %v1466
          %2652 = vmatpush.msra.mxu0 %v1464
          %2653 = vmatpush.msra.mxu0 %v1462
          %2654 = vmatpush.msra.mxu0 %v1460
          %2655 = vmatpush.msra.mxu0 %v1458
          %2656 = vmatpush.msra.mxu0 %v1456
          %2657 = vmatpush.msra.mxu0 %v1454
          %2658 = vmatpush.msra.mxu0 %v1452
          %2659 = vmatpush.msra.mxu0 %v1450
          %2660 = vmatmul.f32.gmra.mxu0 %v1629
          %v2661 = vpop.f32.mrf.mxu0
          %v2662 = vadd.f32 %v2549, %v2661
          %2663 = vmatmul.f32.gmra.mxu0 %v1630
          %v2664 = vpop.f32.mrf.mxu0
          %v2665 = vadd.f32 %v2552, %v2664
          %2666 = vmatmul.f32.gmra.mxu0 %v1631
          %v2667 = vpop.f32.mrf.mxu0
          %v2668 = vadd.f32 %v2555, %v2667
          %2669 = vmatmul.f32.gmra.mxu0 %v1632
          %v2670 = vpop.f32.mrf.mxu0
          %v2671 = vadd.f32 %v2558, %v2670
          %2672 = vmatmul.f32.gmra.mxu0 %v1633
          %v2673 = vpop.f32.mrf.mxu0
          %v2674 = vadd.f32 %v2561, %v2673
          %2675 = vmatmul.f32.gmra.mxu0 %v1634
          %v2676 = vpop.f32.mrf.mxu0
          %v2677 = vadd.f32 %v2564, %v2676
          %2678 = vmatmul.f32.gmra.mxu0 %v1635
          %v2679 = vpop.f32.mrf.mxu0
          %v2680 = vadd.f32 %v2567, %v2679
          %2681 = vmatmul.f32.gmra.mxu0 %v1636
          %v2682 = vpop.f32.mrf.mxu0
          %v2683 = vadd.f32 %v2570, %v2682
          %2684 = vmatmul.f32.gmra.mxu0 %v1637
          %v2685 = vpop.f32.mrf.mxu0
          %v2686 = vadd.f32 %v2573, %v2685
          %2687 = vmatmul.f32.gmra.mxu0 %v1638
          %v2688 = vpop.f32.mrf.mxu0
          %v2689 = vadd.f32 %v2576, %v2688
          %2690 = vmatmul.f32.gmra.mxu0 %v1639
          %v2691 = vpop.f32.mrf.mxu0
          %v2692 = vadd.f32 %v2579, %v2691
          %2693 = vmatmul.f32.gmra.mxu0 %v1640
          %v2694 = vpop.f32.mrf.mxu0
          %v2695 = vadd.f32 %v2582, %v2694
          %2696 = vmatmul.f32.gmra.mxu0 %v1641
          %v2697 = vpop.f32.mrf.mxu0
          %v2698 = vadd.f32 %v2585, %v2697
          %2699 = vmatmul.f32.gmra.mxu0 %v1642
          %v2700 = vpop.f32.mrf.mxu0
          %v2701 = vadd.f32 %v2588, %v2700
          %2702 = vmatmul.f32.gmra.mxu0 %v1643
          %v2703 = vpop.f32.mrf.mxu0
          %v2704 = vadd.f32 %v2591, %v2703
          %2705 = vmatmul.f32.gmra.mxu0 %v1644
          %v2706 = vpop.f32.mrf.mxu0
          %v2707 = vadd.f32 %v2594, %v2706
          %2708 = vmatmul.f32.gmra.mxu0 %v1661
          %v2709 = vpop.f32.mrf.mxu0
          %v2710 = vadd.f32 %v2597, %v2709
          %2711 = vmatmul.f32.gmra.mxu0 %v1662
          %v2712 = vpop.f32.mrf.mxu0
          %v2713 = vadd.f32 %v2600, %v2712
          %2714 = vmatmul.f32.gmra.mxu0 %v1663
          %v2715 = vpop.f32.mrf.mxu0
          %v2716 = vadd.f32 %v2603, %v2715
          %2717 = vmatmul.f32.gmra.mxu0 %v1664
          %v2718 = vpop.f32.mrf.mxu0
          %v2719 = vadd.f32 %v2606, %v2718
          %2720 = vmatmul.f32.gmra.mxu0 %v1665
          %v2721 = vpop.f32.mrf.mxu0
          %v2722 = vadd.f32 %v2609, %v2721
          %2723 = vmatmul.f32.gmra.mxu0 %v1666
          %v2724 = vpop.f32.mrf.mxu0
          %v2725 = vadd.f32 %v2612, %v2724
          %2726 = vmatmul.f32.gmra.mxu0 %v1667
          %v2727 = vpop.f32.mrf.mxu0
          %v2728 = vadd.f32 %v2615, %v2727
          %2729 = vmatmul.f32.gmra.mxu0 %v1668
          %v2730 = vpop.f32.mrf.mxu0
          %v2731 = vadd.f32 %v2618, %v2730
          %2732 = vmatmul.f32.gmra.mxu0 %v1669
          %v2733 = vpop.f32.mrf.mxu0
          %v2734 = vadd.f32 %v2621, %v2733
          %2735 = vmatmul.f32.gmra.mxu0 %v1670
          %v2736 = vpop.f32.mrf.mxu0
          %v2737 = vadd.f32 %v2624, %v2736
          %2738 = vmatmul.f32.gmra.mxu0 %v1671
          %v2739 = vpop.f32.mrf.mxu0
          %v2740 = vadd.f32 %v2627, %v2739
          %2741 = vmatmul.f32.gmra.mxu0 %v1672
          %v2742 = vpop.f32.mrf.mxu0
          %v2743 = vadd.f32 %v2630, %v2742
          %2744 = vmatmul.f32.gmra.mxu0 %v1673
          %v2745 = vpop.f32.mrf.mxu0
          %v2746 = vadd.f32 %v2633, %v2745
          %2747 = vmatmul.f32.gmra.mxu0 %v1674
          %v2748 = vpop.f32.mrf.mxu0
          %v2749 = vadd.f32 %v2636, %v2748
          %2750 = vmatmul.f32.gmra.mxu0 %v1675
          %v2751 = vpop.f32.mrf.mxu0
          %v2752 = vadd.f32 %v2639, %v2751
          %2753 = vmatmul.f32.gmra.mxu0 %v1676
          %v2754 = vpop.f32.mrf.mxu0
          %v2755 = vadd.f32 %v2642, %v2754
          %2756 = vdwg.mxu0
          %2757 = vmatpush.msra.mxu0 %v1512
          %2758 = vmatpush.msra.mxu0 %v1510
          %2759 = vmatpush.msra.mxu0 %v1508
          %2760 = vmatpush.msra.mxu0 %v1506
          %2761 = vmatpush.msra.mxu0 %v1504
          %2762 = vmatpush.msra.mxu0 %v1502
          %2763 = vmatpush.msra.mxu0 %v1500
          %2764 = vmatpush.msra.mxu0 %v1498
          %2765 = vmatpush.msra.mxu0 %v1496
          %2766 = vmatpush.msra.mxu0 %v1494
          %2767 = vmatpush.msra.mxu0 %v1492
          %2768 = vmatpush.msra.mxu0 %v1490
          %2769 = vmatpush.msra.mxu0 %v1488
          %2770 = vmatpush.msra.mxu0 %v1486
          %2771 = vmatpush.msra.mxu0 %v1484
          %2772 = vmatpush.msra.mxu0 %v1482
          %2773 = vmatmul.f32.gmra.mxu0 %v1693
          %v2774 = vpop.f32.mrf.mxu0
          %v2775 = vadd.f32 %v2662, %v2774
          %2776 = vmatmul.f32.gmra.mxu0 %v1694
          %v2777 = vpop.f32.mrf.mxu0
          %v2778 = vadd.f32 %v2665, %v2777
          %2779 = vmatmul.f32.gmra.mxu0 %v1695
          %v2780 = vpop.f32.mrf.mxu0
          %v2781 = vadd.f32 %v2668, %v2780
          %2782 = vmatmul.f32.gmra.mxu0 %v1696
          %v2783 = vpop.f32.mrf.mxu0
          %v2784 = vadd.f32 %v2671, %v2783
          %2785 = vmatmul.f32.gmra.mxu0 %v1697
          %v2786 = vpop.f32.mrf.mxu0
          %v2787 = vadd.f32 %v2674, %v2786
          %2788 = vmatmul.f32.gmra.mxu0 %v1698
          %v2789 = vpop.f32.mrf.mxu0
          %v2790 = vadd.f32 %v2677, %v2789
          %2791 = vmatmul.f32.gmra.mxu0 %v1699
          %v2792 = vpop.f32.mrf.mxu0
          %v2793 = vadd.f32 %v2680, %v2792
          %2794 = vmatmul.f32.gmra.mxu0 %v1700
          %v2795 = vpop.f32.mrf.mxu0
          %v2796 = vadd.f32 %v2683, %v2795
          %2797 = vmatmul.f32.gmra.mxu0 %v1701
          %v2798 = vpop.f32.mrf.mxu0
          %v2799 = vadd.f32 %v2686, %v2798
          %2800 = vmatmul.f32.gmra.mxu0 %v1702
          %v2801 = vpop.f32.mrf.mxu0
          %v2802 = vadd.f32 %v2689, %v2801
          %2803 = vmatmul.f32.gmra.mxu0 %v1703
          %v2804 = vpop.f32.mrf.mxu0
          %v2805 = vadd.f32 %v2692, %v2804
          %2806 = vmatmul.f32.gmra.mxu0 %v1704
          %v2807 = vpop.f32.mrf.mxu0
          %v2808 = vadd.f32 %v2695, %v2807
          %2809 = vmatmul.f32.gmra.mxu0 %v1705
          %v2810 = vpop.f32.mrf.mxu0
          %v2811 = vadd.f32 %v2698, %v2810
          %2812 = vmatmul.f32.gmra.mxu0 %v1706
          %v2813 = vpop.f32.mrf.mxu0
          %v2814 = vadd.f32 %v2701, %v2813
          %2815 = vmatmul.f32.gmra.mxu0 %v1707
          %v2816 = vpop.f32.mrf.mxu0
          %v2817 = vadd.f32 %v2704, %v2816
          %2818 = vmatmul.f32.gmra.mxu0 %v1708
          %v2819 = vpop.f32.mrf.mxu0
          %v2820 = vadd.f32 %v2707, %v2819
          %2821 = vmatmul.f32.gmra.mxu0 %v1725
          %v2822 = vpop.f32.mrf.mxu0
          %v2823 = vadd.f32 %v2710, %v2822
          %2824 = vmatmul.f32.gmra.mxu0 %v1726
          %v2825 = vpop.f32.mrf.mxu0
          %v2826 = vadd.f32 %v2713, %v2825
          %2827 = vmatmul.f32.gmra.mxu0 %v1727
          %v2828 = vpop.f32.mrf.mxu0
          %v2829 = vadd.f32 %v2716, %v2828
          %2830 = vmatmul.f32.gmra.mxu0 %v1728
          %v2831 = vpop.f32.mrf.mxu0
          %v2832 = vadd.f32 %v2719, %v2831
          %2833 = vmatmul.f32.gmra.mxu0 %v1729
          %v2834 = vpop.f32.mrf.mxu0
          %v2835 = vadd.f32 %v2722, %v2834
          %2836 = vmatmul.f32.gmra.mxu0 %v1730
          %v2837 = vpop.f32.mrf.mxu0
          %v2838 = vadd.f32 %v2725, %v2837
          %2839 = vmatmul.f32.gmra.mxu0 %v1731
          %v2840 = vpop.f32.mrf.mxu0
          %v2841 = vadd.f32 %v2728, %v2840
          %2842 = vmatmul.f32.gmra.mxu0 %v1732
          %v2843 = vpop.f32.mrf.mxu0
          %v2844 = vadd.f32 %v2731, %v2843
          %2845 = vmatmul.f32.gmra.mxu0 %v1733
          %v2846 = vpop.f32.mrf.mxu0
          %v2847 = vadd.f32 %v2734, %v2846
          %2848 = vmatmul.f32.gmra.mxu0 %v1734
          %v2849 = vpop.f32.mrf.mxu0
          %v2850 = vadd.f32 %v2737, %v2849
          %2851 = vmatmul.f32.gmra.mxu0 %v1735
          %v2852 = vpop.f32.mrf.mxu0
          %v2853 = vadd.f32 %v2740, %v2852
          %2854 = vmatmul.f32.gmra.mxu0 %v1736
          %v2855 = vpop.f32.mrf.mxu0
          %v2856 = vadd.f32 %v2743, %v2855
          %2857 = vmatmul.f32.gmra.mxu0 %v1737
          %v2858 = vpop.f32.mrf.mxu0
          %v2859 = vadd.f32 %v2746, %v2858
          %2860 = vmatmul.f32.gmra.mxu0 %v1738
          %v2861 = vpop.f32.mrf.mxu0
          %v2862 = vadd.f32 %v2749, %v2861
          %2863 = vmatmul.f32.gmra.mxu0 %v1739
          %v2864 = vpop.f32.mrf.mxu0
          %v2865 = vadd.f32 %v2752, %v2864
          %2866 = vmatmul.f32.gmra.mxu0 %v1740
          %v2867 = vpop.f32.mrf.mxu0
          %v2868 = vadd.f32 %v2755, %v2867
          %2869 = vdwg.mxu0
          %2870 = vmatpush.msra.mxu0 %v1544
          %2871 = vmatpush.msra.mxu0 %v1542
          %2872 = vmatpush.msra.mxu0 %v1540
          %2873 = vmatpush.msra.mxu0 %v1538
          %2874 = vmatpush.msra.mxu0 %v1536
          %2875 = vmatpush.msra.mxu0 %v1534
          %2876 = vmatpush.msra.mxu0 %v1532
          %2877 = vmatpush.msra.mxu0 %v1530
          %2878 = vmatpush.msra.mxu0 %v1528
          %2879 = vmatpush.msra.mxu0 %v1526
          %2880 = vmatpush.msra.mxu0 %v1524
          %2881 = vmatpush.msra.mxu0 %v1522
          %2882 = vmatpush.msra.mxu0 %v1520
          %2883 = vmatpush.msra.mxu0 %v1518
          %2884 = vmatpush.msra.mxu0 %v1516
          %2885 = vmatpush.msra.mxu0 %v1514
          %2886 = vmatmul.f32.gmra.mxu0 %v1757
          %v2887 = vpop.f32.mrf.mxu0
          %v2888 = vadd.f32 %v2775, %v2887
          %2889 = vmatmul.f32.gmra.mxu0 %v1758
          %v2890 = vpop.f32.mrf.mxu0
          %v2891 = vadd.f32 %v2778, %v2890
          %2892 = vmatmul.f32.gmra.mxu0 %v1759
          %v2893 = vpop.f32.mrf.mxu0
          %v2894 = vadd.f32 %v2781, %v2893
          %2895 = vmatmul.f32.gmra.mxu0 %v1760
          %v2896 = vpop.f32.mrf.mxu0
          %v2897 = vadd.f32 %v2784, %v2896
          %2898 = vmatmul.f32.gmra.mxu0 %v1761
          %v2899 = vpop.f32.mrf.mxu0
          %v2900 = vadd.f32 %v2787, %v2899
          %2901 = vmatmul.f32.gmra.mxu0 %v1762
          %v2902 = vpop.f32.mrf.mxu0
          %v2903 = vadd.f32 %v2790, %v2902
          %2904 = vmatmul.f32.gmra.mxu0 %v1763
          %v2905 = vpop.f32.mrf.mxu0
          %v2906 = vadd.f32 %v2793, %v2905
          %2907 = vmatmul.f32.gmra.mxu0 %v1764
          %v2908 = vpop.f32.mrf.mxu0
          %v2909 = vadd.f32 %v2796, %v2908
          %2910 = vmatmul.f32.gmra.mxu0 %v1765
          %v2911 = vpop.f32.mrf.mxu0
          %v2912 = vadd.f32 %v2799, %v2911
          %2913 = vmatmul.f32.gmra.mxu0 %v1766
          %v2914 = vpop.f32.mrf.mxu0
          %v2915 = vadd.f32 %v2802, %v2914
          %2916 = vmatmul.f32.gmra.mxu0 %v1767
          %v2917 = vpop.f32.mrf.mxu0
          %v2918 = vadd.f32 %v2805, %v2917
          %2919 = vmatmul.f32.gmra.mxu0 %v1768
          %v2920 = vpop.f32.mrf.mxu0
          %v2921 = vadd.f32 %v2808, %v2920
          %2922 = vmatmul.f32.gmra.mxu0 %v1769
          %v2923 = vpop.f32.mrf.mxu0
          %v2924 = vadd.f32 %v2811, %v2923
          %2925 = vmatmul.f32.gmra.mxu0 %v1770
          %v2926 = vpop.f32.mrf.mxu0
          %v2927 = vadd.f32 %v2814, %v2926
          %2928 = vmatmul.f32.gmra.mxu0 %v1771
          %v2929 = vpop.f32.mrf.mxu0
          %v2930 = vadd.f32 %v2817, %v2929
          %2931 = vmatmul.f32.gmra.mxu0 %v1772
          %v2932 = vpop.f32.mrf.mxu0
          %v2933 = vadd.f32 %v2820, %v2932
          %2934 = vmatmul.f32.gmra.mxu0 %v1789
          %v2935 = vpop.f32.mrf.mxu0
          %v2936 = vadd.f32 %v2823, %v2935
          %2937 = vmatmul.f32.gmra.mxu0 %v1790
          %v2938 = vpop.f32.mrf.mxu0
          %v2939 = vadd.f32 %v2826, %v2938
          %2940 = vmatmul.f32.gmra.mxu0 %v1791
          %v2941 = vpop.f32.mrf.mxu0
          %v2942 = vadd.f32 %v2829, %v2941
          %2943 = vmatmul.f32.gmra.mxu0 %v1792
          %v2944 = vpop.f32.mrf.mxu0
          %v2945 = vadd.f32 %v2832, %v2944
          %2946 = vmatmul.f32.gmra.mxu0 %v1793
          %v2947 = vpop.f32.mrf.mxu0
          %v2948 = vadd.f32 %v2835, %v2947
          %2949 = vmatmul.f32.gmra.mxu0 %v1794
          %v2950 = vpop.f32.mrf.mxu0
          %v2951 = vadd.f32 %v2838, %v2950
          %2952 = vmatmul.f32.gmra.mxu0 %v1795
          %v2953 = vpop.f32.mrf.mxu0
          %v2954 = vadd.f32 %v2841, %v2953
          %2955 = vmatmul.f32.gmra.mxu0 %v1796
          %v2956 = vpop.f32.mrf.mxu0
          %v2957 = vadd.f32 %v2844, %v2956
          %2958 = vmatmul.f32.gmra.mxu0 %v1797
          %v2959 = vpop.f32.mrf.mxu0
          %v2960 = vadd.f32 %v2847, %v2959
          %2961 = vmatmul.f32.gmra.mxu0 %v1798
          %v2962 = vpop.f32.mrf.mxu0
          %v2963 = vadd.f32 %v2850, %v2962
          %2964 = vmatmul.f32.gmra.mxu0 %v1799
          %v2965 = vpop.f32.mrf.mxu0
          %v2966 = vadd.f32 %v2853, %v2965
          %2967 = vmatmul.f32.gmra.mxu0 %v1800
          %v2968 = vpop.f32.mrf.mxu0
          %v2969 = vadd.f32 %v2856, %v2968
          %2970 = vmatmul.f32.gmra.mxu0 %v1801
          %v2971 = vpop.f32.mrf.mxu0
          %v2972 = vadd.f32 %v2859, %v2971
          %2973 = vmatmul.f32.gmra.mxu0 %v1802
          %v2974 = vpop.f32.mrf.mxu0
          %v2975 = vadd.f32 %v2862, %v2974
          %2976 = vmatmul.f32.gmra.mxu0 %v1803
          %v2977 = vpop.f32.mrf.mxu0
          %v2978 = vadd.f32 %v2865, %v2977
          %2979 = vmatmul.f32.gmra.mxu0 %v1804
          %v2980 = vpop.f32.mrf.mxu0
          %v2981 = vadd.f32 %v2868, %v2980
          %2982 = vdwg.mxu0
          %2983 = vmatpush.msra.mxu0 0.0
          %2984 = vmatpush.msra.mxu0 0.0
          %2985 = vmatpush.msra.mxu0 0.0
          %2986 = vmatpush.msra.mxu0 0.0
          %2987 = vmatpush.msra.mxu0 0.0
          %2988 = vmatpush.msra.mxu0 0.0
          %2989 = vmatpush.msra.mxu0 0.0
          %2990 = vmatpush.msra.mxu0 0.0
          %2991 = vmatpush.msra.mxu0 0.0
          %2992 = vmatpush.msra.mxu0 0.0
          %2993 = vmatpush.msra.mxu0 0.0
          %2994 = vmatpush.msra.mxu0 0.0
          %2995 = vmatpush.msra.mxu0 0.0
          %2996 = vmatpush.msra.mxu0 0.0
          %2997 = vmatpush.msra.mxu0 %v1548
          %2998 = vmatpush.msra.mxu0 %v1546
          %2999 = vmatmul.f32.gmra.mxu0 %v1871
          %v3000 = vpop.f32.mrf.mxu0
          %v3001 = vadd.f32 %v2888, %v3000
          %3002 = vmatmul.f32.gmra.mxu0 %v1874
          %v3003 = vpop.f32.mrf.mxu0
          %v3004 = vadd.f32 %v2891, %v3003
          %3005 = vmatmul.f32.gmra.mxu0 %v1877
          %v3006 = vpop.f32.mrf.mxu0
          %v3007 = vadd.f32 %v2894, %v3006
          %3008 = vmatmul.f32.gmra.mxu0 %v1880
          %v3009 = vpop.f32.mrf.mxu0
          %v3010 = vadd.f32 %v2897, %v3009
          %3011 = vmatmul.f32.gmra.mxu0 %v1883
          %v3012 = vpop.f32.mrf.mxu0
          %v3013 = vadd.f32 %v2900, %v3012
          %3014 = vmatmul.f32.gmra.mxu0 %v1886
          %v3015 = vpop.f32.mrf.mxu0
          %v3016 = vadd.f32 %v2903, %v3015
          %3017 = vmatmul.f32.gmra.mxu0 %v1889
          %v3018 = vpop.f32.mrf.mxu0
          %v3019 = vadd.f32 %v2906, %v3018
          %3020 = vmatmul.f32.gmra.mxu0 %v1892
          %v3021 = vpop.f32.mrf.mxu0
          %v3022 = vadd.f32 %v2909, %v3021
          %3023 = vmatmul.f32.gmra.mxu0 %v1895
          %v3024 = vpop.f32.mrf.mxu0
          %v3025 = vadd.f32 %v2912, %v3024
          %3026 = vmatmul.f32.gmra.mxu0 %v1898
          %v3027 = vpop.f32.mrf.mxu0
          %v3028 = vadd.f32 %v2915, %v3027
          %3029 = vmatmul.f32.gmra.mxu0 %v1901
          %v3030 = vpop.f32.mrf.mxu0
          %v3031 = vadd.f32 %v2918, %v3030
          %3032 = vmatmul.f32.gmra.mxu0 %v1904
          %v3033 = vpop.f32.mrf.mxu0
          %v3034 = vadd.f32 %v2921, %v3033
          %3035 = vmatmul.f32.gmra.mxu0 %v1907
          %v3036 = vpop.f32.mrf.mxu0
          %v3037 = vadd.f32 %v2924, %v3036
          %3038 = vmatmul.f32.gmra.mxu0 %v1910
          %v3039 = vpop.f32.mrf.mxu0
          %v3040 = vadd.f32 %v2927, %v3039
          %3041 = vmatmul.f32.gmra.mxu0 %v1913
          %v3042 = vpop.f32.mrf.mxu0
          %v3043 = vadd.f32 %v2930, %v3042
          %3044 = vmatmul.f32.gmra.mxu0 %v1916
          %v3045 = vpop.f32.mrf.mxu0
          %v3046 = vadd.f32 %v2933, %v3045
          %3047 = vmatmul.f32.gmra.mxu0 %v1919
          %v3048 = vpop.f32.mrf.mxu0
          %v3049 = vadd.f32 %v2936, %v3048
          %3050 = vmatmul.f32.gmra.mxu0 %v1922
          %v3051 = vpop.f32.mrf.mxu0
          %v3052 = vadd.f32 %v2939, %v3051
          %3053 = vmatmul.f32.gmra.mxu0 %v1925
          %v3054 = vpop.f32.mrf.mxu0
          %v3055 = vadd.f32 %v2942, %v3054
          %3056 = vmatmul.f32.gmra.mxu0 %v1928
          %v3057 = vpop.f32.mrf.mxu0
          %v3058 = vadd.f32 %v2945, %v3057
          %3059 = vmatmul.f32.gmra.mxu0 %v1931
          %v3060 = vpop.f32.mrf.mxu0
          %v3061 = vadd.f32 %v2948, %v3060
          %3062 = vmatmul.f32.gmra.mxu0 %v1934
          %v3063 = vpop.f32.mrf.mxu0
          %v3064 = vadd.f32 %v2951, %v3063
          %3065 = vmatmul.f32.gmra.mxu0 %v1937
          %v3066 = vpop.f32.mrf.mxu0
          %v3067 = vadd.f32 %v2954, %v3066
          %3068 = vmatmul.f32.gmra.mxu0 %v1940
          %v3069 = vpop.f32.mrf.mxu0
          %v3070 = vadd.f32 %v2957, %v3069
          %3071 = vmatmul.f32.gmra.mxu0 %v1943
          %v3072 = vpop.f32.mrf.mxu0
          %v3073 = vadd.f32 %v2960, %v3072
          %3074 = vmatmul.f32.gmra.mxu0 %v1946
          %v3075 = vpop.f32.mrf.mxu0
          %v3076 = vadd.f32 %v2963, %v3075
          %3077 = vmatmul.f32.gmra.mxu0 %v1949
          %v3078 = vpop.f32.mrf.mxu0
          %v3079 = vadd.f32 %v2966, %v3078
          %3080 = vmatmul.f32.gmra.mxu0 %v1952
          %v3081 = vpop.f32.mrf.mxu0
          %v3082 = vadd.f32 %v2969, %v3081
          %3083 = vmatmul.f32.gmra.mxu0 %v1955
          %v3084 = vpop.f32.mrf.mxu0
          %v3085 = vadd.f32 %v2972, %v3084
          %3086 = vmatmul.f32.gmra.mxu0 %v1958
          %v3087 = vpop.f32.mrf.mxu0
          %v3088 = vadd.f32 %v2975, %v3087
          %3089 = vmatmul.f32.gmra.mxu0 %v1961
          %v3090 = vpop.f32.mrf.mxu0
          %v3091 = vadd.f32 %v2978, %v3090
          %3092 = vmatmul.f32.gmra.mxu0 %v1964
          %v3093 = vpop.f32.mrf.mxu0
          %v3094 = vadd.f32 %v2981, %v3093
          %3095 = vdwg.mxu0
          %v3096 = vmax.f32 %v2436, %v3001
          %3097 = vmax.xlane.f32.xlu0 %v3096
          %v3098 = vpop.xlane.xlu0 %3097
          %v3099 = vmax.f32 %v2439, %v3004
          %3100 = vmax.xlane.f32.xlu0 %v3099
          %v3101 = vpop.xlane.xlu0 %3100
          %v3102 = vmax.f32 %v2442, %v3007
          %3103 = vmax.xlane.f32.xlu0 %v3102
          %v3104 = vpop.xlane.xlu0 %3103
          %v3105 = vmax.f32 %v2445, %v3010
          %3106 = vmax.xlane.f32.xlu0 %v3105
          %v3107 = vpop.xlane.xlu0 %3106
          %v3108 = vmax.f32 %v2448, %v3013
          %3109 = vmax.xlane.f32.xlu0 %v3108
          %v3110 = vpop.xlane.xlu0 %3109
          %v3111 = vmax.f32 %v2451, %v3016
          %3112 = vmax.xlane.f32.xlu0 %v3111
          %v3113 = vpop.xlane.xlu0 %3112
          %v3114 = vmax.f32 %v2454, %v3019
          %3115 = vmax.xlane.f32.xlu0 %v3114
          %v3116 = vpop.xlane.xlu0 %3115
          %v3117 = vmax.f32 %v2457, %v3022
          %3118 = vmax.xlane.f32.xlu0 %v3117
          %v3119 = vpop.xlane.xlu0 %3118
          %v3120 = vmax.f32 %v2460, %v3025
          %3121 = vmax.xlane.f32.xlu0 %v3120
          %v3122 = vpop.xlane.xlu0 %3121
          %v3123 = vmax.f32 %v2463, %v3028
          %3124 = vmax.xlane.f32.xlu0 %v3123
          %v3125 = vpop.xlane.xlu0 %3124
          %v3126 = vmax.f32 %v2466, %v3031
          %3127 = vmax.xlane.f32.xlu0 %v3126
          %v3128 = vpop.xlane.xlu0 %3127
          %v3129 = vmax.f32 %v2469, %v3034
          %3130 = vmax.xlane.f32.xlu0 %v3129
          %v3131 = vpop.xlane.xlu0 %3130
          %v3132 = vmax.f32 %v2472, %v3037
          %3133 = vmax.xlane.f32.xlu0 %v3132
          %v3134 = vpop.xlane.xlu0 %3133
          %v3135 = vmax.f32 %v2475, %v3040
          %3136 = vmax.xlane.f32.xlu0 %v3135
          %v3137 = vpop.xlane.xlu0 %3136
          %v3138 = vmax.f32 %v2478, %v3043
          %3139 = vmax.xlane.f32.xlu0 %v3138
          %v3140 = vpop.xlane.xlu0 %3139
          %v3141 = vmax.f32 %v2481, %v3046
          %3142 = vmax.xlane.f32.xlu0 %v3141
          %v3143 = vpop.xlane.xlu0 %3142
          %v3144 = vmax.f32 %v2484, %v3049
          %3145 = vmax.xlane.f32.xlu0 %v3144
          %v3146 = vpop.xlane.xlu0 %3145
          %v3147 = vmax.f32 %v2487, %v3052
          %3148 = vmax.xlane.f32.xlu0 %v3147
          %v3149 = vpop.xlane.xlu0 %3148
          %v3150 = vmax.f32 %v2490, %v3055
          %3151 = vmax.xlane.f32.xlu0 %v3150
          %v3152 = vpop.xlane.xlu0 %3151
          %v3153 = vmax.f32 %v2493, %v3058
          %3154 = vmax.xlane.f32.xlu0 %v3153
          %v3155 = vpop.xlane.xlu0 %3154
          %v3156 = vmax.f32 %v2496, %v3061
          %3157 = vmax.xlane.f32.xlu0 %v3156
          %v3158 = vpop.xlane.xlu0 %3157
          %v3159 = vmax.f32 %v2499, %v3064
          %3160 = vmax.xlane.f32.xlu0 %v3159
          %v3161 = vpop.xlane.xlu0 %3160
          %v3162 = vmax.f32 %v2502, %v3067
          %3163 = vmax.xlane.f32.xlu0 %v3162
          %v3164 = vpop.xlane.xlu0 %3163
          %v3165 = vmax.f32 %v2505, %v3070
          %3166 = vmax.xlane.f32.xlu0 %v3165
          %v3167 = vpop.xlane.xlu0 %3166
          %v3168 = vmax.f32 %v2508, %v3073
          %3169 = vmax.xlane.f32.xlu0 %v3168
          %v3170 = vpop.xlane.xlu0 %3169
          %v3171 = vmax.f32 %v2511, %v3076
          %3172 = vmax.xlane.f32.xlu0 %v3171
          %v3173 = vpop.xlane.xlu0 %3172
          %v3174 = vmax.f32 %v2514, %v3079
          %3175 = vmax.xlane.f32.xlu0 %v3174
          %v3176 = vpop.xlane.xlu0 %3175
          %v3177 = vmax.f32 %v2517, %v3082
          %3178 = vmax.xlane.f32.xlu0 %v3177
          %v3179 = vpop.xlane.xlu0 %3178
          %v3180 = vmax.f32 %v2520, %v3085
          %3181 = vmax.xlane.f32.xlu0 %v3180
          %v3182 = vpop.xlane.xlu0 %3181
          %v3183 = vmax.f32 %v2523, %v3088
          %3184 = vmax.xlane.f32.xlu0 %v3183
          %v3185 = vpop.xlane.xlu0 %3184
          %v3186 = vmax.f32 %v2526, %v3091
          %3187 = vmax.xlane.f32.xlu0 %v3186
          %v3188 = vpop.xlane.xlu0 %3187
          %v3189 = vmax.f32 %v2529, %v3094
          %3190 = vmax.xlane.f32.xlu0 %v3189
          %v3191 = vpop.xlane.xlu0 %3190
          %v3192 = vsub.f32 %v2436, %v3098
          %v3193 = vsub.f32 %v3001, %v3098
          %v3194 = vsub.f32 %v2439, %v3101
          %v3195 = vsub.f32 %v3004, %v3101
          %v3196 = vsub.f32 %v2442, %v3104
          %v3197 = vsub.f32 %v3007, %v3104
          %v3198 = vsub.f32 %v2445, %v3107
          %v3199 = vsub.f32 %v3010, %v3107
          %v3200 = vsub.f32 %v2448, %v3110
          %v3201 = vsub.f32 %v3013, %v3110
          %v3202 = vsub.f32 %v2451, %v3113
          %v3203 = vsub.f32 %v3016, %v3113
          %v3204 = vsub.f32 %v2454, %v3116
          %v3205 = vsub.f32 %v3019, %v3116
          %v3206 = vsub.f32 %v2457, %v3119
          %v3207 = vsub.f32 %v3022, %v3119
          %v3208 = vsub.f32 %v2460, %v3122
          %v3209 = vsub.f32 %v3025, %v3122
          %v3210 = vsub.f32 %v2463, %v3125
          %v3211 = vsub.f32 %v3028, %v3125
          %v3212 = vsub.f32 %v2466, %v3128
          %v3213 = vsub.f32 %v3031, %v3128
          %v3214 = vsub.f32 %v2469, %v3131
          %v3215 = vsub.f32 %v3034, %v3131
          %v3216 = vsub.f32 %v2472, %v3134
          %v3217 = vsub.f32 %v3037, %v3134
          %v3218 = vsub.f32 %v2475, %v3137
          %v3219 = vsub.f32 %v3040, %v3137
          %v3220 = vsub.f32 %v2478, %v3140
          %v3221 = vsub.f32 %v3043, %v3140
          %v3222 = vsub.f32 %v2481, %v3143
          %v3223 = vsub.f32 %v3046, %v3143
          %v3224 = vsub.f32 %v2484, %v3146
          %v3225 = vsub.f32 %v3049, %v3146
          %v3226 = vsub.f32 %v2487, %v3149
          %v3227 = vsub.f32 %v3052, %v3149
          %v3228 = vsub.f32 %v2490, %v3152
          %v3229 = vsub.f32 %v3055, %v3152
          %v3230 = vsub.f32 %v2493, %v3155
          %v3231 = vsub.f32 %v3058, %v3155
          %v3232 = vsub.f32 %v2496, %v3158
          %v3233 = vsub.f32 %v3061, %v3158
          %v3234 = vsub.f32 %v2499, %v3161
          %v3235 = vsub.f32 %v3064, %v3161
          %v3236 = vsub.f32 %v2502, %v3164
          %v3237 = vsub.f32 %v3067, %v3164
          %v3238 = vsub.f32 %v2505, %v3167
          %v3239 = vsub.f32 %v3070, %v3167
          %v3240 = vsub.f32 %v2508, %v3170
          %v3241 = vsub.f32 %v3073, %v3170
          %v3242 = vsub.f32 %v2511, %v3173
          %v3243 = vsub.f32 %v3076, %v3173
          %v3244 = vsub.f32 %v2514, %v3176
          %v3245 = vsub.f32 %v3079, %v3176
          %v3246 = vsub.f32 %v2517, %v3179
          %v3247 = vsub.f32 %v3082, %v3179
          %v3248 = vsub.f32 %v2520, %v3182
          %v3249 = vsub.f32 %v3085, %v3182
          %v3250 = vsub.f32 %v2523, %v3185
          %v3251 = vsub.f32 %v3088, %v3185
          %v3252 = vsub.f32 %v2526, %v3188
          %v3253 = vsub.f32 %v3091, %v3188
          %v3254 = vsub.f32 %v2529, %v3191
          %v3255 = vsub.f32 %v3094, %v3191
          %v3256 = vmul.f32 %v3192, 1.442695
          %v3257 = vpow.pop %v3256
          %v3258 = vmul.f32 %v3193, 1.442695
          %v3259 = vpow.pop %v3258
          %v3260 = vmul.f32 %v3194, 1.442695
          %v3261 = vpow.pop %v3260
          %v3262 = vmul.f32 %v3195, 1.442695
          %v3263 = vpow.pop %v3262
          %v3264 = vmul.f32 %v3196, 1.442695
          %v3265 = vpow.pop %v3264
          %v3266 = vmul.f32 %v3197, 1.442695
          %v3267 = vpow.pop %v3266
          %v3268 = vmul.f32 %v3198, 1.442695
          %v3269 = vpow.pop %v3268
          %v3270 = vmul.f32 %v3199, 1.442695
          %v3271 = vpow.pop %v3270
          %v3272 = vmul.f32 %v3200, 1.442695
          %v3273 = vpow.pop %v3272
          %v3274 = vmul.f32 %v3201, 1.442695
          %v3275 = vpow.pop %v3274
          %v3276 = vmul.f32 %v3202, 1.442695
          %v3277 = vpow.pop %v3276
          %v3278 = vmul.f32 %v3203, 1.442695
          %v3279 = vpow.pop %v3278
          %v3280 = vmul.f32 %v3204, 1.442695
          %v3281 = vpow.pop %v3280
          %v3282 = vmul.f32 %v3205, 1.442695
          %v3283 = vpow.pop %v3282
          %v3284 = vmul.f32 %v3206, 1.442695
          %v3285 = vpow.pop %v3284
          %v3286 = vmul.f32 %v3207, 1.442695
          %v3287 = vpow.pop %v3286
          %v3288 = vmul.f32 %v3208, 1.442695
          %v3289 = vpow.pop %v3288
          %v3290 = vmul.f32 %v3209, 1.442695
          %v3291 = vpow.pop %v3290
          %v3292 = vmul.f32 %v3210, 1.442695
          %v3293 = vpow.pop %v3292
          %v3294 = vmul.f32 %v3211, 1.442695
          %v3295 = vpow.pop %v3294
          %v3296 = vmul.f32 %v3212, 1.442695
          %v3297 = vpow.pop %v3296
          %v3298 = vmul.f32 %v3213, 1.442695
          %v3299 = vpow.pop %v3298
          %v3300 = vmul.f32 %v3214, 1.442695
          %v3301 = vpow.pop %v3300
          %v3302 = vmul.f32 %v3215, 1.442695
          %v3303 = vpow.pop %v3302
          %v3304 = vmul.f32 %v3216, 1.442695
          %v3305 = vpow.pop %v3304
          %v3306 = vmul.f32 %v3217, 1.442695
          %v3307 = vpow.pop %v3306
          %v3308 = vmul.f32 %v3218, 1.442695
          %v3309 = vpow.pop %v3308
          %v3310 = vmul.f32 %v3219, 1.442695
          %v3311 = vpow.pop %v3310
          %v3312 = vmul.f32 %v3220, 1.442695
          %v3313 = vpow.pop %v3312
          %v3314 = vmul.f32 %v3221, 1.442695
          %v3315 = vpow.pop %v3314
          %v3316 = vmul.f32 %v3222, 1.442695
          %v3317 = vpow.pop %v3316
          %v3318 = vmul.f32 %v3223, 1.442695
          %v3319 = vpow.pop %v3318
          %v3320 = vmul.f32 %v3224, 1.442695
          %v3321 = vpow.pop %v3320
          %v3322 = vmul.f32 %v3225, 1.442695
          %v3323 = vpow.pop %v3322
          %v3324 = vmul.f32 %v3226, 1.442695
          %v3325 = vpow.pop %v3324
          %v3326 = vmul.f32 %v3227, 1.442695
          %v3327 = vpow.pop %v3326
          %v3328 = vmul.f32 %v3228, 1.442695
          %v3329 = vpow.pop %v3328
          %v3330 = vmul.f32 %v3229, 1.442695
          %v3331 = vpow.pop %v3330
          %v3332 = vmul.f32 %v3230, 1.442695
          %v3333 = vpow.pop %v3332
          %v3334 = vmul.f32 %v3231, 1.442695
          %v3335 = vpow.pop %v3334
          %v3336 = vmul.f32 %v3232, 1.442695
          %v3337 = vpow.pop %v3336
          %v3338 = vmul.f32 %v3233, 1.442695
          %v3339 = vpow.pop %v3338
          %v3340 = vmul.f32 %v3234, 1.442695
          %v3341 = vpow.pop %v3340
          %v3342 = vmul.f32 %v3235, 1.442695
          %v3343 = vpow.pop %v3342
          %v3344 = vmul.f32 %v3236, 1.442695
          %v3345 = vpow.pop %v3344
          %v3346 = vmul.f32 %v3237, 1.442695
          %v3347 = vpow.pop %v3346
          %v3348 = vmul.f32 %v3238, 1.442695
          %v3349 = vpow.pop %v3348
          %v3350 = vmul.f32 %v3239, 1.442695
          %v3351 = vpow.pop %v3350
          %v3352 = vmul.f32 %v3240, 1.442695
          %v3353 = vpow.pop %v3352
          %v3354 = vmul.f32 %v3241, 1.442695
          %v3355 = vpow.pop %v3354
          %v3356 = vmul.f32 %v3242, 1.442695
          %v3357 = vpow.pop %v3356
          %v3358 = vmul.f32 %v3243, 1.442695
          %v3359 = vpow.pop %v3358
          %v3360 = vmul.f32 %v3244, 1.442695
          %v3361 = vpow.pop %v3360
          %v3362 = vmul.f32 %v3245, 1.442695
          %v3363 = vpow.pop %v3362
          %v3364 = vmul.f32 %v3246, 1.442695
          %v3365 = vpow.pop %v3364
          %v3366 = vmul.f32 %v3247, 1.442695
          %v3367 = vpow.pop %v3366
          %v3368 = vmul.f32 %v3248, 1.442695
          %v3369 = vpow.pop %v3368
          %v3370 = vmul.f32 %v3249, 1.442695
          %v3371 = vpow.pop %v3370
          %v3372 = vmul.f32 %v3250, 1.442695
          %v3373 = vpow.pop %v3372
          %v3374 = vmul.f32 %v3251, 1.442695
          %v3375 = vpow.pop %v3374
          %v3376 = vmul.f32 %v3252, 1.442695
          %v3377 = vpow.pop %v3376
          %v3378 = vmul.f32 %v3253, 1.442695
          %v3379 = vpow.pop %v3378
          %v3380 = vmul.f32 %v3254, 1.442695
          %v3381 = vpow.pop %v3380
          %v3382 = vmul.f32 %v3255, 1.442695
          %v3383 = vpow.pop %v3382
          %3384 = vmatpush.xpose.msra.mxu0 %v3317
          %3385 = vmatpush.xpose.msra.mxu0 %v3313
          %3386 = vmatpush.xpose.msra.mxu0 %v3309
          %3387 = vmatpush.xpose.msra.mxu0 %v3305
          %3388 = vmatpush.xpose.msra.mxu0 %v3301
          %3389 = vmatpush.xpose.msra.mxu0 %v3297
          %3390 = vmatpush.xpose.msra.mxu0 %v3293
          %3391 = vmatpush.xpose.msra.mxu0 %v3289
          %3392 = vmatpush.xpose.msra.mxu0 %v3285
          %3393 = vmatpush.xpose.msra.mxu0 %v3281
          %3394 = vmatpush.xpose.msra.mxu0 %v3277
          %3395 = vmatpush.xpose.msra.mxu0 %v3273
          %3396 = vmatpush.xpose.msra.mxu0 %v3269
          %3397 = vmatpush.xpose.msra.mxu0 %v3265
          %3398 = vmatpush.xpose.msra.mxu0 %v3261
          %3399 = vmatpush.xpose.msra.mxu0 %v3257
          %3400 = vmatmul.f32.gmra.mxu0 %v811
          %v3401 = vpop.f32.mrf.mxu0
          %v3402 = vadd.f32 0.0, %v3401
          %3403 = vmatmul.f32.gmra.mxu0 1.0
          %v3404 = vpop.f32.mrf.mxu0
          %v3405 = vadd.f32 0.0, %v3404
          %3406 = vdwg.mxu0
          %3407 = vmatpush.xpose.msra.mxu0 %v3319
          %3408 = vmatpush.xpose.msra.mxu0 %v3315
          %3409 = vmatpush.xpose.msra.mxu0 %v3311
          %3410 = vmatpush.xpose.msra.mxu0 %v3307
          %3411 = vmatpush.xpose.msra.mxu0 %v3303
          %3412 = vmatpush.xpose.msra.mxu0 %v3299
          %3413 = vmatpush.xpose.msra.mxu0 %v3295
          %3414 = vmatpush.xpose.msra.mxu0 %v3291
          %3415 = vmatpush.xpose.msra.mxu0 %v3287
          %3416 = vmatpush.xpose.msra.mxu0 %v3283
          %3417 = vmatpush.xpose.msra.mxu0 %v3279
          %3418 = vmatpush.xpose.msra.mxu0 %v3275
          %3419 = vmatpush.xpose.msra.mxu0 %v3271
          %3420 = vmatpush.xpose.msra.mxu0 %v3267
          %3421 = vmatpush.xpose.msra.mxu0 %v3263
          %3422 = vmatpush.xpose.msra.mxu0 %v3259
          %3423 = vmatmul.f32.gmra.mxu0 %v812
          %v3424 = vpop.f32.mrf.mxu0
          %v3425 = vadd.f32 %v3402, %v3424
          %3426 = vmatmul.f32.gmra.mxu0 1.0
          %v3427 = vpop.f32.mrf.mxu0
          %v3428 = vadd.f32 %v3405, %v3427
          %3429 = vdwg.mxu0
          %3430 = vmatpush.xpose.msra.mxu0 %v3381
          %3431 = vmatpush.xpose.msra.mxu0 %v3377
          %3432 = vmatpush.xpose.msra.mxu0 %v3373
          %3433 = vmatpush.xpose.msra.mxu0 %v3369
          %3434 = vmatpush.xpose.msra.mxu0 %v3365
          %3435 = vmatpush.xpose.msra.mxu0 %v3361
          %3436 = vmatpush.xpose.msra.mxu0 %v3357
          %3437 = vmatpush.xpose.msra.mxu0 %v3353
          %3438 = vmatpush.xpose.msra.mxu0 %v3349
          %3439 = vmatpush.xpose.msra.mxu0 %v3345
          %3440 = vmatpush.xpose.msra.mxu0 %v3341
          %3441 = vmatpush.xpose.msra.mxu0 %v3337
          %3442 = vmatpush.xpose.msra.mxu0 %v3333
          %3443 = vmatpush.xpose.msra.mxu0 %v3329
          %3444 = vmatpush.xpose.msra.mxu0 %v3325
          %3445 = vmatpush.xpose.msra.mxu0 %v3321
          %3446 = vmatmul.f32.gmra.mxu0 %v811
          %v3447 = vpop.f32.mrf.mxu0
          %v3448 = vadd.f32 0.0, %v3447
          %3449 = vmatmul.f32.gmra.mxu0 1.0
          %v3450 = vpop.f32.mrf.mxu0
          %v3451 = vadd.f32 0.0, %v3450
          %3452 = vdwg.mxu0
          %3453 = vmatpush.xpose.msra.mxu0 %v3383
          %3454 = vmatpush.xpose.msra.mxu0 %v3379
          %3455 = vmatpush.xpose.msra.mxu0 %v3375
          %3456 = vmatpush.xpose.msra.mxu0 %v3371
          %3457 = vmatpush.xpose.msra.mxu0 %v3367
          %3458 = vmatpush.xpose.msra.mxu0 %v3363
          %3459 = vmatpush.xpose.msra.mxu0 %v3359
          %3460 = vmatpush.xpose.msra.mxu0 %v3355
          %3461 = vmatpush.xpose.msra.mxu0 %v3351
          %3462 = vmatpush.xpose.msra.mxu0 %v3347
          %3463 = vmatpush.xpose.msra.mxu0 %v3343
          %3464 = vmatpush.xpose.msra.mxu0 %v3339
          %3465 = vmatpush.xpose.msra.mxu0 %v3335
          %3466 = vmatpush.xpose.msra.mxu0 %v3331
          %3467 = vmatpush.xpose.msra.mxu0 %v3327
          %3468 = vmatpush.xpose.msra.mxu0 %v3323
          %3469 = vmatmul.f32.gmra.mxu0 %v812
          %v3470 = vpop.f32.mrf.mxu0
          %v3471 = vadd.f32 %v3448, %v3470
          %3472 = vmatmul.f32.gmra.mxu0 1.0
          %v3473 = vpop.f32.mrf.mxu0
          %v3474 = vadd.f32 %v3451, %v3473
          %3475 = vdwg.mxu0
          %v3476 = vrcp.pop %v3428
          %v3477 = vrcp.pop %v3474
          %v3478 = vperm.slane %v3476, 0
          %v3479 = vperm.slane %v3477, 0
          %v3480 = vmul.f32 %v3425, %v3478
          %v3481 = vmul.f32 %v3471, %v3479
          %s3482 = sshra.s32 %s786, 3
          %s3483 = sand.u32 %s786, 7
          %s3484 = smul.u32 %s3482, 2
          %s3485 = smul.addr %s3484, 8
          %s3486 = scalar_lea.vmem [#allocation5], %s3485
          %3487 = vst [vmem:[%s3486] sm:$0xff] %v3480
          %3488 = vst [vmem:[%s3486 + $0x8] sm:$0xff] %v3481
        $region57: #{tpu_custom_call.1} parent=47 // loop_footer
          %s783 = sadd.s32 1, %s779
        $region58: #{tpu_custom_call.1} parent=47 // loop_footer_branch
          %778 = sbr.rel target = $region54
        $region59: #{tpu_custom_call.1} parent=47 // loop_exit
          _
        %v3489 = vld [vmem:[%s3] sm:$0xff]
        %v3490 = vld [vmem:[%s3 + $0x8] sm:$0xff]
        %v3491 = vld [vmem:[#allocation5] sm:$0xff]
        %v3492 = vld [vmem:[#allocation5 + $0x8] sm:$0xff]
        %v3493 = vld [vmem:[#allocation5 + $0x10] sm:$0xff]
        %v3494 = vld [vmem:[#allocation5 + $0x18] sm:$0xff]
        %v3495 = vld [vmem:[%s4] sm:$0xff]
        %v3496 = vld [vmem:[%s4 + $0x8] sm:$0xff]
        %3498 = vset.pattern.permute.xlu0 0
        %3499 = vperm.xlu0 %3498, %v3495
        %v3500 = vpop.permute.xlu0 %3499
        %3503 = vset.pattern.permute.xlu0 0
        %3504 = vperm.xlu0 %3503, %v3496
        %v3505 = vpop.permute.xlu0 %3504
        %vm3507 = vcmask 130048
        %v3509 = vsel %vm3507, %v3489, 0
        %v3512 = vsel %vm3507, %v3490, 0
        %3514 = vmatpush.msra.mxu0 0.0
        %3515 = vmatpush.msra.mxu0 0.0
        %3516 = vmatpush.msra.mxu0 0.0
        %3517 = vmatpush.msra.mxu0 0.0
        %3518 = vmatpush.msra.mxu0 0.0
        %3519 = vmatpush.msra.mxu0 0.0
        %3520 = vmatpush.msra.mxu0 0.0
        %3521 = vmatpush.msra.mxu0 0.0
        %3522 = vmatpush.msra.mxu0 0.0
        %3523 = vmatpush.msra.mxu0 0.0
        %3524 = vmatpush.msra.mxu0 0.0
        %3525 = vmatpush.msra.mxu0 0.0
        %3526 = vmatpush.msra.mxu0 0.0
        %3527 = vmatpush.msra.mxu0 0.0
        %3528 = vmatpush.msra.mxu0 %v3493
        %3529 = vmatpush.msra.mxu0 %v3491
        %3530 = vmatmul.f32.gmra.mxu0 %v3509
        %v3531 = vpop.f32.mrf.mxu0
        %v3532 = vadd.f32 %v3500, %v3531
        %3533 = vmatmul.f32.gmra.mxu0 %v3512
        %v3534 = vpop.f32.mrf.mxu0
        %v3535 = vadd.f32 %v3505, %v3534
        %3536 = vdwg.mxu0
        %3537 = vmatpush.msra.mxu0 0.0
        %3538 = vmatpush.msra.mxu0 0.0
        %3539 = vmatpush.msra.mxu0 0.0
        %3540 = vmatpush.msra.mxu0 0.0
        %3541 = vmatpush.msra.mxu0 0.0
        %3542 = vmatpush.msra.mxu0 0.0
        %3543 = vmatpush.msra.mxu0 0.0
        %3544 = vmatpush.msra.mxu0 0.0
        %3545 = vmatpush.msra.mxu0 0.0
        %3546 = vmatpush.msra.mxu0 0.0
        %3547 = vmatpush.msra.mxu0 0.0
        %3548 = vmatpush.msra.mxu0 0.0
        %3549 = vmatpush.msra.mxu0 0.0
        %3550 = vmatpush.msra.mxu0 0.0
        %3551 = vmatpush.msra.mxu0 %v3494
        %3552 = vmatpush.msra.mxu0 %v3492
        %3553 = vmatmul.f32.gmra.mxu0 %v3509
        %v3554 = vpop.f32.mrf.mxu0
        %v3555 = vadd.f32 %v3500, %v3554
        %3556 = vmatmul.f32.gmra.mxu0 %v3512
        %v3557 = vpop.f32.mrf.mxu0
        %v3558 = vadd.f32 %v3505, %v3557
        %3559 = vdwg.mxu0
        %3560 = vst [vmem:[%s289] sm:$0xff] %v3532
        %3561 = vst [vmem:[%s289 + $0x8] sm:$0xff] %v3555
        %3562 = vst [vmem:[%s289 + $0x10] sm:$0xff] %v3535
        %3563 = vst [vmem:[%s289 + $0x18] sm:$0xff] %v3558
        %s3564 = sand.u32 %s182, 1
        %s3565 = scalar_lea.sflag [#allocation8], %s3564
        %s3566 = sand.u32 %s182, 1
        %s3567 = smul.addr %s3566, 32
        %s3568 = scalar_lea.vmem [#allocation9], %s3567
        // Predicated region
        $region60: #{tpu_custom_call.1} parent=47 // pred_check
          %p3569 = pneg %p192
        $region61: #{tpu_custom_call.1} parent=47 // pred_check_branch
          %3571 = sbr.rel (%p3569) target = $region63
        $region62: #{tpu_custom_call.1} parent=47 // pred_region
          %s3572 = smul.u32 2, %s22
          %3574 = vsyncadd %s3565, 0
          %s3575 = smul.addr %s3572, 8
          %s3576 = scalar_lea.hbm %s7, %s3575
          %s3577 = sshll.u32 %s3568, 4
          %s3578 = int_to_ptr.vmem [resolvable:$true] %s3577
          %s3579 = sshll.u32 %s3576, 4
          %s3580 = int_to_ptr.hbm [resolvable:$true] %s3579
          %3585 = dma.vmem_to_hbm [thread:$0]  %s3578, 512, %s3580, %s3565, 256, 512, 16
        $region63: #{tpu_custom_call.1} parent=47 // pred_fallthru
          _
      $region48: #{tpu_custom_call.1} parent=5 // pred_fallthru
        _
      %p3586 = scmp.le.s32.totalorder 2, %s17
      // Predicated region
      $region64: #{tpu_custom_call.1} parent=5 // pred_check
        %p3587 = pneg %p3586
      $region65: #{tpu_custom_call.1} parent=5 // pred_check_branch
        %3589 = sbr.rel (%p3587) target = $region67
      $region66: #{tpu_custom_call.1} parent=5 // pred_region
        %s3590 = ssub.s32 %s17, 2
        // Predicated region
        $region68: #{tpu_custom_call.1} parent=66 // pred_check
          %p3591 = pneg %p198
        $region69: #{tpu_custom_call.1} parent=66 // pred_check_branch
          %3593 = sbr.rel (%p3591) target = $region71
        $region70: #{tpu_custom_call.1} parent=66 // pred_region
          %s3594 = sand.u32 %s183, 1
          %s3595 = scalar_lea.sflag [#allocation8], %s3594
          %s3596 = sand.u32 %s183, 1
          %s3597 = smul.addr %s3596, 32
          %s3598 = scalar_lea.vmem [#allocation9], %s3597
          %3600 = dma.done %s3595, 512
        $region71: #{tpu_custom_call.1} parent=66 // pred_fallthru
          _
      $region67: #{tpu_custom_call.1} parent=5 // pred_fallthru
        _
    $region6: #{tpu_custom_call.1} parent=1 // loop_footer
      %s21 = sadd.s32 1, %s17
    $region7: #{tpu_custom_call.1} parent=1 // loop_footer_branch
      %16 = sbr.rel target = $region3
    $region8: #{tpu_custom_call.1} parent=1 // loop_exit
      _
    %3601 = vsyncpa [#allocation7], 1
    %s3602 = scalar_lea.sflag [#allocation7], 1
    %3603 = vsyncpa %s3602, 1
    %3604 = vsyncpa [#allocation8], 1
    %s3605 = scalar_lea.sflag [#allocation8], 1
    %3606 = vsyncpa %s3605, 1

</llo_original>
